<compile_context>
chip_gen: v6e
topology: v6e:2x2x1
jax: 0.10.0
libtpu: 0.0.40
codegen_flags: <defaults>
</compile_context>

<pallas_src>
import math

import jax
import jax.numpy as jnp
from jax.experimental import pallas as pl
from jax.experimental.pallas import tpu as pltpu


def _layer_norm(x, g, b, eps):
    mu = jnp.mean(x, axis=-1, keepdims=True)
    var = jnp.mean((x - mu) ** 2, axis=-1, keepdims=True)
    return (x - mu) * jax.lax.rsqrt(var + eps) * g + b


def _spec(shape, index_map, single_buffer=False):
    """BlockSpec helper; single_buffer=True requests 1-deep pipelining for
    grid-invariant blocks (falls back to the default if the kwarg is absent)."""
    if single_buffer:
        try:
            return pl.BlockSpec(shape, index_map, pipeline_mode=pl.Buffered(1))
        except (AttributeError, TypeError):
            pass
    return pl.BlockSpec(shape, index_map)


def _make_kernel(num_heads, eps):
    inv_sqrt2 = 1.0 / math.sqrt(2.0)

    def kernel(xfull_ref, xtile_ref, mask_ref,
               wq_ref, bq_ref, wkT_ref, bkT_ref, wv_ref, bv_ref,
               wo_ref, bo_ref, ln1g_ref, ln1b_ref,
               wi_ref, bi_ref, wo2_ref, bo2_ref, ln2g_ref, ln2b_ref,
               out_ref,
               kT_scr, v_scr):
        st = pl.program_id(1)
        H = xtile_ref.shape[2]
        dh = H // num_heads

        # ---- Phase 0 (once per batch element): project K, V for the full
        # sequence into persistent VMEM scratch.  K is produced directly in the
        # transposed [dh, S] (lane-dense) layout via K^T = wk^T @ x^T, so the
        # per-tile score matmuls need no K relayout. ----
        @pl.when(st == 0)
        def _():
            x_f32 = xfull_ref[0]                                        # [S, H]
            x_bf = x_f32.astype(jnp.bfloat16)
            xt_bf = x_f32.T.astype(jnp.bfloat16)                        # [H, S]
            kT = jnp.dot(wkT_ref[...], xt_bf,
                         preferred_element_type=jnp.float32) + bkT_ref[...]   # [H, S]
            v = jnp.dot(x_bf, wv_ref[...],
                        preferred_element_type=jnp.float32) + bv_ref[...]     # [S, H]
            for h in range(num_heads):
                lo = h * dh
                kT_scr[h] = kT[lo:lo + dh, :].astype(jnp.bfloat16)      # [dh, S]
                v_scr[h] = v[:, lo:lo + dh].astype(jnp.bfloat16)        # [S, dh]

        # ---- Per query tile: Q projection (1/sqrt(dh) folded into wq/bq). ----
        x_tile = xtile_ref[0]                                           # [TS, H] f32
        x_bf = x_tile.astype(jnp.bfloat16)
        mask = mask_ref[0]                                              # [1, S]
        q_all = (jnp.dot(x_bf, wq_ref[...], preferred_element_type=jnp.float32)
                 + bq_ref[...]).astype(jnp.bfloat16)                    # [TS, H]

        # ---- Attention, one head at a time: keeps live f32 softmax temporaries
        # at [TS, S] and folds each head's context straight into the output
        # projection (no [TS, H] re-assembly scratch / masked stripe stores). ----
        ctx_proj = None
        for h in range(num_heads):
            lo = h * dh
            s = jnp.dot(q_all[:, lo:lo + dh], kT_scr[h],
                        preferred_element_type=jnp.float32)             # [TS, S]
            s = s + mask                                                # additive mask
            s = s - jnp.max(s, axis=-1, keepdims=True)                  # stable softmax
            p = jnp.exp(s)
            p = p * pl.reciprocal(jnp.sum(p, axis=-1, keepdims=True), approx=True)
            # TODO(synk): head_mask (None in this config) would multiply `p` here.
            ctx_h = jnp.dot(p.astype(jnp.bfloat16), v_scr[h],
                            preferred_element_type=jnp.float32)         # [TS, dh]
            part = jnp.dot(ctx_h.astype(jnp.bfloat16), wo_ref[lo:lo + dh, :],
                           preferred_element_type=jnp.float32)          # [TS, H]
            ctx_proj = part if ctx_proj is None else ctx_proj + part

        # ---- XxxSelfOutput: dense (+bias) + (dropout=id) + LayerNorm(residual) ----
        attn_out = _layer_norm(ctx_proj + bo_ref[...] + x_tile,
                               ln1g_ref[...], ln1b_ref[...], eps)

        # ---- XxxIntermediate: dense + gelu (erf-based, like BERT "gelu") ----
        inter = jnp.dot(attn_out.astype(jnp.bfloat16), wi_ref[...],
                        preferred_element_type=jnp.float32) + bi_ref[...]
        inter = 0.5 * inter * (1.0 + jax.lax.erf(inter * inv_sqrt2))

        # ---- XxxOutput: dense (+bias) + (dropout=id) + LayerNorm(residual) ----
        # TODO(synk): for very large intermediate sizes on v7x (64 MiB VMEM),
        # chunk wi/wo2 over I via pltpu.emit_pipeline with weights left in HBM.
        out_proj = jnp.dot(inter.astype(jnp.bfloat16), wo2_ref[...],
                           preferred_element_type=jnp.float32) + bo2_ref[...]
        out = _layer_norm(out_proj + attn_out, ln2g_ref[...], ln2b_ref[...], eps)
        out_ref[0] = out.astype(out_ref.dtype)

    return kernel


def _round_up(n, m):
    return ((n + m - 1) // m) * m


def _vmem_limit_bytes(S, H, I, seq_tile, num_heads):
    """Scoped-VMEM budget from the real working set: single-buffered resident
    weights, double-buffered per-tile blocks, persistent scratch and the large
    f32 temporaries (phase-0 K/V projection, per-head softmax, FFN acts)."""
    f32, bf16 = 4, 2
    dh = H // num_heads
    Sl = _round_up(S, 128)                           # lane-padded seq
    dhl = _round_up(dh, 128)                         # lane-padded head dim
    resident = (                                     # Buffered(1) blocks
        S * H * f32                                  # full-seq hidden_states
        + 4 * H * H * bf16                           # wq, wk^T, wv, wo
        + (H * I + I * H) * bf16                     # wi, wo2
        + (8 * H + I) * f32                          # biases + LayerNorm params
    )
    dbl = 2 * (                                      # default 2-deep blocks
        seq_tile * H * f32                           # per-tile hidden_states
        + Sl * f32                                   # additive mask
        + seq_tile * H * f32                         # output tile
    )
    scratch = num_heads * (_round_up(dh, 8) * Sl + _round_up(S, 8) * dhl) * bf16
    temps = (
        2 * S * H * f32 + S * H * bf16               # phase-0 K^T / V f32 + x^T
        + seq_tile * H * (f32 + bf16)                # Q for this tile
        + 4 * seq_tile * Sl * f32                    # scores / probs (per head, 2x slack)
        + seq_tile * I * (f32 + bf16)                # intermediate activation
        + 6 * seq_tile * H * f32                     # attention/output/LN temporaries
    )
    est = resident + dbl + scratch + temps + (8 << 20)   # Mosaic-internal margin
    return int(min(48 << 20, max(24 << 20, est)))


def xxx_layer(x, attn_mask_add, params, *, num_heads, eps=1e-12, seq_tile=None):
    """x: [B, S, H] f32, attn_mask_add: [B, 1, S] additive mask (0 / -10000)."""
    B, S, H = x.shape
    I = params["wi"].shape[1]
    assert H % num_heads == 0
    dh = H // num_heads
    if seq_tile is None:
        seq_tile = min(S, 256)
        try:
            # v7x TensorCores have 64 MiB VMEM: shrink softmax temporaries.
            if pltpu.get_tpu_info().vmem_capacity_bytes <= (64 << 20):
                seq_tile = min(S, 128)
        except Exception:
            pass
    assert S % seq_tile == 0
    assert seq_tile == S or seq_tile % 8 == 0
    nst = S // seq_tile

    # Weight prep: bf16 weights, 1/sqrt(dh) folded into wq/bq, wk pre-transposed
    # (torch.nn.Linear [out, in] layout) so K^T is produced directly on the MXU.
    scale = 1.0 / math.sqrt(dh)
    wq = (params["wq"] * scale).astype(jnp.bfloat16)
    bq = (params["bq"] * scale).astype(jnp.float32)
    wkT = params["wk"].T.astype(jnp.bfloat16)
    bkT = jnp.reshape(params["bk"], (H, 1)).astype(jnp.float32)
    wv = params["wv"].astype(jnp.bfloat16)
    wo = params["wo"].astype(jnp.bfloat16)
    wi = params["wi"].astype(jnp.bfloat16)
    wo2 = params["wo2"].astype(jnp.bfloat16)

    kernel = _make_kernel(num_heads, eps)

    def wspec(shape):
        # Grid-invariant weights/biases: fetched once, single-buffered.
        return _spec(shape, lambda b, st: (0, 0), single_buffer=True)

    in_specs = [
        _spec((1, S, H), lambda b, st: (b, 0, 0), single_buffer=True),  # full-seq x (K/V proj)
        pl.BlockSpec((1, seq_tile, H), lambda b, st: (b, st, 0)),       # per-tile x (Q + residual)
        pl.BlockSpec((1, 1, S), lambda b, st: (b, 0, 0)),               # additive attention mask
        wspec((H, H)), wspec((1, H)),                                   # wq (scaled), bq (scaled)
        wspec((H, H)), wspec((H, 1)),                                   # wk^T, bk^T
        wspec((H, H)), wspec((1, H)),                                   # wv, bv
        wspec((H, H)), wspec((1, H)),                                   # wo, bo
        wspec((1, H)), wspec((1, H)),                                   # ln1 gamma, beta
        wspec((H, I)), wspec((1, I)),                                   # wi, bi
        wspec((I, H)), wspec((1, H)),                                   # wo2, bo2
        wspec((1, H)), wspec((1, H)),                                   # ln2 gamma, beta
    ]
    out_specs = pl.BlockSpec((1, seq_tile, H), lambda b, st: (b, st, 0))
    scratch_shapes = [
        pltpu.VMEM((num_heads, dh, S), jnp.bfloat16),   # K^T per head (lane-dense in S)
        pltpu.VMEM((num_heads, S, dh), jnp.bfloat16),   # V per head
    ]

    fn = pl.pallas_call(
        kernel,
        out_shape=jax.ShapeDtypeStruct((B, S, H), x.dtype),
        grid=(B, nst),
        in_specs=in_specs,
        out_specs=out_specs,
        scratch_shapes=scratch_shapes,
        compiler_params=pltpu.CompilerParams(
            # Batch axis megacore-shardable; the seq-tile axis reuses the
            # per-batch K/V scratch so it stays sequential.
            # TODO(synk): for B==1 serving on v7x (2 TCs), split heads or seq
            # tiles across cores instead (recomputing K/V per core).
            dimension_semantics=("parallel", "arbitrary"),
            vmem_limit_bytes=_vmem_limit_bytes(S, H, I, seq_tile, num_heads),
        ),
    )
    return fn(
        x, x, attn_mask_add,
        wq, bq, wkT, bkT, wv, params["bv"].astype(jnp.float32),
        wo, params["bo"].astype(jnp.float32),
        params["ln1_g"].astype(jnp.float32), params["ln1_b"].astype(jnp.float32),
        wi, params["bi"].astype(jnp.float32),
        wo2, params["bo2"].astype(jnp.float32),
        params["ln2_g"].astype(jnp.float32), params["ln2_b"].astype(jnp.float32),
    )


def xxx_layer_reference(x, attn_mask_add, params, *, num_heads, eps=1e-12):
    """Pure-JAX f32 reference with the module's math, for verification."""
    B, S, H = x.shape
    dh = H // num_heads

    q = (x @ params["wq"] + params["bq"]).reshape(B, S, num_heads, dh).transpose(0, 2, 1, 3)
    k = (x @ params["wk"] + params["bk"]).reshape(B, S, num_heads, dh).transpose(0, 2, 1, 3)
    v = (x @ params["wv"] + params["bv"]).reshape(B, S, num_heads, dh).transpose(0, 2, 1, 3)
    scores = (q @ k.transpose(0, 1, 3, 2)) / math.sqrt(dh) + attn_mask_add[:, None, :, :]
    p = jax.nn.softmax(scores, axis=-1)
    ctx = (p @ v).transpose(0, 2, 1, 3).reshape(B, S, H)
    attn = _layer_norm(ctx @ params["wo"] + params["bo"] + x,
                       params["ln1_g"], params["ln1_b"], eps)
    inter = attn @ params["wi"] + params["bi"]
    inter = 0.5 * inter * (1.0 + jax.lax.erf(inter / math.sqrt(2.0)))
    out = _layer_norm(inter @ params["wo2"] + params["bo2"] + attn,
                      params["ln2_g"], params["ln2_b"], eps)
    return out


if __name__ == "__main__":
    # Small, lane-dense config (H, I multiples of 128; S multiple of 8).
    B, S, H, NH, I = 2, 16, 128, 4, 512
    EPS = 1e-12
    ks = jax.random.split(jax.random.PRNGKey(0), 18)

    def w(k, shape, s=0.02):
        return (s * jax.random.normal(k, shape)).astype(jnp.float32)

    params = {
        "wq": w(ks[0], (H, H)), "bq": w(ks[1], (1, H)),
        "wk": w(ks[2], (H, H)), "bk": w(ks[3], (1, H)),
        "wv": w(ks[4], (H, H)), "bv": w(ks[5], (1, H)),
        "wo": w(ks[6], (H, H)), "bo": w(ks[7], (1, H)),
        "ln1_g": 1.0 + w(ks[8], (1, H)), "ln1_b": w(ks[9], (1, H)),
        "wi": w(ks[10], (H, I)), "bi": w(ks[11], (1, I)),
        "wo2": w(ks[12], (I, H)), "bo2": w(ks[13], (1, H)),
        "ln2_g": 1.0 + w(ks[14], (1, H)), "ln2_b": w(ks[15], (1, H)),
    }

    x = jax.random.normal(ks[16], (B, S, H), dtype=jnp.float32)
    # Keep-mask: batch 0 keeps all tokens, batch 1 masks its last 4 positions.
    keep = jnp.ones((B, 1, S), jnp.float32).at[1, 0, -4:].set(0.0)
    mask_add = (1.0 - keep) * -10000.0  # BERT-style extended additive mask

    ref = xxx_layer_reference(x, mask_add, params, num_heads=NH, eps=EPS)

    # Multi-tile path: 2 query tiles per batch element, exercising K/V scratch reuse.
    out = xxx_layer(x, mask_add, params, num_heads=NH, eps=EPS, seq_tile=8)
    out = jax.block_until_ready(out)
    assert out.shape == (B, S, H)
    assert bool(jnp.all(jnp.isfinite(out)))
    # bf16 matmuls (f32 accumulate, f32 LayerNorm) -> slightly looser tolerance.
    assert jnp.allclose(out, ref, atol=2e-2, rtol=2e-2), "mismatch vs reference (tiled)"

    # Default-tile path (single seq tile at this size).
    out2 = jax.block_until_ready(xxx_layer(x, mask_add, params, num_heads=NH, eps=EPS))
    assert jnp.allclose(out2, ref, atol=2e-2, rtol=2e-2), "mismatch vs reference (default)"

    print("KERNEL_OK")
</pallas_src>

<mosaic_0001>
module attributes {stable_mosaic.version = 11 : i64} {
  func.func @kernel(%arg0: i32, %arg1: i32, %arg2: memref<1x16x128xf32, #tpu.memory_space<vmem>>, %arg3: memref<1x8x128xf32, #tpu.memory_space<vmem>>, %arg4: memref<1x1x16xf32, #tpu.memory_space<vmem>>, %arg5: memref<128x128xbf16, #tpu.memory_space<vmem>>, %arg6: memref<1x128xf32, #tpu.memory_space<vmem>>, %arg7: memref<128x128xbf16, #tpu.memory_space<vmem>>, %arg8: memref<128x1xf32, #tpu.memory_space<vmem>>, %arg9: memref<128x128xbf16, #tpu.memory_space<vmem>>, %arg10: memref<1x128xf32, #tpu.memory_space<vmem>>, %arg11: memref<128x128xbf16, #tpu.memory_space<vmem>>, %arg12: memref<1x128xf32, #tpu.memory_space<vmem>>, %arg13: memref<1x128xf32, #tpu.memory_space<vmem>>, %arg14: memref<1x128xf32, #tpu.memory_space<vmem>>, %arg15: memref<128x512xbf16, #tpu.memory_space<vmem>>, %arg16: memref<1x512xf32, #tpu.memory_space<vmem>>, %arg17: memref<512x128xbf16, #tpu.memory_space<vmem>>, %arg18: memref<1x128xf32, #tpu.memory_space<vmem>>, %arg19: memref<1x128xf32, #tpu.memory_space<vmem>>, %arg20: memref<1x128xf32, #tpu.memory_space<vmem>>, %arg21: memref<1x8x128xf32, #tpu.memory_space<vmem>>, %arg22: memref<4x32x16xbf16, #tpu.memory_space<vmem>>, %arg23: memref<4x16x32xbf16, #tpu.memory_space<vmem>>) attributes {dimension_semantics = [#tpu.dimension_semantics<parallel>, #tpu.dimension_semantics<arbitrary>], iteration_bounds = array<i64: 2, 2>, scalar_prefetch = 0 : i64, scratch_operands = 2 : i64, tpu.core_type = #tpu.core_type<tc>, window_params = [{pipeline_mode = #tpu.pipeline_mode<synchronous>, transform_indices = @transform_0, window_bounds = array<i64: 1, 16, 128>}, {transform_indices = @transform_1, window_bounds = array<i64: 1, 8, 128>}, {transform_indices = @transform_2, window_bounds = array<i64: 1, 1, 16>}, {pipeline_mode = #tpu.pipeline_mode<synchronous>, transform_indices = @transform_3, window_bounds = array<i64: 128, 128>}, {pipeline_mode = #tpu.pipeline_mode<synchronous>, transform_indices = @transform_4, window_bounds = array<i64: 1, 128>}, {pipeline_mode = #tpu.pipeline_mode<synchronous>, transform_indices = @transform_5, window_bounds = array<i64: 128, 128>}, {pipeline_mode = #tpu.pipeline_mode<synchronous>, transform_indices = @transform_6, window_bounds = array<i64: 128, 1>}, {pipeline_mode = #tpu.pipeline_mode<synchronous>, transform_indices = @transform_7, window_bounds = array<i64: 128, 128>}, {pipeline_mode = #tpu.pipeline_mode<synchronous>, transform_indices = @transform_8, window_bounds = array<i64: 1, 128>}, {pipeline_mode = #tpu.pipeline_mode<synchronous>, transform_indices = @transform_9, window_bounds = array<i64: 128, 128>}, {pipeline_mode = #tpu.pipeline_mode<synchronous>, transform_indices = @transform_10, window_bounds = array<i64: 1, 128>}, {pipeline_mode = #tpu.pipeline_mode<synchronous>, transform_indices = @transform_11, window_bounds = array<i64: 1, 128>}, {pipeline_mode = #tpu.pipeline_mode<synchronous>, transform_indices = @transform_12, window_bounds = array<i64: 1, 128>}, {pipeline_mode = #tpu.pipeline_mode<synchronous>, transform_indices = @transform_13, window_bounds = array<i64: 128, 512>}, {pipeline_mode = #tpu.pipeline_mode<synchronous>, transform_indices = @transform_14, window_bounds = array<i64: 1, 512>}, {pipeline_mode = #tpu.pipeline_mode<synchronous>, transform_indices = @transform_15, window_bounds = array<i64: 512, 128>}, {pipeline_mode = #tpu.pipeline_mode<synchronous>, transform_indices = @transform_16, window_bounds = array<i64: 1, 128>}, {pipeline_mode = #tpu.pipeline_mode<synchronous>, transform_indices = @transform_17, window_bounds = array<i64: 1, 128>}, {pipeline_mode = #tpu.pipeline_mode<synchronous>, transform_indices = @transform_18, window_bounds = array<i64: 1, 128>}, {transform_indices = @transform_19, window_bounds = array<i64: 1, 8, 128>}]} {
    %c0_i32 = arith.constant 0 : i32
    %0 = arith.cmpi eq, %arg1, %c0_i32 : i32
    %1 = arith.extui %0 : i1 to i32
    %c0_i32_0 = arith.constant 0 : i32
    %2 = arith.cmpi ne, %1, %c0_i32_0 : i32
    scf.if %2 {
      %c0_92 = arith.constant 0 : index
      %c0_93 = arith.constant 0 : index
      %c0_94 = arith.constant 0 : index
      %185 = vector.load %arg2[%c0_92, %c0_93, %c0_94] : memref<1x16x128xf32, #tpu.memory_space<vmem>>, vector<1x16x128xf32>
      %186 = vector.shape_cast %185 : vector<1x16x128xf32> to vector<16x128xf32>
      %187 = arith.truncf %186 : vector<16x128xf32> to vector<16x128xbf16>
      %188 = tpu.transpose %186, [1, 0] : vector<16x128xf32> -> vector<128x16xf32>
      %189 = arith.truncf %188 : vector<128x16xf32> to vector<128x16xbf16>
      %c0_95 = arith.constant 0 : index
      %c0_96 = arith.constant 0 : index
      %190 = vector.load %arg7[%c0_95, %c0_96] : memref<128x128xbf16, #tpu.memory_space<vmem>>, vector<128x128xbf16>
      %cst_97 = arith.constant dense<0.000000e+00> : vector<128x16xf32>
      %191 = tpu.matmul %190, %189, %cst_97 {dimension_numbers = #tpu.dot_dimension_numbers<[1], [0], [0], [1], [0, 0, 1, 1], [], []>} : vector<128x128xbf16>, vector<128x16xbf16>, vector<128x16xf32> -> vector<128x16xf32>
      %c0_98 = arith.constant 0 : index
      %c0_99 = arith.constant 0 : index
      %192 = vector.load %arg8[%c0_98, %c0_99] : memref<128x1xf32, #tpu.memory_space<vmem>>, vector<128x1xf32>
      %193 = vector.broadcast %192 : vector<128x1xf32> to vector<128x16xf32>
      %194 = arith.addf %191, %193 : vector<128x16xf32>
      %c0_100 = arith.constant 0 : index
      %c0_101 = arith.constant 0 : index
      %195 = vector.load %arg9[%c0_100, %c0_101] : memref<128x128xbf16, #tpu.memory_space<vmem>>, vector<128x128xbf16>
      %cst_102 = arith.constant dense<0.000000e+00> : vector<16x128xf32>
      %196 = tpu.matmul %187, %195, %cst_102 {dimension_numbers = #tpu.dot_dimension_numbers<[1], [0], [0], [1], [0, 0, 1, 1], [], []>} : vector<16x128xbf16>, vector<128x128xbf16>, vector<16x128xf32> -> vector<16x128xf32>
      %c0_103 = arith.constant 0 : index
      %c0_104 = arith.constant 0 : index
      %197 = vector.load %arg10[%c0_103, %c0_104] : memref<1x128xf32, #tpu.memory_space<vmem>>, vector<1x128xf32>
      %198 = vector.broadcast %197 : vector<1x128xf32> to vector<16x128xf32>
      %199 = arith.addf %196, %198 : vector<16x128xf32>
      %200 = vector.extract_strided_slice %194 {offsets = [0, 0], sizes = [32, 16], strides = [1, 1]} : vector<128x16xf32> to vector<32x16xf32>
      %201 = arith.truncf %200 : vector<32x16xf32> to vector<32x16xbf16>
      %c0_105 = arith.constant 0 : index
      %c0_106 = arith.constant 0 : index
      %c0_107 = arith.constant 0 : index
      %202 = vector.load %arg22[%c0_105, %c0_106, %c0_107] : memref<4x32x16xbf16, #tpu.memory_space<vmem>>, vector<1x32x16xbf16>
      %203 = vector.shape_cast %202 : vector<1x32x16xbf16> to vector<32x16xbf16>
      %204 = vector.shape_cast %201 : vector<32x16xbf16> to vector<1x32x16xbf16>
      tpu.vector_store %arg22[%c0_105, %c0_106, %c0_107], %204 {strides = array<i32>} : memref<4x32x16xbf16, #tpu.memory_space<vmem>>, vector<1x32x16xbf16>,
      %205 = vector.extract_strided_slice %199 {offsets = [0, 0], sizes = [16, 32], strides = [1, 1]} : vector<16x128xf32> to vector<16x32xf32>
      %206 = arith.truncf %205 : vector<16x32xf32> to vector<16x32xbf16>
      %c0_108 = arith.constant 0 : index
      %c0_109 = arith.constant 0 : index
      %c0_110 = arith.constant 0 : index
      %207 = vector.load %arg23[%c0_108, %c0_109, %c0_110] : memref<4x16x32xbf16, #tpu.memory_space<vmem>>, vector<1x16x32xbf16>
      %208 = vector.shape_cast %207 : vector<1x16x32xbf16> to vector<16x32xbf16>
      %209 = vector.shape_cast %206 : vector<16x32xbf16> to vector<1x16x32xbf16>
      tpu.vector_store %arg23[%c0_108, %c0_109, %c0_110], %209 {strides = array<i32>} : memref<4x16x32xbf16, #tpu.memory_space<vmem>>, vector<1x16x32xbf16>,
      %210 = vector.extract_strided_slice %194 {offsets = [32, 0], sizes = [32, 16], strides = [1, 1]} : vector<128x16xf32> to vector<32x16xf32>
      %211 = arith.truncf %210 : vector<32x16xf32> to vector<32x16xbf16>
      %c1_111 = arith.constant 1 : index
      %c0_112 = arith.constant 0 : index
      %c0_113 = arith.constant 0 : index
      %212 = vector.load %arg22[%c1_111, %c0_112, %c0_113] : memref<4x32x16xbf16, #tpu.memory_space<vmem>>, vector<1x32x16xbf16>
      %213 = vector.shape_cast %212 : vector<1x32x16xbf16> to vector<32x16xbf16>
      %214 = vector.shape_cast %211 : vector<32x16xbf16> to vector<1x32x16xbf16>
      tpu.vector_store %arg22[%c1_111, %c0_112, %c0_113], %214 {strides = array<i32>} : memref<4x32x16xbf16, #tpu.memory_space<vmem>>, vector<1x32x16xbf16>,
      %215 = vector.extract_strided_slice %199 {offsets = [0, 32], sizes = [16, 32], strides = [1, 1]} : vector<16x128xf32> to vector<16x32xf32>
      %216 = arith.truncf %215 : vector<16x32xf32> to vector<16x32xbf16>
      %c1_114 = arith.constant 1 : index
      %c0_115 = arith.constant 0 : index
      %c0_116 = arith.constant 0 : index
      %217 = vector.load %arg23[%c1_114, %c0_115, %c0_116] : memref<4x16x32xbf16, #tpu.memory_space<vmem>>, vector<1x16x32xbf16>
      %218 = vector.shape_cast %217 : vector<1x16x32xbf16> to vector<16x32xbf16>
      %219 = vector.shape_cast %216 : vector<16x32xbf16> to vector<1x16x32xbf16>
      tpu.vector_store %arg23[%c1_114, %c0_115, %c0_116], %219 {strides = array<i32>} : memref<4x16x32xbf16, #tpu.memory_space<vmem>>, vector<1x16x32xbf16>,
      %220 = vector.extract_strided_slice %194 {offsets = [64, 0], sizes = [32, 16], strides = [1, 1]} : vector<128x16xf32> to vector<32x16xf32>
      %221 = arith.truncf %220 : vector<32x16xf32> to vector<32x16xbf16>
      %c2_117 = arith.constant 2 : index
      %c0_118 = arith.constant 0 : index
      %c0_119 = arith.constant 0 : index
      %222 = vector.load %arg22[%c2_117, %c0_118, %c0_119] : memref<4x32x16xbf16, #tpu.memory_space<vmem>>, vector<1x32x16xbf16>
      %223 = vector.shape_cast %222 : vector<1x32x16xbf16> to vector<32x16xbf16>
      %224 = vector.shape_cast %221 : vector<32x16xbf16> to vector<1x32x16xbf16>
      tpu.vector_store %arg22[%c2_117, %c0_118, %c0_119], %224 {strides = array<i32>} : memref<4x32x16xbf16, #tpu.memory_space<vmem>>, vector<1x32x16xbf16>,
      %225 = vector.extract_strided_slice %199 {offsets = [0, 64], sizes = [16, 32], strides = [1, 1]} : vector<16x128xf32> to vector<16x32xf32>
      %226 = arith.truncf %225 : vector<16x32xf32> to vector<16x32xbf16>
      %c2_120 = arith.constant 2 : index
      %c0_121 = arith.constant 0 : index
      %c0_122 = arith.constant 0 : index
      %227 = vector.load %arg23[%c2_120, %c0_121, %c0_122] : memref<4x16x32xbf16, #tpu.memory_space<vmem>>, vector<1x16x32xbf16>
      %228 = vector.shape_cast %227 : vector<1x16x32xbf16> to vector<16x32xbf16>
      %229 = vector.shape_cast %226 : vector<16x32xbf16> to vector<1x16x32xbf16>
      tpu.vector_store %arg23[%c2_120, %c0_121, %c0_122], %229 {strides = array<i32>} : memref<4x16x32xbf16, #tpu.memory_space<vmem>>, vector<1x16x32xbf16>,
      %230 = vector.extract_strided_slice %194 {offsets = [96, 0], sizes = [32, 16], strides = [1, 1]} : vector<128x16xf32> to vector<32x16xf32>
      %231 = arith.truncf %230 : vector<32x16xf32> to vector<32x16xbf16>
      %c3_123 = arith.constant 3 : index
      %c0_124 = arith.constant 0 : index
      %c0_125 = arith.constant 0 : index
      %232 = vector.load %arg22[%c3_123, %c0_124, %c0_125] : memref<4x32x16xbf16, #tpu.memory_space<vmem>>, vector<1x32x16xbf16>
      %233 = vector.shape_cast %232 : vector<1x32x16xbf16> to vector<32x16xbf16>
      %234 = vector.shape_cast %231 : vector<32x16xbf16> to vector<1x32x16xbf16>
      tpu.vector_store %arg22[%c3_123, %c0_124, %c0_125], %234 {strides = array<i32>} : memref<4x32x16xbf16, #tpu.memory_space<vmem>>, vector<1x32x16xbf16>,
      %235 = vector.extract_strided_slice %199 {offsets = [0, 96], sizes = [16, 32], strides = [1, 1]} : vector<16x128xf32> to vector<16x32xf32>
      %236 = arith.truncf %235 : vector<16x32xf32> to vector<16x32xbf16>
      %c3_126 = arith.constant 3 : index
      %c0_127 = arith.constant 0 : index
      %c0_128 = arith.constant 0 : index
      %237 = vector.load %arg23[%c3_126, %c0_127, %c0_128] : memref<4x16x32xbf16, #tpu.memory_space<vmem>>, vector<1x16x32xbf16>
      %238 = vector.shape_cast %237 : vector<1x16x32xbf16> to vector<16x32xbf16>
      %239 = vector.shape_cast %236 : vector<16x32xbf16> to vector<1x16x32xbf16>
      tpu.vector_store %arg23[%c3_126, %c0_127, %c0_128], %239 {strides = array<i32>} : memref<4x16x32xbf16, #tpu.memory_space<vmem>>, vector<1x16x32xbf16>,
    } else {
    }
    %c0 = arith.constant 0 : index
    %c0_1 = arith.constant 0 : index
    %c0_2 = arith.constant 0 : index
    %3 = vector.load %arg3[%c0, %c0_1, %c0_2] : memref<1x8x128xf32, #tpu.memory_space<vmem>>, vector<1x8x128xf32>
    %4 = vector.shape_cast %3 : vector<1x8x128xf32> to vector<8x128xf32>
    %5 = arith.truncf %4 : vector<8x128xf32> to vector<8x128xbf16>
    %c0_3 = arith.constant 0 : index
    %c0_4 = arith.constant 0 : index
    %c0_5 = arith.constant 0 : index
    %6 = vector.load %arg4[%c0_3, %c0_4, %c0_5] : memref<1x1x16xf32, #tpu.memory_space<vmem>>, vector<1x1x16xf32>
    %7 = vector.shape_cast %6 : vector<1x1x16xf32> to vector<1x16xf32>
    %c0_6 = arith.constant 0 : index
    %c0_7 = arith.constant 0 : index
    %8 = vector.load %arg5[%c0_6, %c0_7] : memref<128x128xbf16, #tpu.memory_space<vmem>>, vector<128x128xbf16>
    %cst = arith.constant dense<0.000000e+00> : vector<8x128xf32>
    %9 = tpu.matmul %5, %8, %cst {dimension_numbers = #tpu.dot_dimension_numbers<[1], [0], [0], [1], [0, 0, 1, 1], [], []>} : vector<8x128xbf16>, vector<128x128xbf16>, vector<8x128xf32> -> vector<8x128xf32>
    %c0_8 = arith.constant 0 : index
    %c0_9 = arith.constant 0 : index
    %10 = vector.load %arg6[%c0_8, %c0_9] : memref<1x128xf32, #tpu.memory_space<vmem>>, vector<1x128xf32>
    %11 = vector.broadcast %10 : vector<1x128xf32> to vector<8x128xf32>
    %12 = arith.addf %9, %11 : vector<8x128xf32>
    %13 = arith.truncf %12 : vector<8x128xf32> to vector<8x128xbf16>
    %14 = vector.extract_strided_slice %13 {offsets = [0, 0], sizes = [8, 32], strides = [1, 1]} : vector<8x128xbf16> to vector<8x32xbf16>
    %c0_10 = arith.constant 0 : index
    %c0_11 = arith.constant 0 : index
    %c0_12 = arith.constant 0 : index
    %15 = vector.load %arg22[%c0_10, %c0_11, %c0_12] : memref<4x32x16xbf16, #tpu.memory_space<vmem>>, vector<1x32x16xbf16>
    %16 = vector.shape_cast %15 : vector<1x32x16xbf16> to vector<32x16xbf16>
    %cst_13 = arith.constant dense<0.000000e+00> : vector<8x16xf32>
    %17 = tpu.matmul %14, %16, %cst_13 {dimension_numbers = #tpu.dot_dimension_numbers<[1], [0], [0], [1], [0, 0, 1, 1], [], []>} : vector<8x32xbf16>, vector<32x16xbf16>, vector<8x16xf32> -> vector<8x16xf32>
    %18 = vector.broadcast %7 : vector<1x16xf32> to vector<8x16xf32>
    %19 = arith.addf %17, %18 : vector<8x16xf32>
    %cst_14 = arith.constant dense<0xFF800000> : vector<8xf32>
    %20 = vector.multi_reduction <maximumf>, %19, %cst_14 [1] : vector<8x16xf32> to vector<8xf32>
    %21 = vector.shape_cast %20 : vector<8xf32> to vector<8x1xf32>
    %22 = vector.broadcast %21 : vector<8x1xf32> to vector<8x16xf32>
    %23 = arith.subf %19, %22 : vector<8x16xf32>
    %24 = math.exp %23 : vector<8x16xf32>
    %cst_15 = arith.constant dense<0.000000e+00> : vector<8xf32>
    %25 = vector.multi_reduction <add>, %24, %cst_15 [1] : vector<8x16xf32> to vector<8xf32>
    %26 = vector.shape_cast %25 : vector<8xf32> to vector<8x1xf32>
    %27 = tpu.reciprocal %26 {approx = true} : vector<8x1xf32> -> vector<8x1xf32>
    %28 = vector.broadcast %27 : vector<8x1xf32> to vector<8x16xf32>
    %29 = arith.mulf %24, %28 : vector<8x16xf32>
    %30 = arith.truncf %29 : vector<8x16xf32> to vector<8x16xbf16>
    %c0_16 = arith.constant 0 : index
    %c0_17 = arith.constant 0 : index
    %c0_18 = arith.constant 0 : index
    %31 = vector.load %arg23[%c0_16, %c0_17, %c0_18] : memref<4x16x32xbf16, #tpu.memory_space<vmem>>, vector<1x16x32xbf16>
    %32 = vector.shape_cast %31 : vector<1x16x32xbf16> to vector<16x32xbf16>
    %cst_19 = arith.constant dense<0.000000e+00> : vector<8x32xf32>
    %33 = tpu.matmul %30, %32, %cst_19 {dimension_numbers = #tpu.dot_dimension_numbers<[1], [0], [0], [1], [0, 0, 1, 1], [], []>} : vector<8x16xbf16>, vector<16x32xbf16>, vector<8x32xf32> -> vector<8x32xf32>
    %34 = arith.truncf %33 : vector<8x32xf32> to vector<8x32xbf16>
    %c0_20 = arith.constant 0 : index
    %c0_21 = arith.constant 0 : index
    %35 = vector.load %arg11[%c0_20, %c0_21] : memref<128x128xbf16, #tpu.memory_space<vmem>>, vector<32x128xbf16>
    %cst_22 = arith.constant dense<0.000000e+00> : vector<8x128xf32>
    %36 = tpu.matmul %34, %35, %cst_22 {dimension_numbers = #tpu.dot_dimension_numbers<[1], [0], [0], [1], [0, 0, 1, 1], [], []>} : vector<8x32xbf16>, vector<32x128xbf16>, vector<8x128xf32> -> vector<8x128xf32>
    %37 = vector.extract_strided_slice %13 {offsets = [0, 32], sizes = [8, 32], strides = [1, 1]} : vector<8x128xbf16> to vector<8x32xbf16>
    %c1 = arith.constant 1 : index
    %c0_23 = arith.constant 0 : index
    %c0_24 = arith.constant 0 : index
    %38 = vector.load %arg22[%c1, %c0_23, %c0_24] : memref<4x32x16xbf16, #tpu.memory_space<vmem>>, vector<1x32x16xbf16>
    %39 = vector.shape_cast %38 : vector<1x32x16xbf16> to vector<32x16xbf16>
    %cst_25 = arith.constant dense<0.000000e+00> : vector<8x16xf32>
    %40 = tpu.matmul %37, %39, %cst_25 {dimension_numbers = #tpu.dot_dimension_numbers<[1], [0], [0], [1], [0, 0, 1, 1], [], []>} : vector<8x32xbf16>, vector<32x16xbf16>, vector<8x16xf32> -> vector<8x16xf32>
    %41 = vector.broadcast %7 : vector<1x16xf32> to vector<8x16xf32>
    %42 = arith.addf %40, %41 : vector<8x16xf32>
    %cst_26 = arith.constant dense<0xFF800000> : vector<8xf32>
    %43 = vector.multi_reduction <maximumf>, %42, %cst_26 [1] : vector<8x16xf32> to vector<8xf32>
    %44 = vector.shape_cast %43 : vector<8xf32> to vector<8x1xf32>
    %45 = vector.broadcast %44 : vector<8x1xf32> to vector<8x16xf32>
    %46 = arith.subf %42, %45 : vector<8x16xf32>
    %47 = math.exp %46 : vector<8x16xf32>
    %cst_27 = arith.constant dense<0.000000e+00> : vector<8xf32>
    %48 = vector.multi_reduction <add>, %47, %cst_27 [1] : vector<8x16xf32> to vector<8xf32>
    %49 = vector.shape_cast %48 : vector<8xf32> to vector<8x1xf32>
    %50 = tpu.reciprocal %49 {approx = true} : vector<8x1xf32> -> vector<8x1xf32>
    %51 = vector.broadcast %50 : vector<8x1xf32> to vector<8x16xf32>
    %52 = arith.mulf %47, %51 : vector<8x16xf32>
    %53 = arith.truncf %52 : vector<8x16xf32> to vector<8x16xbf16>
    %c1_28 = arith.constant 1 : index
    %c0_29 = arith.constant 0 : index
    %c0_30 = arith.constant 0 : index
    %54 = vector.load %arg23[%c1_28, %c0_29, %c0_30] : memref<4x16x32xbf16, #tpu.memory_space<vmem>>, vector<1x16x32xbf16>
    %55 = vector.shape_cast %54 : vector<1x16x32xbf16> to vector<16x32xbf16>
    %cst_31 = arith.constant dense<0.000000e+00> : vector<8x32xf32>
    %56 = tpu.matmul %53, %55, %cst_31 {dimension_numbers = #tpu.dot_dimension_numbers<[1], [0], [0], [1], [0, 0, 1, 1], [], []>} : vector<8x16xbf16>, vector<16x32xbf16>, vector<8x32xf32> -> vector<8x32xf32>
    %57 = arith.truncf %56 : vector<8x32xf32> to vector<8x32xbf16>
    %c32 = arith.constant 32 : index
    %c0_32 = arith.constant 0 : index
    %58 = vector.load %arg11[%c32, %c0_32] : memref<128x128xbf16, #tpu.memory_space<vmem>>, vector<32x128xbf16>
    %cst_33 = arith.constant dense<0.000000e+00> : vector<8x128xf32>
    %59 = tpu.matmul %57, %58, %cst_33 {dimension_numbers = #tpu.dot_dimension_numbers<[1], [0], [0], [1], [0, 0, 1, 1], [], []>} : vector<8x32xbf16>, vector<32x128xbf16>, vector<8x128xf32> -> vector<8x128xf32>
    %60 = arith.addf %36, %59 : vector<8x128xf32>
    %61 = vector.extract_strided_slice %13 {offsets = [0, 64], sizes = [8, 32], strides = [1, 1]} : vector<8x128xbf16> to vector<8x32xbf16>
    %c2 = arith.constant 2 : index
    %c0_34 = arith.constant 0 : index
    %c0_35 = arith.constant 0 : index
    %62 = vector.load %arg22[%c2, %c0_34, %c0_35] : memref<4x32x16xbf16, #tpu.memory_space<vmem>>, vector<1x32x16xbf16>
    %63 = vector.shape_cast %62 : vector<1x32x16xbf16> to vector<32x16xbf16>
    %cst_36 = arith.constant dense<0.000000e+00> : vector<8x16xf32>
    %64 = tpu.matmul %61, %63, %cst_36 {dimension_numbers = #tpu.dot_dimension_numbers<[1], [0], [0], [1], [0, 0, 1, 1], [], []>} : vector<8x32xbf16>, vector<32x16xbf16>, vector<8x16xf32> -> vector<8x16xf32>
    %65 = vector.broadcast %7 : vector<1x16xf32> to vector<8x16xf32>
    %66 = arith.addf %64, %65 : vector<8x16xf32>
    %cst_37 = arith.constant dense<0xFF800000> : vector<8xf32>
    %67 = vector.multi_reduction <maximumf>, %66, %cst_37 [1] : vector<8x16xf32> to vector<8xf32>
    %68 = vector.shape_cast %67 : vector<8xf32> to vector<8x1xf32>
    %69 = vector.broadcast %68 : vector<8x1xf32> to vector<8x16xf32>
    %70 = arith.subf %66, %69 : vector<8x16xf32>
    %71 = math.exp %70 : vector<8x16xf32>
    %cst_38 = arith.constant dense<0.000000e+00> : vector<8xf32>
    %72 = vector.multi_reduction <add>, %71, %cst_38 [1] : vector<8x16xf32> to vector<8xf32>
    %73 = vector.shape_cast %72 : vector<8xf32> to vector<8x1xf32>
    %74 = tpu.reciprocal %73 {approx = true} : vector<8x1xf32> -> vector<8x1xf32>
    %75 = vector.broadcast %74 : vector<8x1xf32> to vector<8x16xf32>
    %76 = arith.mulf %71, %75 : vector<8x16xf32>
    %77 = arith.truncf %76 : vector<8x16xf32> to vector<8x16xbf16>
    %c2_39 = arith.constant 2 : index
    %c0_40 = arith.constant 0 : index
    %c0_41 = arith.constant 0 : index
    %78 = vector.load %arg23[%c2_39, %c0_40, %c0_41] : memref<4x16x32xbf16, #tpu.memory_space<vmem>>, vector<1x16x32xbf16>
    %79 = vector.shape_cast %78 : vector<1x16x32xbf16> to vector<16x32xbf16>
    %cst_42 = arith.constant dense<0.000000e+00> : vector<8x32xf32>
    %80 = tpu.matmul %77, %79, %cst_42 {dimension_numbers = #tpu.dot_dimension_numbers<[1], [0], [0], [1], [0, 0, 1, 1], [], []>} : vector<8x16xbf16>, vector<16x32xbf16>, vector<8x32xf32> -> vector<8x32xf32>
    %81 = arith.truncf %80 : vector<8x32xf32> to vector<8x32xbf16>
    %c64 = arith.constant 64 : index
    %c0_43 = arith.constant 0 : index
    %82 = vector.load %arg11[%c64, %c0_43] : memref<128x128xbf16, #tpu.memory_space<vmem>>, vector<32x128xbf16>
    %cst_44 = arith.constant dense<0.000000e+00> : vector<8x128xf32>
    %83 = tpu.matmul %81, %82, %cst_44 {dimension_numbers = #tpu.dot_dimension_numbers<[1], [0], [0], [1], [0, 0, 1, 1], [], []>} : vector<8x32xbf16>, vector<32x128xbf16>, vector<8x128xf32> -> vector<8x128xf32>
    %84 = arith.addf %60, %83 : vector<8x128xf32>
    %85 = vector.extract_strided_slice %13 {offsets = [0, 96], sizes = [8, 32], strides = [1, 1]} : vector<8x128xbf16> to vector<8x32xbf16>
    %c3 = arith.constant 3 : index
    %c0_45 = arith.constant 0 : index
    %c0_46 = arith.constant 0 : index
    %86 = vector.load %arg22[%c3, %c0_45, %c0_46] : memref<4x32x16xbf16, #tpu.memory_space<vmem>>, vector<1x32x16xbf16>
    %87 = vector.shape_cast %86 : vector<1x32x16xbf16> to vector<32x16xbf16>
    %cst_47 = arith.constant dense<0.000000e+00> : vector<8x16xf32>
    %88 = tpu.matmul %85, %87, %cst_47 {dimension_numbers = #tpu.dot_dimension_numbers<[1], [0], [0], [1], [0, 0, 1, 1], [], []>} : vector<8x32xbf16>, vector<32x16xbf16>, vector<8x16xf32> -> vector<8x16xf32>
    %89 = vector.broadcast %7 : vector<1x16xf32> to vector<8x16xf32>
    %90 = arith.addf %88, %89 : vector<8x16xf32>
    %cst_48 = arith.constant dense<0xFF800000> : vector<8xf32>
    %91 = vector.multi_reduction <maximumf>, %90, %cst_48 [1] : vector<8x16xf32> to vector<8xf32>
    %92 = vector.shape_cast %91 : vector<8xf32> to vector<8x1xf32>
    %93 = vector.broadcast %92 : vector<8x1xf32> to vector<8x16xf32>
    %94 = arith.subf %90, %93 : vector<8x16xf32>
    %95 = math.exp %94 : vector<8x16xf32>
    %cst_49 = arith.constant dense<0.000000e+00> : vector<8xf32>
    %96 = vector.multi_reduction <add>, %95, %cst_49 [1] : vector<8x16xf32> to vector<8xf32>
    %97 = vector.shape_cast %96 : vector<8xf32> to vector<8x1xf32>
    %98 = tpu.reciprocal %97 {approx = true} : vector<8x1xf32> -> vector<8x1xf32>
    %99 = vector.broadcast %98 : vector<8x1xf32> to vector<8x16xf32>
    %100 = arith.mulf %95, %99 : vector<8x16xf32>
    %101 = arith.truncf %100 : vector<8x16xf32> to vector<8x16xbf16>
    %c3_50 = arith.constant 3 : index
    %c0_51 = arith.constant 0 : index
    %c0_52 = arith.constant 0 : index
    %102 = vector.load %arg23[%c3_50, %c0_51, %c0_52] : memref<4x16x32xbf16, #tpu.memory_space<vmem>>, vector<1x16x32xbf16>
    %103 = vector.shape_cast %102 : vector<1x16x32xbf16> to vector<16x32xbf16>
    %cst_53 = arith.constant dense<0.000000e+00> : vector<8x32xf32>
    %104 = tpu.matmul %101, %103, %cst_53 {dimension_numbers = #tpu.dot_dimension_numbers<[1], [0], [0], [1], [0, 0, 1, 1], [], []>} : vector<8x16xbf16>, vector<16x32xbf16>, vector<8x32xf32> -> vector<8x32xf32>
    %105 = arith.truncf %104 : vector<8x32xf32> to vector<8x32xbf16>
    %c96 = arith.constant 96 : index
    %c0_54 = arith.constant 0 : index
    %106 = vector.load %arg11[%c96, %c0_54] : memref<128x128xbf16, #tpu.memory_space<vmem>>, vector<32x128xbf16>
    %cst_55 = arith.constant dense<0.000000e+00> : vector<8x128xf32>
    %107 = tpu.matmul %105, %106, %cst_55 {dimension_numbers = #tpu.dot_dimension_numbers<[1], [0], [0], [1], [0, 0, 1, 1], [], []>} : vector<8x32xbf16>, vector<32x128xbf16>, vector<8x128xf32> -> vector<8x128xf32>
    %108 = arith.addf %84, %107 : vector<8x128xf32>
    %c0_56 = arith.constant 0 : index
    %c0_57 = arith.constant 0 : index
    %109 = vector.load %arg12[%c0_56, %c0_57] : memref<1x128xf32, #tpu.memory_space<vmem>>, vector<1x128xf32>
    %110 = vector.broadcast %109 : vector<1x128xf32> to vector<8x128xf32>
    %111 = arith.addf %108, %110 : vector<8x128xf32>
    %112 = arith.addf %111, %4 : vector<8x128xf32>
    %c0_58 = arith.constant 0 : index
    %c0_59 = arith.constant 0 : index
    %113 = vector.load %arg13[%c0_58, %c0_59] : memref<1x128xf32, #tpu.memory_space<vmem>>, vector<1x128xf32>
    %c0_60 = arith.constant 0 : index
    %c0_61 = arith.constant 0 : index
    %114 = vector.load %arg14[%c0_60, %c0_61] : memref<1x128xf32, #tpu.memory_space<vmem>>, vector<1x128xf32>
    %cst_62 = arith.constant dense<0.000000e+00> : vector<8xf32>
    %115 = vector.multi_reduction <add>, %112, %cst_62 [1] : vector<8x128xf32> to vector<8xf32>
    %116 = vector.shape_cast %115 : vector<8xf32> to vector<8x1xf32>
    %cst_63 = arith.constant 1.280000e+02 : f32
    %117 = vector.broadcast %cst_63 : f32 to vector<8x1xf32>
    %118 = arith.divf %116, %117 : vector<8x1xf32>
    %119 = vector.broadcast %118 : vector<8x1xf32> to vector<8x128xf32>
    %120 = arith.subf %112, %119 : vector<8x128xf32>
    %121 = arith.mulf %120, %120 : vector<8x128xf32>
    %cst_64 = arith.constant dense<0.000000e+00> : vector<8xf32>
    %122 = vector.multi_reduction <add>, %121, %cst_64 [1] : vector<8x128xf32> to vector<8xf32>
    %123 = vector.shape_cast %122 : vector<8xf32> to vector<8x1xf32>
    %cst_65 = arith.constant 1.280000e+02 : f32
    %124 = vector.broadcast %cst_65 : f32 to vector<8x1xf32>
    %125 = arith.divf %123, %124 : vector<8x1xf32>
    %126 = vector.broadcast %118 : vector<8x1xf32> to vector<8x128xf32>
    %127 = arith.subf %112, %126 : vector<8x128xf32>
    %cst_66 = arith.constant 9.99999996E-13 : f32
    %128 = vector.broadcast %cst_66 : f32 to vector<8x1xf32>
    %129 = arith.addf %125, %128 : vector<8x1xf32>
    %130 = math.rsqrt %129 : vector<8x1xf32>
    %131 = vector.broadcast %130 : vector<8x1xf32> to vector<8x128xf32>
    %132 = arith.mulf %127, %131 : vector<8x128xf32>
    %133 = vector.broadcast %113 : vector<1x128xf32> to vector<8x128xf32>
    %134 = arith.mulf %132, %133 : vector<8x128xf32>
    %135 = vector.broadcast %114 : vector<1x128xf32> to vector<8x128xf32>
    %136 = arith.addf %134, %135 : vector<8x128xf32>
    %137 = arith.truncf %136 : vector<8x128xf32> to vector<8x128xbf16>
    %c0_67 = arith.constant 0 : index
    %c0_68 = arith.constant 0 : index
    %138 = vector.load %arg15[%c0_67, %c0_68] : memref<128x512xbf16, #tpu.memory_space<vmem>>, vector<128x512xbf16>
    %cst_69 = arith.constant dense<0.000000e+00> : vector<8x512xf32>
    %139 = tpu.matmul %137, %138, %cst_69 {dimension_numbers = #tpu.dot_dimension_numbers<[1], [0], [0], [1], [0, 0, 1, 1], [], []>} : vector<8x128xbf16>, vector<128x512xbf16>, vector<8x512xf32> -> vector<8x512xf32>
    %c0_70 = arith.constant 0 : index
    %c0_71 = arith.constant 0 : index
    %140 = vector.load %arg16[%c0_70, %c0_71] : memref<1x512xf32, #tpu.memory_space<vmem>>, vector<1x512xf32>
    %141 = vector.broadcast %140 : vector<1x512xf32> to vector<8x512xf32>
    %142 = arith.addf %139, %141 : vector<8x512xf32>
    %cst_72 = arith.constant 5.000000e-01 : f32
    %143 = vector.broadcast %cst_72 : f32 to vector<8x512xf32>
    %144 = arith.mulf %143, %142 : vector<8x512xf32>
    %cst_73 = arith.constant 0.707106769 : f32
    %145 = vector.broadcast %cst_73 : f32 to vector<8x512xf32>
    %146 = arith.mulf %142, %145 : vector<8x512xf32>
    %147 = math.erf %146 : vector<8x512xf32>
    %cst_74 = arith.constant 1.000000e+00 : f32
    %148 = vector.broadcast %cst_74 : f32 to vector<8x512xf32>
    %149 = arith.addf %148, %147 : vector<8x512xf32>
    %150 = arith.mulf %144, %149 : vector<8x512xf32>
    %151 = arith.truncf %150 : vector<8x512xf32> to vector<8x512xbf16>
    %c0_75 = arith.constant 0 : index
    %c0_76 = arith.constant 0 : index
    %152 = vector.load %arg17[%c0_75, %c0_76] : memref<512x128xbf16, #tpu.memory_space<vmem>>, vector<512x128xbf16>
    %cst_77 = arith.constant dense<0.000000e+00> : vector<8x128xf32>
    %153 = tpu.matmul %151, %152, %cst_77 {dimension_numbers = #tpu.dot_dimension_numbers<[1], [0], [0], [1], [0, 0, 1, 1], [], []>} : vector<8x512xbf16>, vector<512x128xbf16>, vector<8x128xf32> -> vector<8x128xf32>
    %c0_78 = arith.constant 0 : index
    %c0_79 = arith.constant 0 : index
    %154 = vector.load %arg18[%c0_78, %c0_79] : memref<1x128xf32, #tpu.memory_space<vmem>>, vector<1x128xf32>
    %155 = vector.broadcast %154 : vector<1x128xf32> to vector<8x128xf32>
    %156 = arith.addf %153, %155 : vector<8x128xf32>
    %157 = arith.addf %156, %136 : vector<8x128xf32>
    %c0_80 = arith.constant 0 : index
    %c0_81 = arith.constant 0 : index
    %158 = vector.load %arg19[%c0_80, %c0_81] : memref<1x128xf32, #tpu.memory_space<vmem>>, vector<1x128xf32>
    %c0_82 = arith.constant 0 : index
    %c0_83 = arith.constant 0 : index
    %159 = vector.load %arg20[%c0_82, %c0_83] : memref<1x128xf32, #tpu.memory_space<vmem>>, vector<1x128xf32>
    %cst_84 = arith.constant dense<0.000000e+00> : vector<8xf32>
    %160 = vector.multi_reduction <add>, %157, %cst_84 [1] : vector<8x128xf32> to vector<8xf32>
    %161 = vector.shape_cast %160 : vector<8xf32> to vector<8x1xf32>
    %cst_85 = arith.constant 1.280000e+02 : f32
    %162 = vector.broadcast %cst_85 : f32 to vector<8x1xf32>
    %163 = arith.divf %161, %162 : vector<8x1xf32>
    %164 = vector.broadcast %163 : vector<8x1xf32> to vector<8x128xf32>
    %165 = arith.subf %157, %164 : vector<8x128xf32>
    %166 = arith.mulf %165, %165 : vector<8x128xf32>
    %cst_86 = arith.constant dense<0.000000e+00> : vector<8xf32>
    %167 = vector.multi_reduction <add>, %166, %cst_86 [1] : vector<8x128xf32> to vector<8xf32>
    %168 = vector.shape_cast %167 : vector<8xf32> to vector<8x1xf32>
    %cst_87 = arith.constant 1.280000e+02 : f32
    %169 = vector.broadcast %cst_87 : f32 to vector<8x1xf32>
    %170 = arith.divf %168, %169 : vector<8x1xf32>
    %171 = vector.broadcast %163 : vector<8x1xf32> to vector<8x128xf32>
    %172 = arith.subf %157, %171 : vector<8x128xf32>
    %cst_88 = arith.constant 9.99999996E-13 : f32
    %173 = vector.broadcast %cst_88 : f32 to vector<8x1xf32>
    %174 = arith.addf %170, %173 : vector<8x1xf32>
    %175 = math.rsqrt %174 : vector<8x1xf32>
    %176 = vector.broadcast %175 : vector<8x1xf32> to vector<8x128xf32>
    %177 = arith.mulf %172, %176 : vector<8x128xf32>
    %178 = vector.broadcast %158 : vector<1x128xf32> to vector<8x128xf32>
    %179 = arith.mulf %177, %178 : vector<8x128xf32>
    %180 = vector.broadcast %159 : vector<1x128xf32> to vector<8x128xf32>
    %181 = arith.addf %179, %180 : vector<8x128xf32>
    %c0_89 = arith.constant 0 : index
    %c0_90 = arith.constant 0 : index
    %c0_91 = arith.constant 0 : index
    %182 = vector.load %arg21[%c0_89, %c0_90, %c0_91] : memref<1x8x128xf32, #tpu.memory_space<vmem>>, vector<1x8x128xf32>
    %183 = vector.shape_cast %182 : vector<1x8x128xf32> to vector<8x128xf32>
    %184 = vector.shape_cast %181 : vector<8x128xf32> to vector<1x8x128xf32>
    tpu.vector_store %arg21[%c0_89, %c0_90, %c0_91], %184 {strides = array<i32>} : memref<1x8x128xf32, #tpu.memory_space<vmem>>, vector<1x8x128xf32>,
    return
  }
  func.func @transform_0(%arg0: i32, %arg1: i32) -> (i32, i32, i32) {
    %c0_i32 = arith.constant 0 : i32
    %c0_i32_0 = arith.constant 0 : i32
    %c0_i32_1 = arith.constant 0 : i32
    return %arg0, %c0_i32, %c0_i32_0 : i32, i32, i32
  }
  func.func @transform_1(%arg0: i32, %arg1: i32) -> (i32, i32, i32) {
    %c0_i32 = arith.constant 0 : i32
    %c0_i32_0 = arith.constant 0 : i32
    return %arg0, %arg1, %c0_i32 : i32, i32, i32
  }
  func.func @transform_2(%arg0: i32, %arg1: i32) -> (i32, i32, i32) {
    %c0_i32 = arith.constant 0 : i32
    %c0_i32_0 = arith.constant 0 : i32
    %c0_i32_1 = arith.constant 0 : i32
    return %arg0, %c0_i32, %c0_i32_0 : i32, i32, i32
  }
  func.func @transform_3(%arg0: i32, %arg1: i32) -> (i32, i32) {
    %c0_i32 = arith.constant 0 : i32
    %c0_i32_0 = arith.constant 0 : i32
    %c0_i32_1 = arith.constant 0 : i32
    return %c0_i32, %c0_i32_0 : i32, i32
  }
  func.func @transform_4(%arg0: i32, %arg1: i32) -> (i32, i32) {
    %c0_i32 = arith.constant 0 : i32
    %c0_i32_0 = arith.constant 0 : i32
    %c0_i32_1 = arith.constant 0 : i32
    return %c0_i32, %c0_i32_0 : i32, i32
  }
  func.func @transform_5(%arg0: i32, %arg1: i32) -> (i32, i32) {
    %c0_i32 = arith.constant 0 : i32
    %c0_i32_0 = arith.constant 0 : i32
    %c0_i32_1 = arith.constant 0 : i32
    return %c0_i32, %c0_i32_0 : i32, i32
  }
  func.func @transform_6(%arg0: i32, %arg1: i32) -> (i32, i32) {
    %c0_i32 = arith.constant 0 : i32
    %c0_i32_0 = arith.constant 0 : i32
    %c0_i32_1 = arith.constant 0 : i32
    return %c0_i32, %c0_i32_0 : i32, i32
  }
  func.func @transform_7(%arg0: i32, %arg1: i32) -> (i32, i32) {
    %c0_i32 = arith.constant 0 : i32
    %c0_i32_0 = arith.constant 0 : i32
    %c0_i32_1 = arith.constant 0 : i32
    return %c0_i32, %c0_i32_0 : i32, i32
  }
  func.func @transform_8(%arg0: i32, %arg1: i32) -> (i32, i32) {
    %c0_i32 = arith.constant 0 : i32
    %c0_i32_0 = arith.constant 0 : i32
    %c0_i32_1 = arith.constant 0 : i32
    return %c0_i32, %c0_i32_0 : i32, i32
  }
  func.func @transform_9(%arg0: i32, %arg1: i32) -> (i32, i32) {
    %c0_i32 = arith.constant 0 : i32
    %c0_i32_0 = arith.constant 0 : i32
    %c0_i32_1 = arith.constant 0 : i32
    return %c0_i32, %c0_i32_0 : i32, i32
  }
  func.func @transform_10(%arg0: i32, %arg1: i32) -> (i32, i32) {
    %c0_i32 = arith.constant 0 : i32
    %c0_i32_0 = arith.constant 0 : i32
    %c0_i32_1 = arith.constant 0 : i32
    return %c0_i32, %c0_i32_0 : i32, i32
  }
  func.func @transform_11(%arg0: i32, %arg1: i32) -> (i32, i32) {
    %c0_i32 = arith.constant 0 : i32
    %c0_i32_0 = arith.constant 0 : i32
    %c0_i32_1 = arith.constant 0 : i32
    return %c0_i32, %c0_i32_0 : i32, i32
  }
  func.func @transform_12(%arg0: i32, %arg1: i32) -> (i32, i32) {
    %c0_i32 = arith.constant 0 : i32
    %c0_i32_0 = arith.constant 0 : i32
    %c0_i32_1 = arith.constant 0 : i32
    return %c0_i32, %c0_i32_0 : i32, i32
  }
  func.func @transform_13(%arg0: i32, %arg1: i32) -> (i32, i32) {
    %c0_i32 = arith.constant 0 : i32
    %c0_i32_0 = arith.constant 0 : i32
    %c0_i32_1 = arith.constant 0 : i32
    return %c0_i32, %c0_i32_0 : i32, i32
  }
  func.func @transform_14(%arg0: i32, %arg1: i32) -> (i32, i32) {
    %c0_i32 = arith.constant 0 : i32
    %c0_i32_0 = arith.constant 0 : i32
    %c0_i32_1 = arith.constant 0 : i32
    return %c0_i32, %c0_i32_0 : i32, i32
  }
  func.func @transform_15(%arg0: i32, %arg1: i32) -> (i32, i32) {
    %c0_i32 = arith.constant 0 : i32
    %c0_i32_0 = arith.constant 0 : i32
    %c0_i32_1 = arith.constant 0 : i32
    return %c0_i32, %c0_i32_0 : i32, i32
  }
  func.func @transform_16(%arg0: i32, %arg1: i32) -> (i32, i32) {
    %c0_i32 = arith.constant 0 : i32
    %c0_i32_0 = arith.constant 0 : i32
    %c0_i32_1 = arith.constant 0 : i32
    return %c0_i32, %c0_i32_0 : i32, i32
  }
  func.func @transform_17(%arg0: i32, %arg1: i32) -> (i32, i32) {
    %c0_i32 = arith.constant 0 : i32
    %c0_i32_0 = arith.constant 0 : i32
    %c0_i32_1 = arith.constant 0 : i32
    return %c0_i32, %c0_i32_0 : i32, i32
  }
  func.func @transform_18(%arg0: i32, %arg1: i32) -> (i32, i32) {
    %c0_i32 = arith.constant 0 : i32
    %c0_i32_0 = arith.constant 0 : i32
    %c0_i32_1 = arith.constant 0 : i32
    return %c0_i32, %c0_i32_0 : i32, i32
  }
  func.func @transform_19(%arg0: i32, %arg1: i32) -> (i32, i32, i32) {
    %c0_i32 = arith.constant 0 : i32
    %c0_i32_0 = arith.constant 0 : i32
    return %arg0, %arg1, %c0_i32 : i32, i32, i32
  }
}

</mosaic_0001>

<llo_original>
// kernel: tpu_custom_call.1
$region0: #{tpu_custom_call.1}
  #allocation0 [shape = 'u32[]', space=smem, size = 0x4, offset = 0x4, fixed_abs, tag = 'smem constant byte address 0x4 - core index']
  #allocation1 [shape = 'u32[144,128]{1,0:T(1,128)}', space=vmem, size = 0x12000, scoped, tag = 'internal scratch']
  #allocation2 [shape = 'bf16[4,32,16]{2,1,0:T(8,128)(2,1)}', space=vmem, size = 0x8000, scoped, tag = 'scratch operand']
  #allocation3 [shape = 'bf16[4,16,32]{2,1,0:T(8,128)(2,1)}', space=vmem, size = 0x4000, scoped, tag = 'scratch operand']
  %s0 = inlined_call_operand.hbm [shape: f32[2,16,128], index: 0, kind: input, shape index: {}]
  %s1 = inlined_call_operand.hbm [shape: f32[2,16,128], index: 1, kind: input, shape index: {}]
  %s2 = inlined_call_operand.hbm [shape: f32[2,1,16], index: 2, kind: input, shape index: {}]
  %s3 = inlined_call_operand.vmem [shape: bf16[128,128], index: 3, kind: input, shape index: {}]
  %s4 = inlined_call_operand.vmem [shape: f32[1,128], index: 4, kind: input, shape index: {}]
  %s5 = inlined_call_operand.vmem [shape: bf16[128,128], index: 5, kind: input, shape index: {}]
  %s6 = inlined_call_operand.vmem [shape: f32[128,1], index: 6, kind: input, shape index: {}]
  %s7 = inlined_call_operand.hbm [shape: bf16[128,128], index: 7, kind: input, shape index: {}]
  %s8 = inlined_call_operand.vmem [shape: f32[1,128], index: 8, kind: input, shape index: {}]
  %s9 = inlined_call_operand.hbm [shape: bf16[128,128], index: 9, kind: input, shape index: {}]
  %s10 = inlined_call_operand.vmem [shape: f32[1,128], index: 10, kind: input, shape index: {}]
  %s11 = inlined_call_operand.vmem [shape: f32[1,128], index: 11, kind: input, shape index: {}]
  %s12 = inlined_call_operand.vmem [shape: f32[1,128], index: 12, kind: input, shape index: {}]
  %s13 = inlined_call_operand.hbm [shape: bf16[128,512], index: 13, kind: input, shape index: {}]
  %s14 = inlined_call_operand.vmem [shape: f32[1,512], index: 14, kind: input, shape index: {}]
  %s15 = inlined_call_operand.hbm [shape: bf16[512,128], index: 15, kind: input, shape index: {}]
  %s16 = inlined_call_operand.vmem [shape: f32[1,128], index: 16, kind: input, shape index: {}]
  %s17 = inlined_call_operand.vmem [shape: f32[1,128], index: 17, kind: input, shape index: {}]
  %s18 = inlined_call_operand.vmem [shape: f32[1,128], index: 18, kind: input, shape index: {}]
  %s19 = inlined_call_operand.hbm [shape: f32[2,16,128], index: 19, kind: output, shape index: {}]
  %s20 = sld [smem:[#allocation0]]
  $region141: #{tpu_custom_call.1} parent=0
    _
  %s22 = ssub.s32 1, %s20
  %s23 = scalar_select 0, %s22, %s20
  $region1: #{tpu_custom_call.1} parent=0
    #allocation4 [shape = 'u8[8192]{0}', space=vmem, size = 0x2000, scoped, tag = 'input window, operand 0, single buffered']
    #allocation5 [shape = 's32[2]{0}', space=sflag, size = 0x8, scoped, tag = 'scoped memory for tpu_custom_call.1']
    #allocation6 [shape = 's32[2]{0}', space=sflag, size = 0x8, scoped, tag = 'scoped memory for tpu_custom_call.1']
    #allocation7 [shape = 'u8[8192]{0}', space=vmem, size = 0x2000, scoped, tag = 'input window, operand 1']
    #allocation8 [shape = 's32[2]{0}', space=sflag, size = 0x8, scoped, tag = 'scoped memory for tpu_custom_call.1']
    #allocation9 [shape = 'u8[1024]{0}', space=vmem, size = 0x400, scoped, tag = 'input window, operand 2']
    #allocation10 [shape = 'u8[32768]{0}', space=vmem, size = 0x8000, scoped, tag = 'input window, operand 7, single buffered']
    #allocation11 [shape = 's32[1]{0}', space=sflag, size = 0x4, scoped, tag = 'scoped memory for tpu_custom_call.1']
    #allocation12 [shape = 'u8[32768]{0}', space=vmem, size = 0x8000, scoped, tag = 'input window, operand 9, single buffered']
    #allocation13 [shape = 'u8[131072]{0}', space=vmem, size = 0x20000, scoped, tag = 'input window, operand 13, single buffered']
    #allocation14 [shape = 's32[1]{0}', space=sflag, size = 0x4, scoped, tag = 'scoped memory for tpu_custom_call.1']
    #allocation15 [shape = 'u8[131072]{0}', space=vmem, size = 0x20000, scoped, tag = 'input window, operand 15, single buffered']
    #allocation16 [shape = 'u8[8192]{0}', space=vmem, size = 0x2000, scoped, tag = 'output window, operand 0']
    %24 = vsyncpa [#allocation5], 0
    %25 = vsyncpa [#allocation8], 0
    %s26 = scalar_lea.sflag [#allocation8], 1
    %27 = vsyncpa %s26, 0
    %28 = vsyncpa [#allocation11], 0
    %29 = vsyncpa [#allocation14], 0
    %30 = vsyncpa [#allocation6], 0
    %s31 = scalar_lea.sflag [#allocation6], 1
    %32 = vsyncpa %s31, 0
    loop: start=0, step=1, limit=6
    $region2: #{tpu_custom_call.1} parent=1 // loop_pre_header
      _
    $region3: #{tpu_custom_call.1} parent=1 // loop_header
      %s34 = sphi 0, %s38
      %p35 = scmp.ge.s32.totalorder %s34, 6
      %s41 = sphi 0, %s53
      %s42 = sphi 0, %s49
      %s43 = sphi 0, %s41
      %s44 = sphi 0, %s42
      %s45 = sphi 0, %s43
      %s46 = sphi 0, %s44
      %s56 = sphi 0, %s58
      %s59 = sphi 0, %s56
      %s60 = sphi 0, %s59
      %s76 = sphi 0, %s60
      %s84 = sphi 0, %s86
      %s87 = sphi 0, %s84
      %s88 = sphi 0, %s87
      %s104 = sphi 0, %s88
      %s110 = sphi 0, %s112
      %s113 = sphi 0, %s110
      %s114 = sphi 0, %s113
      %s130 = sphi 0, %s114
      %s134 = sphi 0, %s134
      %s136 = sphi 0, %s134
      %s137 = sphi 0, %s136
      %s151 = sphi 0, %s137
      %s155 = sphi 0, %s155
      %s157 = sphi 0, %s155
      %s158 = sphi 0, %s157
      %s172 = sphi 0, %s158
      %s176 = sphi 0, %s176
      %s178 = sphi 0, %s176
      %s179 = sphi 0, %s178
      %s193 = sphi 0, %s179
      %s197 = sphi 0, %s197
      %s199 = sphi 0, %s197
      %s200 = sphi 0, %s199
      %s214 = sphi 0, %s200
      %s218 = sphi 0, %s218
      %s220 = sphi 0, %s218
      %s221 = sphi 0, %s220
      %s235 = sphi 0, %s221
      %s239 = sphi 0, %s239
      %s241 = sphi 0, %s239
      %s242 = sphi 0, %s241
      %s256 = sphi 0, %s242
      %s260 = sphi 0, %s260
      %s262 = sphi 0, %s260
      %s263 = sphi 0, %s262
      %s277 = sphi 0, %s263
      %s281 = sphi 0, %s281
      %s283 = sphi 0, %s281
      %s284 = sphi 0, %s283
      %s298 = sphi 0, %s284
      %s302 = sphi 0, %s302
      %s304 = sphi 0, %s302
      %s305 = sphi 0, %s304
      %s319 = sphi 0, %s305
      %s323 = sphi 0, %s323
      %s325 = sphi 0, %s323
      %s326 = sphi 0, %s325
      %s340 = sphi 0, %s326
      %s344 = sphi 0, %s344
      %s346 = sphi 0, %s344
      %s347 = sphi 0, %s346
      %s361 = sphi 0, %s347
      %s365 = sphi 0, %s365
      %s367 = sphi 0, %s365
      %s368 = sphi 0, %s367
      %s382 = sphi 0, %s368
      %s386 = sphi 0, %s386
      %s388 = sphi 0, %s386
      %s389 = sphi 0, %s388
      %s403 = sphi 0, %s389
      %s407 = sphi 0, %s407
      %s409 = sphi 0, %s407
      %s410 = sphi 0, %s409
      %s424 = sphi 0, %s410
      %s428 = sphi 0, %s428
      %s430 = sphi 0, %s428
      %s431 = sphi 0, %s430
      %s445 = sphi 0, %s431
      %s449 = sphi 0, %s449
      %s451 = sphi 0, %s449
      %s452 = sphi 0, %s451
      %s466 = sphi 0, %s452
      %s474 = sphi 0, %s476
      %s477 = sphi 0, %s474
      %s478 = sphi 0, %s477
      %s494 = sphi 0, %s478
    $region4: #{tpu_custom_call.1} parent=1 // loop_header_branch
      %37 = sbr.rel (%p35) target = $region8
    $region5: #{tpu_custom_call.1} parent=1 // loop_body
      %s39 = ssub.s32 %s34, 1
      %s40 = ssub.s32 %s34, 2
      %s47 = sadd.s32 1, %s42
      %p48 = scmp.ge.s32.totalorder %s47, 2
      %s49 = scalar_select %p48, 0, %s47
      %s50 = sadd.s32 1, %s41
      %s51 = scalar_select %p48, %s50, %s41
      %p52 = scmp.ge.s32.totalorder %s51, 2
      %s53 = scalar_select %p52, 0, %s51
      %s54 = ssub.s32 %s41, %s53
      %p55 = scmp.eq.s32.totalorder %s54, 0
      %s57 = sadd.s32 %s56, 1
      %s58 = scalar_select %p55, %s56, %s57
      %p61 = pneg %p55
      %p62 = scmp.eq.s32.totalorder %s34, 3
      %p63 = por %p61, %p62
      %p64 = scmp.ne.s32.totalorder %s56, %s59
      %p65 = scmp.eq.s32.totalorder %s34, 0
      %p66 = por %p64, %p65
      %p67 = scmp.ne.s32.totalorder %s56, %s59
      %p68 = scmp.eq.s32.totalorder %s39, 3
      %p69 = por %p67, %p68
      %p70 = scmp.ne.s32.totalorder %s59, %s60
      %p71 = scmp.eq.s32.totalorder %s39, 0
      %p72 = por %p70, %p71
      %p73 = scmp.ne.s32.totalorder %s59, %s60
      %p74 = scmp.eq.s32.totalorder %s40, 3
      %p75 = por %p73, %p74
      %p77 = scmp.ne.s32.totalorder %s60, %s76
      %p78 = scmp.eq.s32.totalorder %s40, 0
      %p79 = por %p77, %p78
      %s80 = ssub.s32 %s41, %s53
      %s81 = ssub.s32 %s42, %s49
      %s82 = sor.u32 %s80, %s81
      %p83 = scmp.eq.s32.totalorder %s82, 0
      %s85 = sadd.s32 %s84, 1
      %s86 = scalar_select %p83, %s84, %s85
      %p89 = pneg %p83
      %p90 = scmp.eq.s32.totalorder %s34, 3
      %p91 = por %p89, %p90
      %p92 = scmp.ne.s32.totalorder %s84, %s87
      %p93 = scmp.eq.s32.totalorder %s34, 0
      %p94 = por %p92, %p93
      %p95 = scmp.ne.s32.totalorder %s84, %s87
      %p96 = scmp.eq.s32.totalorder %s39, 3
      %p97 = por %p95, %p96
      %p98 = scmp.ne.s32.totalorder %s87, %s88
      %p99 = scmp.eq.s32.totalorder %s39, 0
      %p100 = por %p98, %p99
      %p101 = scmp.ne.s32.totalorder %s87, %s88
      %p102 = scmp.eq.s32.totalorder %s40, 3
      %p103 = por %p101, %p102
      %p105 = scmp.ne.s32.totalorder %s88, %s104
      %p106 = scmp.eq.s32.totalorder %s40, 0
      %p107 = por %p105, %p106
      %s108 = ssub.s32 %s41, %s53
      %p109 = scmp.eq.s32.totalorder %s108, 0
      %s111 = sadd.s32 %s110, 1
      %s112 = scalar_select %p109, %s110, %s111
      %p115 = pneg %p109
      %p116 = scmp.eq.s32.totalorder %s34, 3
      %p117 = por %p115, %p116
      %p118 = scmp.ne.s32.totalorder %s110, %s113
      %p119 = scmp.eq.s32.totalorder %s34, 0
      %p120 = por %p118, %p119
      %p121 = scmp.ne.s32.totalorder %s110, %s113
      %p122 = scmp.eq.s32.totalorder %s39, 3
      %p123 = por %p121, %p122
      %p124 = scmp.ne.s32.totalorder %s113, %s114
      %p125 = scmp.eq.s32.totalorder %s39, 0
      %p126 = por %p124, %p125
      %p127 = scmp.ne.s32.totalorder %s113, %s114
      %p128 = scmp.eq.s32.totalorder %s40, 3
      %p129 = por %p127, %p128
      %p131 = scmp.ne.s32.totalorder %s114, %s130
      %p132 = scmp.eq.s32.totalorder %s40, 0
      %p133 = por %p131, %p132
      %s135 = sadd.s32 %s134, 1
      %p138 = scmp.eq.s32.totalorder %s34, 3
      %p139 = scmp.ne.s32.totalorder %s134, %s136
      %p140 = scmp.eq.s32.totalorder %s34, 0
      %p141 = por %p139, %p140
      %p142 = scmp.ne.s32.totalorder %s134, %s136
      %p143 = scmp.eq.s32.totalorder %s39, 3
      %p144 = por %p142, %p143
      %p145 = scmp.ne.s32.totalorder %s136, %s137
      %p146 = scmp.eq.s32.totalorder %s39, 0
      %p147 = por %p145, %p146
      %p148 = scmp.ne.s32.totalorder %s136, %s137
      %p149 = scmp.eq.s32.totalorder %s40, 3
      %p150 = por %p148, %p149
      %p152 = scmp.ne.s32.totalorder %s137, %s151
      %p153 = scmp.eq.s32.totalorder %s40, 0
      %p154 = por %p152, %p153
      %s156 = sadd.s32 %s155, 1
      %p159 = scmp.eq.s32.totalorder %s34, 3
      %p160 = scmp.ne.s32.totalorder %s155, %s157
      %p161 = scmp.eq.s32.totalorder %s34, 0
      %p162 = por %p160, %p161
      %p163 = scmp.ne.s32.totalorder %s155, %s157
      %p164 = scmp.eq.s32.totalorder %s39, 3
      %p165 = por %p163, %p164
      %p166 = scmp.ne.s32.totalorder %s157, %s158
      %p167 = scmp.eq.s32.totalorder %s39, 0
      %p168 = por %p166, %p167
      %p169 = scmp.ne.s32.totalorder %s157, %s158
      %p170 = scmp.eq.s32.totalorder %s40, 3
      %p171 = por %p169, %p170
      %p173 = scmp.ne.s32.totalorder %s158, %s172
      %p174 = scmp.eq.s32.totalorder %s40, 0
      %p175 = por %p173, %p174
      %s177 = sadd.s32 %s176, 1
      %p180 = scmp.eq.s32.totalorder %s34, 3
      %p181 = scmp.ne.s32.totalorder %s176, %s178
      %p182 = scmp.eq.s32.totalorder %s34, 0
      %p183 = por %p181, %p182
      %p184 = scmp.ne.s32.totalorder %s176, %s178
      %p185 = scmp.eq.s32.totalorder %s39, 3
      %p186 = por %p184, %p185
      %p187 = scmp.ne.s32.totalorder %s178, %s179
      %p188 = scmp.eq.s32.totalorder %s39, 0
      %p189 = por %p187, %p188
      %p190 = scmp.ne.s32.totalorder %s178, %s179
      %p191 = scmp.eq.s32.totalorder %s40, 3
      %p192 = por %p190, %p191
      %p194 = scmp.ne.s32.totalorder %s179, %s193
      %p195 = scmp.eq.s32.totalorder %s40, 0
      %p196 = por %p194, %p195
      %s198 = sadd.s32 %s197, 1
      %p201 = scmp.eq.s32.totalorder %s34, 3
      %p202 = scmp.ne.s32.totalorder %s197, %s199
      %p203 = scmp.eq.s32.totalorder %s34, 0
      %p204 = por %p202, %p203
      %p205 = scmp.ne.s32.totalorder %s197, %s199
      %p206 = scmp.eq.s32.totalorder %s39, 3
      %p207 = por %p205, %p206
      %p208 = scmp.ne.s32.totalorder %s199, %s200
      %p209 = scmp.eq.s32.totalorder %s39, 0
      %p210 = por %p208, %p209
      %p211 = scmp.ne.s32.totalorder %s199, %s200
      %p212 = scmp.eq.s32.totalorder %s40, 3
      %p213 = por %p211, %p212
      %p215 = scmp.ne.s32.totalorder %s200, %s214
      %p216 = scmp.eq.s32.totalorder %s40, 0
      %p217 = por %p215, %p216
      %s219 = sadd.s32 %s218, 1
      %p222 = scmp.eq.s32.totalorder %s34, 3
      %p223 = scmp.ne.s32.totalorder %s218, %s220
      %p224 = scmp.eq.s32.totalorder %s34, 0
      %p225 = por %p223, %p224
      %p226 = scmp.ne.s32.totalorder %s218, %s220
      %p227 = scmp.eq.s32.totalorder %s39, 3
      %p228 = por %p226, %p227
      %p229 = scmp.ne.s32.totalorder %s220, %s221
      %p230 = scmp.eq.s32.totalorder %s39, 0
      %p231 = por %p229, %p230
      %p232 = scmp.ne.s32.totalorder %s220, %s221
      %p233 = scmp.eq.s32.totalorder %s40, 3
      %p234 = por %p232, %p233
      %p236 = scmp.ne.s32.totalorder %s221, %s235
      %p237 = scmp.eq.s32.totalorder %s40, 0
      %p238 = por %p236, %p237
      %s240 = sadd.s32 %s239, 1
      %p243 = scmp.eq.s32.totalorder %s34, 3
      %p244 = scmp.ne.s32.totalorder %s239, %s241
      %p245 = scmp.eq.s32.totalorder %s34, 0
      %p246 = por %p244, %p245
      %p247 = scmp.ne.s32.totalorder %s239, %s241
      %p248 = scmp.eq.s32.totalorder %s39, 3
      %p249 = por %p247, %p248
      %p250 = scmp.ne.s32.totalorder %s241, %s242
      %p251 = scmp.eq.s32.totalorder %s39, 0
      %p252 = por %p250, %p251
      %p253 = scmp.ne.s32.totalorder %s241, %s242
      %p254 = scmp.eq.s32.totalorder %s40, 3
      %p255 = por %p253, %p254
      %p257 = scmp.ne.s32.totalorder %s242, %s256
      %p258 = scmp.eq.s32.totalorder %s40, 0
      %p259 = por %p257, %p258
      %s261 = sadd.s32 %s260, 1
      %p264 = scmp.eq.s32.totalorder %s34, 3
      %p265 = scmp.ne.s32.totalorder %s260, %s262
      %p266 = scmp.eq.s32.totalorder %s34, 0
      %p267 = por %p265, %p266
      %p268 = scmp.ne.s32.totalorder %s260, %s262
      %p269 = scmp.eq.s32.totalorder %s39, 3
      %p270 = por %p268, %p269
      %p271 = scmp.ne.s32.totalorder %s262, %s263
      %p272 = scmp.eq.s32.totalorder %s39, 0
      %p273 = por %p271, %p272
      %p274 = scmp.ne.s32.totalorder %s262, %s263
      %p275 = scmp.eq.s32.totalorder %s40, 3
      %p276 = por %p274, %p275
      %p278 = scmp.ne.s32.totalorder %s263, %s277
      %p279 = scmp.eq.s32.totalorder %s40, 0
      %p280 = por %p278, %p279
      %s282 = sadd.s32 %s281, 1
      %p285 = scmp.eq.s32.totalorder %s34, 3
      %p286 = scmp.ne.s32.totalorder %s281, %s283
      %p287 = scmp.eq.s32.totalorder %s34, 0
      %p288 = por %p286, %p287
      %p289 = scmp.ne.s32.totalorder %s281, %s283
      %p290 = scmp.eq.s32.totalorder %s39, 3
      %p291 = por %p289, %p290
      %p292 = scmp.ne.s32.totalorder %s283, %s284
      %p293 = scmp.eq.s32.totalorder %s39, 0
      %p294 = por %p292, %p293
      %p295 = scmp.ne.s32.totalorder %s283, %s284
      %p296 = scmp.eq.s32.totalorder %s40, 3
      %p297 = por %p295, %p296
      %p299 = scmp.ne.s32.totalorder %s284, %s298
      %p300 = scmp.eq.s32.totalorder %s40, 0
      %p301 = por %p299, %p300
      %s303 = sadd.s32 %s302, 1
      %p306 = scmp.eq.s32.totalorder %s34, 3
      %p307 = scmp.ne.s32.totalorder %s302, %s304
      %p308 = scmp.eq.s32.totalorder %s34, 0
      %p309 = por %p307, %p308
      %p310 = scmp.ne.s32.totalorder %s302, %s304
      %p311 = scmp.eq.s32.totalorder %s39, 3
      %p312 = por %p310, %p311
      %p313 = scmp.ne.s32.totalorder %s304, %s305
      %p314 = scmp.eq.s32.totalorder %s39, 0
      %p315 = por %p313, %p314
      %p316 = scmp.ne.s32.totalorder %s304, %s305
      %p317 = scmp.eq.s32.totalorder %s40, 3
      %p318 = por %p316, %p317
      %p320 = scmp.ne.s32.totalorder %s305, %s319
      %p321 = scmp.eq.s32.totalorder %s40, 0
      %p322 = por %p320, %p321
      %s324 = sadd.s32 %s323, 1
      %p327 = scmp.eq.s32.totalorder %s34, 3
      %p328 = scmp.ne.s32.totalorder %s323, %s325
      %p329 = scmp.eq.s32.totalorder %s34, 0
      %p330 = por %p328, %p329
      %p331 = scmp.ne.s32.totalorder %s323, %s325
      %p332 = scmp.eq.s32.totalorder %s39, 3
      %p333 = por %p331, %p332
      %p334 = scmp.ne.s32.totalorder %s325, %s326
      %p335 = scmp.eq.s32.totalorder %s39, 0
      %p336 = por %p334, %p335
      %p337 = scmp.ne.s32.totalorder %s325, %s326
      %p338 = scmp.eq.s32.totalorder %s40, 3
      %p339 = por %p337, %p338
      %p341 = scmp.ne.s32.totalorder %s326, %s340
      %p342 = scmp.eq.s32.totalorder %s40, 0
      %p343 = por %p341, %p342
      %s345 = sadd.s32 %s344, 1
      %p348 = scmp.eq.s32.totalorder %s34, 3
      %p349 = scmp.ne.s32.totalorder %s344, %s346
      %p350 = scmp.eq.s32.totalorder %s34, 0
      %p351 = por %p349, %p350
      %p352 = scmp.ne.s32.totalorder %s344, %s346
      %p353 = scmp.eq.s32.totalorder %s39, 3
      %p354 = por %p352, %p353
      %p355 = scmp.ne.s32.totalorder %s346, %s347
      %p356 = scmp.eq.s32.totalorder %s39, 0
      %p357 = por %p355, %p356
      %p358 = scmp.ne.s32.totalorder %s346, %s347
      %p359 = scmp.eq.s32.totalorder %s40, 3
      %p360 = por %p358, %p359
      %p362 = scmp.ne.s32.totalorder %s347, %s361
      %p363 = scmp.eq.s32.totalorder %s40, 0
      %p364 = por %p362, %p363
      %s366 = sadd.s32 %s365, 1
      %p369 = scmp.eq.s32.totalorder %s34, 3
      %p370 = scmp.ne.s32.totalorder %s365, %s367
      %p371 = scmp.eq.s32.totalorder %s34, 0
      %p372 = por %p370, %p371
      %p373 = scmp.ne.s32.totalorder %s365, %s367
      %p374 = scmp.eq.s32.totalorder %s39, 3
      %p375 = por %p373, %p374
      %p376 = scmp.ne.s32.totalorder %s367, %s368
      %p377 = scmp.eq.s32.totalorder %s39, 0
      %p378 = por %p376, %p377
      %p379 = scmp.ne.s32.totalorder %s367, %s368
      %p380 = scmp.eq.s32.totalorder %s40, 3
      %p381 = por %p379, %p380
      %p383 = scmp.ne.s32.totalorder %s368, %s382
      %p384 = scmp.eq.s32.totalorder %s40, 0
      %p385 = por %p383, %p384
      %s387 = sadd.s32 %s386, 1
      %p390 = scmp.eq.s32.totalorder %s34, 3
      %p391 = scmp.ne.s32.totalorder %s386, %s388
      %p392 = scmp.eq.s32.totalorder %s34, 0
      %p393 = por %p391, %p392
      %p394 = scmp.ne.s32.totalorder %s386, %s388
      %p395 = scmp.eq.s32.totalorder %s39, 3
      %p396 = por %p394, %p395
      %p397 = scmp.ne.s32.totalorder %s388, %s389
      %p398 = scmp.eq.s32.totalorder %s39, 0
      %p399 = por %p397, %p398
      %p400 = scmp.ne.s32.totalorder %s388, %s389
      %p401 = scmp.eq.s32.totalorder %s40, 3
      %p402 = por %p400, %p401
      %p404 = scmp.ne.s32.totalorder %s389, %s403
      %p405 = scmp.eq.s32.totalorder %s40, 0
      %p406 = por %p404, %p405
      %s408 = sadd.s32 %s407, 1
      %p411 = scmp.eq.s32.totalorder %s34, 3
      %p412 = scmp.ne.s32.totalorder %s407, %s409
      %p413 = scmp.eq.s32.totalorder %s34, 0
      %p414 = por %p412, %p413
      %p415 = scmp.ne.s32.totalorder %s407, %s409
      %p416 = scmp.eq.s32.totalorder %s39, 3
      %p417 = por %p415, %p416
      %p418 = scmp.ne.s32.totalorder %s409, %s410
      %p419 = scmp.eq.s32.totalorder %s39, 0
      %p420 = por %p418, %p419
      %p421 = scmp.ne.s32.totalorder %s409, %s410
      %p422 = scmp.eq.s32.totalorder %s40, 3
      %p423 = por %p421, %p422
      %p425 = scmp.ne.s32.totalorder %s410, %s424
      %p426 = scmp.eq.s32.totalorder %s40, 0
      %p427 = por %p425, %p426
      %s429 = sadd.s32 %s428, 1
      %p432 = scmp.eq.s32.totalorder %s34, 3
      %p433 = scmp.ne.s32.totalorder %s428, %s430
      %p434 = scmp.eq.s32.totalorder %s34, 0
      %p435 = por %p433, %p434
      %p436 = scmp.ne.s32.totalorder %s428, %s430
      %p437 = scmp.eq.s32.totalorder %s39, 3
      %p438 = por %p436, %p437
      %p439 = scmp.ne.s32.totalorder %s430, %s431
      %p440 = scmp.eq.s32.totalorder %s39, 0
      %p441 = por %p439, %p440
      %p442 = scmp.ne.s32.totalorder %s430, %s431
      %p443 = scmp.eq.s32.totalorder %s40, 3
      %p444 = por %p442, %p443
      %p446 = scmp.ne.s32.totalorder %s431, %s445
      %p447 = scmp.eq.s32.totalorder %s40, 0
      %p448 = por %p446, %p447
      %s450 = sadd.s32 %s449, 1
      %p453 = scmp.eq.s32.totalorder %s34, 3
      %p454 = scmp.ne.s32.totalorder %s449, %s451
      %p455 = scmp.eq.s32.totalorder %s34, 0
      %p456 = por %p454, %p455
      %p457 = scmp.ne.s32.totalorder %s449, %s451
      %p458 = scmp.eq.s32.totalorder %s39, 3
      %p459 = por %p457, %p458
      %p460 = scmp.ne.s32.totalorder %s451, %s452
      %p461 = scmp.eq.s32.totalorder %s39, 0
      %p462 = por %p460, %p461
      %p463 = scmp.ne.s32.totalorder %s451, %s452
      %p464 = scmp.eq.s32.totalorder %s40, 3
      %p465 = por %p463, %p464
      %p467 = scmp.ne.s32.totalorder %s452, %s466
      %p468 = scmp.eq.s32.totalorder %s40, 0
      %p469 = por %p467, %p468
      %s470 = ssub.s32 %s41, %s53
      %s471 = ssub.s32 %s42, %s49
      %s472 = sor.u32 %s470, %s471
      %p473 = scmp.eq.s32.totalorder %s472, 0
      %s475 = sadd.s32 %s474, 1
      %s476 = scalar_select %p473, %s474, %s475
      %p479 = pneg %p473
      %p480 = scmp.eq.s32.totalorder %s34, 3
      %p481 = por %p479, %p480
      %p482 = scmp.ne.s32.totalorder %s474, %s477
      %p483 = scmp.eq.s32.totalorder %s34, 0
      %p484 = por %p482, %p483
      %p485 = scmp.ne.s32.totalorder %s474, %s477
      %p486 = scmp.eq.s32.totalorder %s39, 3
      %p487 = por %p485, %p486
      %p488 = scmp.ne.s32.totalorder %s477, %s478
      %p489 = scmp.eq.s32.totalorder %s39, 0
      %p490 = por %p488, %p489
      %p491 = scmp.ne.s32.totalorder %s477, %s478
      %p492 = scmp.eq.s32.totalorder %s40, 3
      %p493 = por %p491, %p492
      %p495 = scmp.ne.s32.totalorder %s478, %s494
      %p496 = scmp.eq.s32.totalorder %s40, 0
      %p497 = por %p495, %p496
      %p498 = scmp.le.s32.totalorder 1, %s34
      %p499 = scmp.lt.s32.totalorder %s34, 5
      %p500 = pnand %p498, %p499
      %p501 = pneg %p500
      // Predicated region
      $region9: #{tpu_custom_call.1} parent=5 // pred_check
        _
      $region10: #{tpu_custom_call.1} parent=5 // pred_check_branch
        %503 = sbr.rel (%p500) target = $region12
      $region11: #{tpu_custom_call.1} parent=5 // pred_region
        %s504 = ssub.s32 %s34, 1
        // Predicated region
        $region13: #{tpu_custom_call.1} parent=11 // pred_check
          %p505 = pneg %p72
        $region14: #{tpu_custom_call.1} parent=11 // pred_check_branch
          %507 = sbr.rel (%p505) target = $region16
        $region15: #{tpu_custom_call.1} parent=11 // pred_region
          %s509 = ssub.s32 256, 256
          %510 = vsyncadd [#allocation5], %s509
          %s511 = smul.addr %s43, 2
          %s512 = smul.addr %s511, 128
          %s513 = scalar_lea.hbm %s0, %s512
          %s514 = sshll.u32 [#allocation4], 4
          %s515 = int_to_ptr.vmem [resolvable:$true] %s514
          %520 = dma.hbm_to_vmem [thread:$0]  %s513, 256, %s515, [#allocation5], 128, 128, 8
        $region16: #{tpu_custom_call.1} parent=11 // pred_fallthru
          _
        // Predicated region
        $region17: #{tpu_custom_call.1} parent=11 // pred_check
          %p521 = pneg %p147
        $region18: #{tpu_custom_call.1} parent=11 // pred_check_branch
          %523 = sbr.rel (%p521) target = $region20
        $region19: #{tpu_custom_call.1} parent=11 // pred_region
          _
        $region20: #{tpu_custom_call.1} parent=11 // pred_fallthru
          _
        // Predicated region
        $region21: #{tpu_custom_call.1} parent=11 // pred_check
          %p524 = pneg %p168
        $region22: #{tpu_custom_call.1} parent=11 // pred_check_branch
          %526 = sbr.rel (%p524) target = $region24
        $region23: #{tpu_custom_call.1} parent=11 // pred_region
          _
        $region24: #{tpu_custom_call.1} parent=11 // pred_fallthru
          _
        // Predicated region
        $region25: #{tpu_custom_call.1} parent=11 // pred_check
          %p527 = pneg %p189
        $region26: #{tpu_custom_call.1} parent=11 // pred_check_branch
          %529 = sbr.rel (%p527) target = $region28
        $region27: #{tpu_custom_call.1} parent=11 // pred_region
          _
        $region28: #{tpu_custom_call.1} parent=11 // pred_fallthru
          _
        // Predicated region
        $region29: #{tpu_custom_call.1} parent=11 // pred_check
          %p530 = pneg %p210
        $region30: #{tpu_custom_call.1} parent=11 // pred_check_branch
          %532 = sbr.rel (%p530) target = $region32
        $region31: #{tpu_custom_call.1} parent=11 // pred_region
          _
        $region32: #{tpu_custom_call.1} parent=11 // pred_fallthru
          _
        // Predicated region
        $region33: #{tpu_custom_call.1} parent=11 // pred_check
          %p533 = pneg %p231
        $region34: #{tpu_custom_call.1} parent=11 // pred_check_branch
          %535 = sbr.rel (%p533) target = $region36
        $region35: #{tpu_custom_call.1} parent=11 // pred_region
          %s537 = ssub.s32 1024, 1024
          %538 = vsyncadd [#allocation11], %s537
          %s539 = sshll.u32 [#allocation10], 4
          %s540 = int_to_ptr.vmem [resolvable:$true] %s539
          %545 = dma.hbm_to_vmem [thread:$0]  %s7, 1024, %s540, [#allocation11], 64, 64, 4
        $region36: #{tpu_custom_call.1} parent=11 // pred_fallthru
          _
        // Predicated region
        $region37: #{tpu_custom_call.1} parent=11 // pred_check
          %p546 = pneg %p252
        $region38: #{tpu_custom_call.1} parent=11 // pred_check_branch
          %548 = sbr.rel (%p546) target = $region40
        $region39: #{tpu_custom_call.1} parent=11 // pred_region
          _
        $region40: #{tpu_custom_call.1} parent=11 // pred_fallthru
          _
        // Predicated region
        $region41: #{tpu_custom_call.1} parent=11 // pred_check
          %p549 = pneg %p273
        $region42: #{tpu_custom_call.1} parent=11 // pred_check_branch
          %551 = sbr.rel (%p549) target = $region44
        $region43: #{tpu_custom_call.1} parent=11 // pred_region
          %s553 = ssub.s32 1024, 1024
          %554 = vsyncadd [#allocation11], %s553
          %s555 = sshll.u32 [#allocation12], 4
          %s556 = int_to_ptr.vmem [resolvable:$true] %s555
          %561 = dma.hbm_to_vmem [thread:$0]  %s9, 1024, %s556, [#allocation11], 64, 64, 4
        $region44: #{tpu_custom_call.1} parent=11 // pred_fallthru
          _
        // Predicated region
        $region45: #{tpu_custom_call.1} parent=11 // pred_check
          %p562 = pneg %p294
        $region46: #{tpu_custom_call.1} parent=11 // pred_check_branch
          %564 = sbr.rel (%p562) target = $region48
        $region47: #{tpu_custom_call.1} parent=11 // pred_region
          _
        $region48: #{tpu_custom_call.1} parent=11 // pred_fallthru
          _
        // Predicated region
        $region49: #{tpu_custom_call.1} parent=11 // pred_check
          %p565 = pneg %p315
        $region50: #{tpu_custom_call.1} parent=11 // pred_check_branch
          %567 = sbr.rel (%p565) target = $region52
        $region51: #{tpu_custom_call.1} parent=11 // pred_region
          _
        $region52: #{tpu_custom_call.1} parent=11 // pred_fallthru
          _
        // Predicated region
        $region53: #{tpu_custom_call.1} parent=11 // pred_check
          %p568 = pneg %p336
        $region54: #{tpu_custom_call.1} parent=11 // pred_check_branch
          %570 = sbr.rel (%p568) target = $region56
        $region55: #{tpu_custom_call.1} parent=11 // pred_region
          _
        $region56: #{tpu_custom_call.1} parent=11 // pred_fallthru
          _
        // Predicated region
        $region57: #{tpu_custom_call.1} parent=11 // pred_check
          %p571 = pneg %p357
        $region58: #{tpu_custom_call.1} parent=11 // pred_check_branch
          %573 = sbr.rel (%p571) target = $region60
        $region59: #{tpu_custom_call.1} parent=11 // pred_region
          %s575 = ssub.s32 4096, 4096
          %576 = vsyncadd [#allocation14], %s575
          %s577 = sshll.u32 [#allocation13], 4
          %s578 = int_to_ptr.vmem [resolvable:$true] %s577
          %583 = dma.hbm_to_vmem [thread:$0]  %s13, 4096, %s578, [#allocation14], 256, 256, 16
        $region60: #{tpu_custom_call.1} parent=11 // pred_fallthru
          _
        // Predicated region
        $region61: #{tpu_custom_call.1} parent=11 // pred_check
          %p584 = pneg %p378
        $region62: #{tpu_custom_call.1} parent=11 // pred_check_branch
          %586 = sbr.rel (%p584) target = $region64
        $region63: #{tpu_custom_call.1} parent=11 // pred_region
          _
        $region64: #{tpu_custom_call.1} parent=11 // pred_fallthru
          _
        // Predicated region
        $region65: #{tpu_custom_call.1} parent=11 // pred_check
          %p587 = pneg %p399
        $region66: #{tpu_custom_call.1} parent=11 // pred_check_branch
          %589 = sbr.rel (%p587) target = $region68
        $region67: #{tpu_custom_call.1} parent=11 // pred_region
          %s591 = ssub.s32 4096, 4096
          %592 = vsyncadd [#allocation14], %s591
          %s593 = sshll.u32 [#allocation15], 4
          %s594 = int_to_ptr.vmem [resolvable:$true] %s593
          %599 = dma.hbm_to_vmem [thread:$0]  %s15, 4096, %s594, [#allocation14], 64, 64, 4
        $region68: #{tpu_custom_call.1} parent=11 // pred_fallthru
          _
        // Predicated region
        $region69: #{tpu_custom_call.1} parent=11 // pred_check
          %p600 = pneg %p420
        $region70: #{tpu_custom_call.1} parent=11 // pred_check_branch
          %602 = sbr.rel (%p600) target = $region72
        $region71: #{tpu_custom_call.1} parent=11 // pred_region
          _
        $region72: #{tpu_custom_call.1} parent=11 // pred_fallthru
          _
        // Predicated region
        $region73: #{tpu_custom_call.1} parent=11 // pred_check
          %p603 = pneg %p441
        $region74: #{tpu_custom_call.1} parent=11 // pred_check_branch
          %605 = sbr.rel (%p603) target = $region76
        $region75: #{tpu_custom_call.1} parent=11 // pred_region
          _
        $region76: #{tpu_custom_call.1} parent=11 // pred_fallthru
          _
        // Predicated region
        $region77: #{tpu_custom_call.1} parent=11 // pred_check
          %p606 = pneg %p462
        $region78: #{tpu_custom_call.1} parent=11 // pred_check_branch
          %608 = sbr.rel (%p606) target = $region80
        $region79: #{tpu_custom_call.1} parent=11 // pred_region
          _
        $region80: #{tpu_custom_call.1} parent=11 // pred_fallthru
          _
      $region12: #{tpu_custom_call.1} parent=5 // pred_fallthru
        _
      %p609 = scmp.lt.s32.totalorder %s34, 4
      // Predicated region
      $region81: #{tpu_custom_call.1} parent=5 // pred_check
        %p610 = pneg %p609
      $region82: #{tpu_custom_call.1} parent=5 // pred_check_branch
        %612 = sbr.rel (%p610) target = $region84
      $region83: #{tpu_custom_call.1} parent=5 // pred_region
        // Predicated region
        $region85: #{tpu_custom_call.1} parent=83 // pred_check
          %p613 = pneg %p94
        $region86: #{tpu_custom_call.1} parent=83 // pred_check_branch
          %615 = sbr.rel (%p613) target = $region88
        $region87: #{tpu_custom_call.1} parent=83 // pred_region
          %s616 = sand.u32 %s34, 1
          %s617 = scalar_lea.sflag [#allocation8], %s616
          %s618 = sand.u32 %s84, 1
          %s619 = smul.addr %s618, 8
          %s620 = scalar_lea.vmem [#allocation7], %s619
          %s622 = ssub.s32 128, 128
          %623 = vsyncadd %s617, %s622
          %s624 = smul.addr %s41, 2
          %s625 = sadd.s32 %s42, %s624
          %s626 = smul.addr %s625, 128
          %s627 = scalar_lea.hbm %s1, %s626
          %s629 = sshll.u32 %s620, 4
          %s630 = int_to_ptr.vmem [resolvable:$true] %s629
          %632 = dma.hbm_to_vmem [thread:$0]  %s627, 128, %s630, %s617
        $region88: #{tpu_custom_call.1} parent=83 // pred_fallthru
          _
        // Predicated region
        $region89: #{tpu_custom_call.1} parent=83 // pred_check
          %p633 = pneg %p120
        $region90: #{tpu_custom_call.1} parent=83 // pred_check_branch
          %635 = sbr.rel (%p633) target = $region92
        $region91: #{tpu_custom_call.1} parent=83 // pred_region
          %s636 = sand.u32 %s34, 1
          %s637 = scalar_lea.sflag [#allocation8], %s636
          %s638 = sand.u32 %s110, 1
          %s639 = scalar_lea.vmem [#allocation9], %s638
          %s641 = ssub.s32 16, 16
          %642 = vsyncadd %s637, %s641
          %s643 = smul.addr %s41, 16
          %s644 = scalar_lea.hbm %s2, %s643
          %s646 = sshll.u32 %s639, 4
          %s647 = int_to_ptr.vmem [resolvable:$true] %s646
          %649 = dma.hbm_to_vmem [thread:$0]  %s644, 16, %s647, %s637
        $region92: #{tpu_custom_call.1} parent=83 // pred_fallthru
          _
      $region84: #{tpu_custom_call.1} parent=5 // pred_fallthru
        _
      %p650 = scmp.le.s32.totalorder 1, %s34
      %p651 = scmp.lt.s32.totalorder %s34, 5
      %p652 = pnand %p650, %p651
      %p653 = pneg %p652
      // Predicated region
      $region93: #{tpu_custom_call.1} parent=5 // pred_check
        _
      $region94: #{tpu_custom_call.1} parent=5 // pred_check_branch
        %655 = sbr.rel (%p652) target = $region96
      $region95: #{tpu_custom_call.1} parent=5 // pred_region
        %s656 = ssub.s32 %s34, 1
        // Predicated region
        $region97: #{tpu_custom_call.1} parent=95 // pred_check
          %p657 = pneg %p72
        $region98: #{tpu_custom_call.1} parent=95 // pred_check_branch
          %659 = sbr.rel (%p657) target = $region100
        $region99: #{tpu_custom_call.1} parent=95 // pred_region
          %660 = dma.done [#allocation5], 256
        $region100: #{tpu_custom_call.1} parent=95 // pred_fallthru
          _
        %s661 = sand.u32 %s39, 1
        %s662 = scalar_lea.sflag [#allocation8], %s661
        %s663 = sand.u32 %s87, 1
        %s664 = smul.addr %s663, 8
        %s665 = scalar_lea.vmem [#allocation7], %s664
        // Predicated region
        $region101: #{tpu_custom_call.1} parent=95 // pred_check
          %p666 = pneg %p100
        $region102: #{tpu_custom_call.1} parent=95 // pred_check_branch
          %668 = sbr.rel (%p666) target = $region104
        $region103: #{tpu_custom_call.1} parent=95 // pred_region
          %669 = dma.done %s662, 128
        $region104: #{tpu_custom_call.1} parent=95 // pred_fallthru
          _
        %s670 = sand.u32 %s39, 1
        %s671 = scalar_lea.sflag [#allocation8], %s670
        %s672 = sand.u32 %s113, 1
        %s673 = scalar_lea.vmem [#allocation9], %s672
        // Predicated region
        $region105: #{tpu_custom_call.1} parent=95 // pred_check
          %p674 = pneg %p126
        $region106: #{tpu_custom_call.1} parent=95 // pred_check_branch
          %676 = sbr.rel (%p674) target = $region108
        $region107: #{tpu_custom_call.1} parent=95 // pred_region
          %677 = dma.done %s671, 16
        $region108: #{tpu_custom_call.1} parent=95 // pred_fallthru
          _
        // Predicated region
        $region109: #{tpu_custom_call.1} parent=95 // pred_check
          %p678 = pneg %p231
        $region110: #{tpu_custom_call.1} parent=95 // pred_check_branch
          %680 = sbr.rel (%p678) target = $region112
        $region111: #{tpu_custom_call.1} parent=95 // pred_region
          %681 = dma.done [#allocation11], 1024
        $region112: #{tpu_custom_call.1} parent=95 // pred_fallthru
          _
        // Predicated region
        $region113: #{tpu_custom_call.1} parent=95 // pred_check
          %p682 = pneg %p273
        $region114: #{tpu_custom_call.1} parent=95 // pred_check_branch
          %684 = sbr.rel (%p682) target = $region116
        $region115: #{tpu_custom_call.1} parent=95 // pred_region
          %685 = dma.done [#allocation11], 1024
        $region116: #{tpu_custom_call.1} parent=95 // pred_fallthru
          _
        // Predicated region
        $region117: #{tpu_custom_call.1} parent=95 // pred_check
          %p686 = pneg %p357
        $region118: #{tpu_custom_call.1} parent=95 // pred_check_branch
          %688 = sbr.rel (%p686) target = $region120
        $region119: #{tpu_custom_call.1} parent=95 // pred_region
          %689 = dma.done [#allocation14], 4096
        $region120: #{tpu_custom_call.1} parent=95 // pred_fallthru
          _
        // Predicated region
        $region121: #{tpu_custom_call.1} parent=95 // pred_check
          %p690 = pneg %p399
        $region122: #{tpu_custom_call.1} parent=95 // pred_check_branch
          %692 = sbr.rel (%p690) target = $region124
        $region123: #{tpu_custom_call.1} parent=95 // pred_region
          %693 = dma.done [#allocation14], 4096
        $region124: #{tpu_custom_call.1} parent=95 // pred_fallthru
          _
        %p694 = pneg %p72
        %p695 = pneg %p69
        %s696 = sand.u32 %s39, 1
        %s697 = scalar_lea.sflag [#allocation8], %s696
        %s698 = sand.u32 %s87, 1
        %s699 = smul.addr %s698, 8
        %s700 = scalar_lea.vmem [#allocation7], %s699
        %p701 = pneg %p100
        %p702 = pneg %p97
        %s703 = sand.u32 %s39, 1
        %s704 = scalar_lea.sflag [#allocation8], %s703
        %s705 = sand.u32 %s113, 1
        %s706 = scalar_lea.vmem [#allocation9], %s705
        %p707 = pneg %p126
        %p708 = pneg %p123
        %p709 = pneg %p147
        %p710 = pneg %p144
        %p711 = pneg %p168
        %p712 = pneg %p165
        %p713 = pneg %p189
        %p714 = pneg %p186
        %p715 = pneg %p210
        %p716 = pneg %p207
        %p717 = pneg %p231
        %p718 = pneg %p228
        %p719 = pneg %p252
        %p720 = pneg %p249
        %p721 = pneg %p273
        %p722 = pneg %p270
        %p723 = pneg %p294
        %p724 = pneg %p291
        %p725 = pneg %p315
        %p726 = pneg %p312
        %p727 = pneg %p336
        %p728 = pneg %p333
        %p729 = pneg %p357
        %p730 = pneg %p354
        %p731 = pneg %p378
        %p732 = pneg %p375
        %p733 = pneg %p399
        %p734 = pneg %p396
        %p735 = pneg %p420
        %p736 = pneg %p417
        %p737 = pneg %p441
        %p738 = pneg %p438
        %p739 = pneg %p462
        %p740 = pneg %p459
        %p741 = pneg %p490
        %p742 = pneg %p487
        %s743 = sand.u32 %s477, 1
        %s744 = scalar_lea.sflag [#allocation6], %s743
        %s745 = sand.u32 %s477, 1
        %s746 = smul.addr %s745, 8
        %s747 = scalar_lea.vmem [#allocation16], %s746
        %p749 = scmp.eq.s32.totalorder %s44, 0
        // Predicated region
        $region125: #{tpu_custom_call.1} parent=95 // pred_check
          %p750 = pneg %p749
        $region126: #{tpu_custom_call.1} parent=95 // pred_check_branch
          %752 = sbr.rel (%p750) target = $region128
        $region127: #{tpu_custom_call.1} parent=95 // pred_region
          %v753 = vld [vmem:[#allocation4] sm:$0xff]
          %v754 = vld [vmem:[#allocation4 + $0x8] sm:$0xff]
          %v755 = vpack.c.bf16 %v754, %v753
          %756 = vxpose.xlu0.b32.start [1/16] %v753, 128
          %757 = vxpose.xlu0.b32.cont [2/16] %v754, 128
          %758 = vxpose.xlu0.b32.cont [3/16] 0.0, 128
          %759 = vxpose.xlu0.b32.cont [4/16] 0.0, 128
          %760 = vxpose.xlu0.b32.cont [5/16] 0.0, 128
          %761 = vxpose.xlu0.b32.cont [6/16] 0.0, 128
          %762 = vxpose.xlu0.b32.cont [7/16] 0.0, 128
          %763 = vxpose.xlu0.b32.cont [8/16] 0.0, 128
          %764 = vxpose.xlu0.b32.cont [9/16] 0.0, 128
          %765 = vxpose.xlu0.b32.cont [10/16] 0.0, 128
          %766 = vxpose.xlu0.b32.cont [11/16] 0.0, 128
          %767 = vxpose.xlu0.b32.cont [12/16] 0.0, 128
          %768 = vxpose.xlu0.b32.cont [13/16] 0.0, 128
          %769 = vxpose.xlu0.b32.cont [14/16] 0.0, 128
          %770 = vxpose.xlu0.b32.cont [15/16] 0.0, 128
          %771 = vxpose.xlu0.b32.end [16/16] 0.0, 128
          %v772 = vpop.trf.xlu0
          %v773 = vpop.trf.xlu0
          %v774 = vpop.trf.xlu0
          %v775 = vpop.trf.xlu0
          %v776 = vpop.trf.xlu0
          %v777 = vpop.trf.xlu0
          %v778 = vpop.trf.xlu0
          %v779 = vpop.trf.xlu0
          %v780 = vpop.trf.xlu0
          %v781 = vpop.trf.xlu0
          %v782 = vpop.trf.xlu0
          %v783 = vpop.trf.xlu0
          %v784 = vpop.trf.xlu0
          %v785 = vpop.trf.xlu0
          %v786 = vpop.trf.xlu0
          %v787 = vpop.trf.xlu0
          %v788 = vpack.c.bf16 %v773, %v772
          %v789 = vpack.c.bf16 %v775, %v774
          %v790 = vpack.c.bf16 %v777, %v776
          %v791 = vpack.c.bf16 %v779, %v778
          %v792 = vpack.c.bf16 %v781, %v780
          %v793 = vpack.c.bf16 %v783, %v782
          %v794 = vpack.c.bf16 %v785, %v784
          %v795 = vpack.c.bf16 %v787, %v786
          %v796 = vld [vmem:[%s5] sm:$0xf]
          %v797 = vld [vmem:[%s5 + $0x4] sm:$0xf]
          %v798 = vld [vmem:[%s5 + $0x8] sm:$0xf]
          %v799 = vld [vmem:[%s5 + $0xc] sm:$0xf]
          %v800 = vld [vmem:[%s5 + $0x10] sm:$0xf]
          %v801 = vld [vmem:[%s5 + $0x14] sm:$0xf]
          %v802 = vld [vmem:[%s5 + $0x18] sm:$0xf]
          %v803 = vld [vmem:[%s5 + $0x1c] sm:$0xf]
          %v804 = vld [vmem:[%s5 + $0x20] sm:$0xf]
          %v805 = vld [vmem:[%s5 + $0x24] sm:$0xf]
          %v806 = vld [vmem:[%s5 + $0x28] sm:$0xf]
          %v807 = vld [vmem:[%s5 + $0x2c] sm:$0xf]
          %v808 = vld [vmem:[%s5 + $0x30] sm:$0xf]
          %v809 = vld [vmem:[%s5 + $0x34] sm:$0xf]
          %v810 = vld [vmem:[%s5 + $0x38] sm:$0xf]
          %v811 = vld [vmem:[%s5 + $0x3c] sm:$0xf]
          %v812 = vld [vmem:[%s6] sm:$0xff]
          %v813 = vld [vmem:[%s6 + $0x8] sm:$0xff]
          %v814 = vld [vmem:[%s6 + $0x10] sm:$0xff]
          %v815 = vld [vmem:[%s6 + $0x18] sm:$0xff]
          %v816 = vld [vmem:[%s6 + $0x20] sm:$0xff]
          %v817 = vld [vmem:[%s6 + $0x28] sm:$0xff]
          %v818 = vld [vmem:[%s6 + $0x30] sm:$0xff]
          %v819 = vld [vmem:[%s6 + $0x38] sm:$0xff]
          %v820 = vld [vmem:[%s6 + $0x40] sm:$0xff]
          %v821 = vld [vmem:[%s6 + $0x48] sm:$0xff]
          %v822 = vld [vmem:[%s6 + $0x50] sm:$0xff]
          %v823 = vld [vmem:[%s6 + $0x58] sm:$0xff]
          %v824 = vld [vmem:[%s6 + $0x60] sm:$0xff]
          %v825 = vld [vmem:[%s6 + $0x68] sm:$0xff]
          %v826 = vld [vmem:[%s6 + $0x70] sm:$0xff]
          %v827 = vld [vmem:[%s6 + $0x78] sm:$0xff]
          %829 = vset.pattern.permute.xlu0 0
          %830 = vperm.xlu0 %829, %v812
          %v831 = vpop.permute.xlu0 %830
          %834 = vset.pattern.permute.xlu0 0
          %835 = vperm.xlu0 %834, %v813
          %v836 = vpop.permute.xlu0 %835
          %839 = vset.pattern.permute.xlu0 0
          %840 = vperm.xlu0 %839, %v814
          %v841 = vpop.permute.xlu0 %840
          %844 = vset.pattern.permute.xlu0 0
          %845 = vperm.xlu0 %844, %v815
          %v846 = vpop.permute.xlu0 %845
          %849 = vset.pattern.permute.xlu0 0
          %850 = vperm.xlu0 %849, %v816
          %v851 = vpop.permute.xlu0 %850
          %854 = vset.pattern.permute.xlu0 0
          %855 = vperm.xlu0 %854, %v817
          %v856 = vpop.permute.xlu0 %855
          %859 = vset.pattern.permute.xlu0 0
          %860 = vperm.xlu0 %859, %v818
          %v861 = vpop.permute.xlu0 %860
          %864 = vset.pattern.permute.xlu0 0
          %865 = vperm.xlu0 %864, %v819
          %v866 = vpop.permute.xlu0 %865
          %869 = vset.pattern.permute.xlu0 0
          %870 = vperm.xlu0 %869, %v820
          %v871 = vpop.permute.xlu0 %870
          %874 = vset.pattern.permute.xlu0 0
          %875 = vperm.xlu0 %874, %v821
          %v876 = vpop.permute.xlu0 %875
          %879 = vset.pattern.permute.xlu0 0
          %880 = vperm.xlu0 %879, %v822
          %v881 = vpop.permute.xlu0 %880
          %884 = vset.pattern.permute.xlu0 0
          %885 = vperm.xlu0 %884, %v823
          %v886 = vpop.permute.xlu0 %885
          %889 = vset.pattern.permute.xlu0 0
          %890 = vperm.xlu0 %889, %v824
          %v891 = vpop.permute.xlu0 %890
          %894 = vset.pattern.permute.xlu0 0
          %895 = vperm.xlu0 %894, %v825
          %v896 = vpop.permute.xlu0 %895
          %899 = vset.pattern.permute.xlu0 0
          %900 = vperm.xlu0 %899, %v826
          %v901 = vpop.permute.xlu0 %900
          %904 = vset.pattern.permute.xlu0 0
          %905 = vperm.xlu0 %904, %v827
          %v906 = vpop.permute.xlu0 %905
          %v924 = vunpack.c.l.b16 %v796
          %v925 = vunpack.c.l.b16 %v797
          %v926 = vunpack.c.l.b16 %v798
          %v927 = vunpack.c.l.b16 %v799
          %v928 = vunpack.c.l.b16 %v800
          %v929 = vunpack.c.l.b16 %v801
          %v930 = vunpack.c.l.b16 %v802
          %v931 = vunpack.c.l.b16 %v803
          %v932 = vunpack.c.l.b16 %v804
          %v933 = vunpack.c.l.b16 %v805
          %v934 = vunpack.c.l.b16 %v806
          %v935 = vunpack.c.l.b16 %v807
          %v936 = vunpack.c.l.b16 %v808
          %v937 = vunpack.c.l.b16 %v809
          %v938 = vunpack.c.l.b16 %v810
          %v939 = vunpack.c.l.b16 %v811
          %v940 = vpack.c.b16 %v925, %v924
          %v941 = vpack.c.b16 %v927, %v926
          %v942 = vpack.c.b16 %v929, %v928
          %v943 = vpack.c.b16 %v931, %v930
          %v944 = vpack.c.b16 %v933, %v932
          %v945 = vpack.c.b16 %v935, %v934
          %v946 = vpack.c.b16 %v937, %v936
          %v947 = vpack.c.b16 %v939, %v938
          %956 = vmatprep.subr.bf16.mxu0 0
          %957 = vmatpush1.bf16.msra.mxu0 %v795
          %958 = vmatprep.subr.bf16.mxu0 0
          %959 = vmatpush1.bf16.msra.mxu0 %v794
          %960 = vmatprep.subr.bf16.mxu0 0
          %961 = vmatpush1.bf16.msra.mxu0 %v793
          %962 = vmatprep.subr.bf16.mxu0 0
          %963 = vmatpush1.bf16.msra.mxu0 %v792
          %964 = vmatprep.subr.bf16.mxu0 0
          %965 = vmatpush1.bf16.msra.mxu0 %v791
          %966 = vmatprep.subr.bf16.mxu0 0
          %967 = vmatpush1.bf16.msra.mxu0 %v790
          %968 = vmatprep.subr.bf16.mxu0 0
          %969 = vmatpush1.bf16.msra.mxu0 %v789
          %970 = vmatprep.subr.bf16.mxu0 0
          %971 = vmatpush1.bf16.msra.mxu0 %v788
          %972 = vmatprep.subr.bf16.mxu0 0
          %973 = vmatpush2.bf16.msra.mxu0 0
          %974 = vmatprep.subr.bf16.mxu0 0
          %975 = vmatpush2.bf16.msra.mxu0 0
          %976 = vmatprep.subr.bf16.mxu0 0
          %977 = vmatpush2.bf16.msra.mxu0 0
          %978 = vmatprep.subr.bf16.mxu0 0
          %979 = vmatpush2.bf16.msra.mxu0 0
          %980 = vmatprep.subr.bf16.mxu0 0
          %981 = vmatpush2.bf16.msra.mxu0 0
          %982 = vmatprep.subr.bf16.mxu0 0
          %983 = vmatpush2.bf16.msra.mxu0 0
          %984 = vmatprep.subr.bf16.mxu0 0
          %985 = vmatpush2.bf16.msra.mxu0 0
          %986 = vmatprep.subr.bf16.mxu0 0
          %987 = vmatpush2.bf16.msra.mxu0 0
          %988 = vmatprep.mubr.bf16.mxu0 0
          %989 = vmatmul.mubr.bf16.gmra.mxu0 %v940
          %v990 = vpop.f32.mrf.mxu0
          %v991 = vadd.f32 %v831, %v990
          %v992 = vpop.f32.mrf.mxu0
          %v993 = vpop.f32.mrf.mxu0
          %v994 = vadd.f32 %v836, %v993
          %v995 = vpop.f32.mrf.mxu0
          %996 = vmatprep.mubr.bf16.mxu0 0
          %997 = vmatmul.mubr.bf16.gmra.mxu0 %v941
          %v998 = vpop.f32.mrf.mxu0
          %v999 = vadd.f32 %v841, %v998
          %v1000 = vpop.f32.mrf.mxu0
          %v1001 = vpop.f32.mrf.mxu0
          %v1002 = vadd.f32 %v846, %v1001
          %v1003 = vpop.f32.mrf.mxu0
          %1004 = vmatprep.mubr.bf16.mxu0 0
          %1005 = vmatmul.mubr.bf16.gmra.mxu0 %v942
          %v1006 = vpop.f32.mrf.mxu0
          %v1007 = vadd.f32 %v851, %v1006
          %v1008 = vpop.f32.mrf.mxu0
          %v1009 = vpop.f32.mrf.mxu0
          %v1010 = vadd.f32 %v856, %v1009
          %v1011 = vpop.f32.mrf.mxu0
          %1012 = vmatprep.mubr.bf16.mxu0 0
          %1013 = vmatmul.mubr.bf16.gmra.mxu0 %v943
          %v1014 = vpop.f32.mrf.mxu0
          %v1015 = vadd.f32 %v861, %v1014
          %v1016 = vpop.f32.mrf.mxu0
          %v1017 = vpop.f32.mrf.mxu0
          %v1018 = vadd.f32 %v866, %v1017
          %v1019 = vpop.f32.mrf.mxu0
          %1020 = vmatprep.mubr.bf16.mxu0 0
          %1021 = vmatmul.mubr.bf16.gmra.mxu0 %v944
          %v1022 = vpop.f32.mrf.mxu0
          %v1023 = vadd.f32 %v871, %v1022
          %v1024 = vpop.f32.mrf.mxu0
          %v1025 = vpop.f32.mrf.mxu0
          %v1026 = vadd.f32 %v876, %v1025
          %v1027 = vpop.f32.mrf.mxu0
          %1028 = vmatprep.mubr.bf16.mxu0 0
          %1029 = vmatmul.mubr.bf16.gmra.mxu0 %v945
          %v1030 = vpop.f32.mrf.mxu0
          %v1031 = vadd.f32 %v881, %v1030
          %v1032 = vpop.f32.mrf.mxu0
          %v1033 = vpop.f32.mrf.mxu0
          %v1034 = vadd.f32 %v886, %v1033
          %v1035 = vpop.f32.mrf.mxu0
          %1036 = vmatprep.mubr.bf16.mxu0 0
          %1037 = vmatmul.mubr.bf16.gmra.mxu0 %v946
          %v1038 = vpop.f32.mrf.mxu0
          %v1039 = vadd.f32 %v891, %v1038
          %v1040 = vpop.f32.mrf.mxu0
          %v1041 = vpop.f32.mrf.mxu0
          %v1042 = vadd.f32 %v896, %v1041
          %v1043 = vpop.f32.mrf.mxu0
          %1044 = vmatprep.mubr.bf16.mxu0 0
          %1045 = vmatmul.mubr.bf16.gmra.mxu0 %v947
          %v1046 = vpop.f32.mrf.mxu0
          %v1047 = vadd.f32 %v901, %v1046
          %v1048 = vpop.f32.mrf.mxu0
          %v1049 = vpop.f32.mrf.mxu0
          %v1050 = vadd.f32 %v906, %v1049
          %v1051 = vpop.f32.mrf.mxu0
          %1052 = vdwg.mxu0
          %v1053 = vld [vmem:[#allocation10] sm:$0xf]
          %v1054 = vld [vmem:[#allocation10 + $0x4] sm:$0xf]
          %v1055 = vld [vmem:[#allocation10 + $0x8] sm:$0xf]
          %v1056 = vld [vmem:[#allocation10 + $0xc] sm:$0xf]
          %v1057 = vld [vmem:[#allocation10 + $0x10] sm:$0xf]
          %v1058 = vld [vmem:[#allocation10 + $0x14] sm:$0xf]
          %v1059 = vld [vmem:[#allocation10 + $0x18] sm:$0xf]
          %v1060 = vld [vmem:[#allocation10 + $0x1c] sm:$0xf]
          %v1061 = vld [vmem:[#allocation10 + $0x20] sm:$0xf]
          %v1062 = vld [vmem:[#allocation10 + $0x24] sm:$0xf]
          %v1063 = vld [vmem:[#allocation10 + $0x28] sm:$0xf]
          %v1064 = vld [vmem:[#allocation10 + $0x2c] sm:$0xf]
          %v1065 = vld [vmem:[#allocation10 + $0x30] sm:$0xf]
          %v1066 = vld [vmem:[#allocation10 + $0x34] sm:$0xf]
          %v1067 = vld [vmem:[#allocation10 + $0x38] sm:$0xf]
          %v1068 = vld [vmem:[#allocation10 + $0x3c] sm:$0xf]
          %v1069 = vld [vmem:[%s8] sm:$0x1]
          %v1071 = vlaneseq
          %v1072 = vshrl.u32 %v1071, 7
          %v1073 = vsub.s32 0, %v1072
          %v1074 = vrot.slane %v1069, %v1073
          %v1092 = vunpack.c.l.b16 %v1053
          %v1093 = vunpack.c.l.b16 %v1054
          %v1094 = vunpack.c.l.b16 %v1055
          %v1095 = vunpack.c.l.b16 %v1056
          %v1096 = vunpack.c.l.b16 %v1057
          %v1097 = vunpack.c.l.b16 %v1058
          %v1098 = vunpack.c.l.b16 %v1059
          %v1099 = vunpack.c.l.b16 %v1060
          %v1100 = vunpack.c.l.b16 %v1061
          %v1101 = vunpack.c.l.b16 %v1062
          %v1102 = vunpack.c.l.b16 %v1063
          %v1103 = vunpack.c.l.b16 %v1064
          %v1104 = vunpack.c.l.b16 %v1065
          %v1105 = vunpack.c.l.b16 %v1066
          %v1106 = vunpack.c.l.b16 %v1067
          %v1107 = vunpack.c.l.b16 %v1068
          %v1108 = vpack.c.b16 %v1093, %v1092
          %v1109 = vpack.c.b16 %v1095, %v1094
          %v1110 = vpack.c.b16 %v1097, %v1096
          %v1111 = vpack.c.b16 %v1099, %v1098
          %v1112 = vpack.c.b16 %v1101, %v1100
          %v1113 = vpack.c.b16 %v1103, %v1102
          %v1114 = vpack.c.b16 %v1105, %v1104
          %v1115 = vpack.c.b16 %v1107, %v1106
          %1124 = vmatprep.subr.bf16.mxu0 0
          %1125 = vmatpush1.bf16.msra.mxu0 %v1115
          %1126 = vmatprep.subr.bf16.mxu0 0
          %1127 = vmatpush1.bf16.msra.mxu0 %v1114
          %1128 = vmatprep.subr.bf16.mxu0 0
          %1129 = vmatpush1.bf16.msra.mxu0 %v1113
          %1130 = vmatprep.subr.bf16.mxu0 0
          %1131 = vmatpush1.bf16.msra.mxu0 %v1112
          %1132 = vmatprep.subr.bf16.mxu0 0
          %1133 = vmatpush1.bf16.msra.mxu0 %v1111
          %1134 = vmatprep.subr.bf16.mxu0 0
          %1135 = vmatpush1.bf16.msra.mxu0 %v1110
          %1136 = vmatprep.subr.bf16.mxu0 0
          %1137 = vmatpush1.bf16.msra.mxu0 %v1109
          %1138 = vmatprep.subr.bf16.mxu0 0
          %1139 = vmatpush1.bf16.msra.mxu0 %v1108
          %1140 = vmatprep.subr.bf16.mxu0 0
          %1141 = vmatpush2.bf16.msra.mxu0 0
          %1142 = vmatprep.subr.bf16.mxu0 0
          %1143 = vmatpush2.bf16.msra.mxu0 0
          %1144 = vmatprep.subr.bf16.mxu0 0
          %1145 = vmatpush2.bf16.msra.mxu0 0
          %1146 = vmatprep.subr.bf16.mxu0 0
          %1147 = vmatpush2.bf16.msra.mxu0 0
          %1148 = vmatprep.subr.bf16.mxu0 0
          %1149 = vmatpush2.bf16.msra.mxu0 0
          %1150 = vmatprep.subr.bf16.mxu0 0
          %1151 = vmatpush2.bf16.msra.mxu0 0
          %1152 = vmatprep.subr.bf16.mxu0 0
          %1153 = vmatpush2.bf16.msra.mxu0 0
          %1154 = vmatprep.subr.bf16.mxu0 0
          %1155 = vmatpush2.bf16.msra.mxu0 0
          %1156 = vmatprep.mubr.bf16.mxu0 0
          %1157 = vmatmul.mubr.bf16.gmra.mxu0 %v755
          %v1158 = vpop.f32.mrf.mxu0
          %v1159 = vadd.f32 %v1074, %v1158
          %v1160 = vpop.f32.mrf.mxu0
          %v1161 = vpop.f32.mrf.mxu0
          %v1162 = vadd.f32 %v1074, %v1161
          %v1163 = vpop.f32.mrf.mxu0
          %1164 = vdwg.mxu0
          %v1165 = vpack.c.bf16 %v994, %v991
          %v1166 = vpack.c.bf16 %v1002, %v999
          %v1169 = vunpack.c.l.b16 %v1165
          %v1170 = vunpack.c.h.b16 %v1165
          %v1171 = vunpack.c.l.b16 %v1166
          %v1172 = vunpack.c.h.b16 %v1166
          %v1173 = vpack.c.b16 %v1169, %v1169
          %v1174 = vpack.c.b16 %v1170, %v1170
          %v1175 = vpack.c.b16 %v1171, %v1171
          %v1176 = vpack.c.b16 %v1172, %v1172
          %vm1181 = vcmask 125952
          %1182 = vst.msk [vmem:[#allocation2] sm:$0xf] %vm1181, %v1173
          %1183 = vst.msk [vmem:[#allocation2 + $0x4] sm:$0xf] %vm1181, %v1174
          %1184 = vst.msk [vmem:[#allocation2 + $0x8] sm:$0xf] %vm1181, %v1175
          %1185 = vst.msk [vmem:[#allocation2 + $0xc] sm:$0xf] %vm1181, %v1176
          %v1186 = vpack.c.bf16 %v1162, %v1159
          %v1188 = vunpack.c.l.b16 %v1186
          %v1189 = vunpack.c.h.b16 %v1186
          %v1190 = vpack.c.b16 %v1188, %v1188
          %v1191 = vpack.c.b16 %v1189, %v1189
          %vm1194 = vcmask 257024
          %1195 = vst.msk [vmem:[#allocation3] sm:$0xf] %vm1194, %v1190
          %1196 = vst.msk [vmem:[#allocation3 + $0x4] sm:$0xf] %vm1194, %v1191
          %v1197 = vpack.c.bf16 %v1010, %v1007
          %v1198 = vpack.c.bf16 %v1018, %v1015
          %v1201 = vunpack.c.l.b16 %v1197
          %v1202 = vunpack.c.h.b16 %v1197
          %v1203 = vunpack.c.l.b16 %v1198
          %v1204 = vunpack.c.h.b16 %v1198
          %v1205 = vpack.c.b16 %v1201, %v1201
          %v1206 = vpack.c.b16 %v1202, %v1202
          %v1207 = vpack.c.b16 %v1203, %v1203
          %v1208 = vpack.c.b16 %v1204, %v1204
          %s1213 = scalar_lea.vmem [#allocation2], 16
          %1214 = vst.msk [vmem:[%s1213] sm:$0xf] %vm1181, %v1205
          %1215 = vst.msk [vmem:[%s1213 + $0x4] sm:$0xf] %vm1181, %v1206
          %1216 = vst.msk [vmem:[%s1213 + $0x8] sm:$0xf] %vm1181, %v1207
          %1217 = vst.msk [vmem:[%s1213 + $0xc] sm:$0xf] %vm1181, %v1208
          %1218 = vrot.lane.b32.xlu0 %v1190, 96
          %v1219 = vpop.permute.xlu0 %1218
          %1220 = vrot.lane.b32.xlu0 %v1191, 96
          %v1221 = vpop.permute.xlu0 %1220
          %s1224 = scalar_lea.vmem [#allocation3], 8
          %1225 = vst.msk [vmem:[%s1224] sm:$0xf] %vm1194, %v1219
          %1226 = vst.msk [vmem:[%s1224 + $0x4] sm:$0xf] %vm1194, %v1221
          %v1227 = vpack.c.bf16 %v1026, %v1023
          %v1228 = vpack.c.bf16 %v1034, %v1031
          %v1231 = vunpack.c.l.b16 %v1227
          %v1232 = vunpack.c.h.b16 %v1227
          %v1233 = vunpack.c.l.b16 %v1228
          %v1234 = vunpack.c.h.b16 %v1228
          %v1235 = vpack.c.b16 %v1231, %v1231
          %v1236 = vpack.c.b16 %v1232, %v1232
          %v1237 = vpack.c.b16 %v1233, %v1233
          %v1238 = vpack.c.b16 %v1234, %v1234
          %s1243 = scalar_lea.vmem [#allocation2], 32
          %1244 = vst.msk [vmem:[%s1243] sm:$0xf] %vm1181, %v1235
          %1245 = vst.msk [vmem:[%s1243 + $0x4] sm:$0xf] %vm1181, %v1236
          %1246 = vst.msk [vmem:[%s1243 + $0x8] sm:$0xf] %vm1181, %v1237
          %1247 = vst.msk [vmem:[%s1243 + $0xc] sm:$0xf] %vm1181, %v1238
          %1248 = vrot.lane.b32.xlu0 %v1190, 64
          %v1249 = vpop.permute.xlu0 %1248
          %1250 = vrot.lane.b32.xlu0 %v1191, 64
          %v1251 = vpop.permute.xlu0 %1250
          %s1254 = scalar_lea.vmem [#allocation3], 16
          %1255 = vst.msk [vmem:[%s1254] sm:$0xf] %vm1194, %v1249
          %1256 = vst.msk [vmem:[%s1254 + $0x4] sm:$0xf] %vm1194, %v1251
          %v1257 = vpack.c.bf16 %v1042, %v1039
          %v1258 = vpack.c.bf16 %v1050, %v1047
          %v1261 = vunpack.c.l.b16 %v1257
          %v1262 = vunpack.c.h.b16 %v1257
          %v1263 = vunpack.c.l.b16 %v1258
          %v1264 = vunpack.c.h.b16 %v1258
          %v1265 = vpack.c.b16 %v1261, %v1261
          %v1266 = vpack.c.b16 %v1262, %v1262
          %v1267 = vpack.c.b16 %v1263, %v1263
          %v1268 = vpack.c.b16 %v1264, %v1264
          %s1273 = scalar_lea.vmem [#allocation2], 48
          %1274 = vst.msk [vmem:[%s1273] sm:$0xf] %vm1181, %v1265
          %1275 = vst.msk [vmem:[%s1273 + $0x4] sm:$0xf] %vm1181, %v1266
          %1276 = vst.msk [vmem:[%s1273 + $0x8] sm:$0xf] %vm1181, %v1267
          %1277 = vst.msk [vmem:[%s1273 + $0xc] sm:$0xf] %vm1181, %v1268
          %1278 = vrot.lane.b32.xlu0 %v1190, 32
          %v1279 = vpop.permute.xlu0 %1278
          %1280 = vrot.lane.b32.xlu0 %v1191, 32
          %v1281 = vpop.permute.xlu0 %1280
          %s1284 = scalar_lea.vmem [#allocation3], 24
          %1285 = vst.msk [vmem:[%s1284] sm:$0xf] %vm1194, %v1279
          %1286 = vst.msk [vmem:[%s1284 + $0x4] sm:$0xf] %vm1194, %v1281
        $region128: #{tpu_custom_call.1} parent=95 // pred_fallthru
          _
        %v1287 = vld [vmem:[%s665] sm:$0xff]
        %v1288 = vpack.c.bf16 %v1287, %v1287
        %v1289 = vld [vmem:[%s673] sm:$0x1]
        %v1290 = vld [vmem:[%s3] sm:$0xf]
        %v1291 = vld [vmem:[%s3 + $0x4] sm:$0xf]
        %v1292 = vld [vmem:[%s3 + $0x8] sm:$0xf]
        %v1293 = vld [vmem:[%s3 + $0xc] sm:$0xf]
        %v1294 = vld [vmem:[%s3 + $0x10] sm:$0xf]
        %v1295 = vld [vmem:[%s3 + $0x14] sm:$0xf]
        %v1296 = vld [vmem:[%s3 + $0x18] sm:$0xf]
        %v1297 = vld [vmem:[%s3 + $0x1c] sm:$0xf]
        %v1298 = vld [vmem:[%s3 + $0x20] sm:$0xf]
        %v1299 = vld [vmem:[%s3 + $0x24] sm:$0xf]
        %v1300 = vld [vmem:[%s3 + $0x28] sm:$0xf]
        %v1301 = vld [vmem:[%s3 + $0x2c] sm:$0xf]
        %v1302 = vld [vmem:[%s3 + $0x30] sm:$0xf]
        %v1303 = vld [vmem:[%s3 + $0x34] sm:$0xf]
        %v1304 = vld [vmem:[%s3 + $0x38] sm:$0xf]
        %v1305 = vld [vmem:[%s3 + $0x3c] sm:$0xf]
        %v1306 = vld [vmem:[%s4] sm:$0x1]
        %v1308 = vlaneseq
        %v1309 = vshrl.u32 %v1308, 7
        %v1310 = vsub.s32 0, %v1309
        %v1311 = vrot.slane %v1306, %v1310
        %v1329 = vunpack.c.l.b16 %v1290
        %v1330 = vunpack.c.l.b16 %v1291
        %v1331 = vunpack.c.l.b16 %v1292
        %v1332 = vunpack.c.l.b16 %v1293
        %v1333 = vunpack.c.l.b16 %v1294
        %v1334 = vunpack.c.l.b16 %v1295
        %v1335 = vunpack.c.l.b16 %v1296
        %v1336 = vunpack.c.l.b16 %v1297
        %v1337 = vunpack.c.l.b16 %v1298
        %v1338 = vunpack.c.l.b16 %v1299
        %v1339 = vunpack.c.l.b16 %v1300
        %v1340 = vunpack.c.l.b16 %v1301
        %v1341 = vunpack.c.l.b16 %v1302
        %v1342 = vunpack.c.l.b16 %v1303
        %v1343 = vunpack.c.l.b16 %v1304
        %v1344 = vunpack.c.l.b16 %v1305
        %v1345 = vpack.c.b16 %v1330, %v1329
        %v1346 = vpack.c.b16 %v1332, %v1331
        %v1347 = vpack.c.b16 %v1334, %v1333
        %v1348 = vpack.c.b16 %v1336, %v1335
        %v1349 = vpack.c.b16 %v1338, %v1337
        %v1350 = vpack.c.b16 %v1340, %v1339
        %v1351 = vpack.c.b16 %v1342, %v1341
        %v1352 = vpack.c.b16 %v1344, %v1343
        %1361 = vmatprep.subr.bf16.mxu0 0
        %1362 = vmatpush1.bf16.msra.mxu0 %v1352
        %1363 = vmatprep.subr.bf16.mxu0 0
        %1364 = vmatpush1.bf16.msra.mxu0 %v1351
        %1365 = vmatprep.subr.bf16.mxu0 0
        %1366 = vmatpush1.bf16.msra.mxu0 %v1350
        %1367 = vmatprep.subr.bf16.mxu0 0
        %1368 = vmatpush1.bf16.msra.mxu0 %v1349
        %1369 = vmatprep.subr.bf16.mxu0 0
        %1370 = vmatpush1.bf16.msra.mxu0 %v1348
        %1371 = vmatprep.subr.bf16.mxu0 0
        %1372 = vmatpush1.bf16.msra.mxu0 %v1347
        %1373 = vmatprep.subr.bf16.mxu0 0
        %1374 = vmatpush1.bf16.msra.mxu0 %v1346
        %1375 = vmatprep.subr.bf16.mxu0 0
        %1376 = vmatpush1.bf16.msra.mxu0 %v1345
        %1377 = vmatprep.subr.bf16.mxu0 0
        %1378 = vmatpush2.bf16.msra.mxu0 0
        %1379 = vmatprep.subr.bf16.mxu0 0
        %1380 = vmatpush2.bf16.msra.mxu0 0
        %1381 = vmatprep.subr.bf16.mxu0 0
        %1382 = vmatpush2.bf16.msra.mxu0 0
        %1383 = vmatprep.subr.bf16.mxu0 0
        %1384 = vmatpush2.bf16.msra.mxu0 0
        %1385 = vmatprep.subr.bf16.mxu0 0
        %1386 = vmatpush2.bf16.msra.mxu0 0
        %1387 = vmatprep.subr.bf16.mxu0 0
        %1388 = vmatpush2.bf16.msra.mxu0 0
        %1389 = vmatprep.subr.bf16.mxu0 0
        %1390 = vmatpush2.bf16.msra.mxu0 0
        %1391 = vmatprep.subr.bf16.mxu0 0
        %1392 = vmatpush2.bf16.msra.mxu0 0
        %1393 = vmatprep.mubr.bf16.mxu0 0
        %1394 = vmatmul.mubr.bf16.gmra.mxu0 %v1288
        %v1395 = vpop.f32.mrf.mxu0
        %v1396 = vadd.f32 %v1311, %v1395
        %v1397 = vpop.f32.mrf.mxu0
        %v1398 = vpop.f32.mrf.mxu0
        %v1399 = vpop.f32.mrf.mxu0
        %1400 = vdwg.mxu0
        %v1401 = vpack.c.bf16 %v1396, %v1396
        %v1402 = vld [vmem:[#allocation2] sm:$0xf]
        %v1403 = vld [vmem:[#allocation2 + $0x4] sm:$0xf]
        %v1404 = vld [vmem:[#allocation2 + $0x8] sm:$0xf]
        %v1405 = vld [vmem:[#allocation2 + $0xc] sm:$0xf]
        %v1407 = vlaneseq
        %v1408 = vshrl.u32 %v1407, 7
        %v1409 = vsub.s32 0, %v1408
        %v1410 = vrot.slane %v1289, %v1409
        %v1416 = vunpack.c.l.b16 %v1402
        %v1417 = vunpack.c.l.b16 %v1403
        %v1418 = vunpack.c.l.b16 %v1404
        %v1419 = vunpack.c.l.b16 %v1405
        %v1420 = vpack.c.b16 %v1417, %v1416
        %v1421 = vpack.c.b16 %v1419, %v1418
        %vm1424 = vcmask 261120
        %v1426 = vsel %vm1424, %v1401, 0
        %1428 = vmatprep.subr.bf16.mxu0 0
        %1429 = vmatpush1.bf16.msra.mxu0 0
        %1430 = vmatprep.subr.bf16.mxu0 0
        %1431 = vmatpush1.bf16.msra.mxu0 0
        %1432 = vmatprep.subr.bf16.mxu0 0
        %1433 = vmatpush1.bf16.msra.mxu0 0
        %1434 = vmatprep.subr.bf16.mxu0 0
        %1435 = vmatpush1.bf16.msra.mxu0 0
        %1436 = vmatprep.subr.bf16.mxu0 0
        %1437 = vmatpush1.bf16.msra.mxu0 0
        %1438 = vmatprep.subr.bf16.mxu0 0
        %1439 = vmatpush1.bf16.msra.mxu0 0
        %1440 = vmatprep.subr.bf16.mxu0 0
        %1441 = vmatpush1.bf16.msra.mxu0 %v1421
        %1442 = vmatprep.subr.bf16.mxu0 0
        %1443 = vmatpush1.bf16.msra.mxu0 %v1420
        %1444 = vmatprep.subr.bf16.mxu0 0
        %1445 = vmatpush2.bf16.msra.mxu0 0
        %1446 = vmatprep.subr.bf16.mxu0 0
        %1447 = vmatpush2.bf16.msra.mxu0 0
        %1448 = vmatprep.subr.bf16.mxu0 0
        %1449 = vmatpush2.bf16.msra.mxu0 0
        %1450 = vmatprep.subr.bf16.mxu0 0
        %1451 = vmatpush2.bf16.msra.mxu0 0
        %1452 = vmatprep.subr.bf16.mxu0 0
        %1453 = vmatpush2.bf16.msra.mxu0 0
        %1454 = vmatprep.subr.bf16.mxu0 0
        %1455 = vmatpush2.bf16.msra.mxu0 0
        %1456 = vmatprep.subr.bf16.mxu0 0
        %1457 = vmatpush2.bf16.msra.mxu0 0
        %1458 = vmatprep.subr.bf16.mxu0 0
        %1459 = vmatpush2.bf16.msra.mxu0 0
        %1460 = vmatprep.mubr.bf16.mxu0 0
        %1461 = vmatmul.mubr.bf16.gmra.mxu0 %v1426
        %v1462 = vpop.f32.mrf.mxu0
        %v1463 = vadd.f32 %v1410, %v1462
        %v1464 = vpop.f32.mrf.mxu0
        %v1465 = vpop.f32.mrf.mxu0
        %v1466 = vpop.f32.mrf.mxu0
        %1467 = vdwg.mxu0
        %vm1468 = vcmask 130048
        %v1469 = vsel %vm1468, %v1463, -inf
        %1470 = vmax.xlane.f32.xlu0 %v1469
        %v1471 = vpop.xlane.xlu0 %1470
        %v1472 = vsub.f32 %v1463, %v1471
        %v1473 = vmul.f32 %v1472, 1.442695
        %v1474 = vpow.pop %v1473
        %v1475 = vsel %vm1468, %v1474, 0.0
        %1476 = vadd.xlane.f32.xlu0 %v1475
        %v1477 = vpop.xlane.xlu0 %1476
        %v1478 = vrcp.pop %v1477
        %v1479 = vmul.f32 %v1474, %v1478
        %v1480 = vpack.c.bf16 %v1479, %v1479
        %v1481 = vld [vmem:[#allocation3] sm:$0xf]
        %v1482 = vld [vmem:[#allocation3 + $0x4] sm:$0xf]
        %v1485 = vunpack.c.l.b16 %v1481
        %v1486 = vunpack.c.l.b16 %v1482
        %v1487 = vpack.c.b16 %v1486, %v1485
        %v1490 = vsel %vm1468, %v1480, 0
        %1492 = vmatprep.subr.bf16.mxu0 0
        %1493 = vmatpush1.bf16.msra.mxu0 0
        %1494 = vmatprep.subr.bf16.mxu0 0
        %1495 = vmatpush1.bf16.msra.mxu0 0
        %1496 = vmatprep.subr.bf16.mxu0 0
        %1497 = vmatpush1.bf16.msra.mxu0 0
        %1498 = vmatprep.subr.bf16.mxu0 0
        %1499 = vmatpush1.bf16.msra.mxu0 0
        %1500 = vmatprep.subr.bf16.mxu0 0
        %1501 = vmatpush1.bf16.msra.mxu0 0
        %1502 = vmatprep.subr.bf16.mxu0 0
        %1503 = vmatpush1.bf16.msra.mxu0 0
        %1504 = vmatprep.subr.bf16.mxu0 0
        %1505 = vmatpush1.bf16.msra.mxu0 0
        %1506 = vmatprep.subr.bf16.mxu0 0
        %1507 = vmatpush1.bf16.msra.mxu0 %v1487
        %1508 = vmatprep.subr.bf16.mxu0 0
        %1509 = vmatpush2.bf16.msra.mxu0 0
        %1510 = vmatprep.subr.bf16.mxu0 0
        %1511 = vmatpush2.bf16.msra.mxu0 0
        %1512 = vmatprep.subr.bf16.mxu0 0
        %1513 = vmatpush2.bf16.msra.mxu0 0
        %1514 = vmatprep.subr.bf16.mxu0 0
        %1515 = vmatpush2.bf16.msra.mxu0 0
        %1516 = vmatprep.subr.bf16.mxu0 0
        %1517 = vmatpush2.bf16.msra.mxu0 0
        %1518 = vmatprep.subr.bf16.mxu0 0
        %1519 = vmatpush2.bf16.msra.mxu0 0
        %1520 = vmatprep.subr.bf16.mxu0 0
        %1521 = vmatpush2.bf16.msra.mxu0 0
        %1522 = vmatprep.subr.bf16.mxu0 0
        %1523 = vmatpush2.bf16.msra.mxu0 0
        %1524 = vmatprep.mubr.bf16.mxu0 0
        %1525 = vmatmul.mubr.bf16.gmra.mxu0 %v1490
        %v1526 = vpop.f32.mrf.mxu0
        %v1527 = vadd.f32 0.0, %v1526
        %v1528 = vpop.f32.mrf.mxu0
        %v1529 = vpop.f32.mrf.mxu0
        %v1530 = vpop.f32.mrf.mxu0
        %1531 = vdwg.mxu0
        %v1532 = vpack.c.bf16 %v1527, %v1527
        %v1533 = vld [vmem:[#allocation12] sm:$0xf]
        %v1534 = vld [vmem:[#allocation12 + $0x4] sm:$0xf]
        %v1535 = vld [vmem:[#allocation12 + $0x8] sm:$0xf]
        %v1536 = vld [vmem:[#allocation12 + $0xc] sm:$0xf]
        %s1537 = scalar_lea.vmem [#allocation2], 16
        %v1538 = vld [vmem:[%s1537] sm:$0xf]
        %v1539 = vld [vmem:[%s1537 + $0x4] sm:$0xf]
        %v1540 = vld [vmem:[%s1537 + $0x8] sm:$0xf]
        %v1541 = vld [vmem:[%s1537 + $0xc] sm:$0xf]
        %1543 = vrot.lane.b32.xlu0 %v1401, 96
        %v1544 = vpop.permute.xlu0 %1543
        %v1549 = vunpack.c.l.b16 %v1538
        %v1550 = vunpack.c.l.b16 %v1539
        %v1551 = vunpack.c.l.b16 %v1540
        %v1552 = vunpack.c.l.b16 %v1541
        %v1553 = vpack.c.b16 %v1550, %v1549
        %v1554 = vpack.c.b16 %v1552, %v1551
        %v1558 = vsel %vm1424, %v1544, 0
        %1560 = vmatprep.subr.bf16.mxu0 0
        %1561 = vmatpush1.bf16.msra.mxu0 0
        %1562 = vmatprep.subr.bf16.mxu0 0
        %1563 = vmatpush1.bf16.msra.mxu0 0
        %1564 = vmatprep.subr.bf16.mxu0 0
        %1565 = vmatpush1.bf16.msra.mxu0 0
        %1566 = vmatprep.subr.bf16.mxu0 0
        %1567 = vmatpush1.bf16.msra.mxu0 0
        %1568 = vmatprep.subr.bf16.mxu0 0
        %1569 = vmatpush1.bf16.msra.mxu0 0
        %1570 = vmatprep.subr.bf16.mxu0 0
        %1571 = vmatpush1.bf16.msra.mxu0 0
        %1572 = vmatprep.subr.bf16.mxu0 0
        %1573 = vmatpush1.bf16.msra.mxu0 %v1554
        %1574 = vmatprep.subr.bf16.mxu0 0
        %1575 = vmatpush1.bf16.msra.mxu0 %v1553
        %1576 = vmatprep.subr.bf16.mxu0 0
        %1577 = vmatpush2.bf16.msra.mxu0 0
        %1578 = vmatprep.subr.bf16.mxu0 0
        %1579 = vmatpush2.bf16.msra.mxu0 0
        %1580 = vmatprep.subr.bf16.mxu0 0
        %1581 = vmatpush2.bf16.msra.mxu0 0
        %1582 = vmatprep.subr.bf16.mxu0 0
        %1583 = vmatpush2.bf16.msra.mxu0 0
        %1584 = vmatprep.subr.bf16.mxu0 0
        %1585 = vmatpush2.bf16.msra.mxu0 0
        %1586 = vmatprep.subr.bf16.mxu0 0
        %1587 = vmatpush2.bf16.msra.mxu0 0
        %1588 = vmatprep.subr.bf16.mxu0 0
        %1589 = vmatpush2.bf16.msra.mxu0 0
        %1590 = vmatprep.subr.bf16.mxu0 0
        %1591 = vmatpush2.bf16.msra.mxu0 0
        %1592 = vmatprep.mubr.bf16.mxu0 0
        %1593 = vmatmul.mubr.bf16.gmra.mxu0 %v1558
        %v1594 = vpop.f32.mrf.mxu0
        %v1595 = vadd.f32 %v1410, %v1594
        %v1596 = vpop.f32.mrf.mxu0
        %v1597 = vpop.f32.mrf.mxu0
        %v1598 = vpop.f32.mrf.mxu0
        %1599 = vdwg.mxu0
        %v1600 = vsel %vm1468, %v1595, -inf
        %1601 = vmax.xlane.f32.xlu0 %v1600
        %v1602 = vpop.xlane.xlu0 %1601
        %v1603 = vsub.f32 %v1595, %v1602
        %v1604 = vmul.f32 %v1603, 1.442695
        %v1605 = vpow.pop %v1604
        %v1606 = vsel %vm1468, %v1605, 0.0
        %1607 = vadd.xlane.f32.xlu0 %v1606
        %v1608 = vpop.xlane.xlu0 %1607
        %v1609 = vrcp.pop %v1608
        %v1610 = vmul.f32 %v1605, %v1609
        %v1611 = vpack.c.bf16 %v1610, %v1610
        %s1612 = scalar_lea.vmem [#allocation3], 8
        %v1613 = vld [vmem:[%s1612] sm:$0xf]
        %v1614 = vld [vmem:[%s1612 + $0x4] sm:$0xf]
        %v1617 = vunpack.c.l.b16 %v1613
        %v1618 = vunpack.c.l.b16 %v1614
        %v1619 = vpack.c.b16 %v1618, %v1617
        %v1622 = vsel %vm1468, %v1611, 0
        %1624 = vmatprep.subr.bf16.mxu0 0
        %1625 = vmatpush1.bf16.msra.mxu0 0
        %1626 = vmatprep.subr.bf16.mxu0 0
        %1627 = vmatpush1.bf16.msra.mxu0 0
        %1628 = vmatprep.subr.bf16.mxu0 0
        %1629 = vmatpush1.bf16.msra.mxu0 0
        %1630 = vmatprep.subr.bf16.mxu0 0
        %1631 = vmatpush1.bf16.msra.mxu0 0
        %1632 = vmatprep.subr.bf16.mxu0 0
        %1633 = vmatpush1.bf16.msra.mxu0 0
        %1634 = vmatprep.subr.bf16.mxu0 0
        %1635 = vmatpush1.bf16.msra.mxu0 0
        %1636 = vmatprep.subr.bf16.mxu0 0
        %1637 = vmatpush1.bf16.msra.mxu0 0
        %1638 = vmatprep.subr.bf16.mxu0 0
        %1639 = vmatpush1.bf16.msra.mxu0 %v1619
        %1640 = vmatprep.subr.bf16.mxu0 0
        %1641 = vmatpush2.bf16.msra.mxu0 0
        %1642 = vmatprep.subr.bf16.mxu0 0
        %1643 = vmatpush2.bf16.msra.mxu0 0
        %1644 = vmatprep.subr.bf16.mxu0 0
        %1645 = vmatpush2.bf16.msra.mxu0 0
        %1646 = vmatprep.subr.bf16.mxu0 0
        %1647 = vmatpush2.bf16.msra.mxu0 0
        %1648 = vmatprep.subr.bf16.mxu0 0
        %1649 = vmatpush2.bf16.msra.mxu0 0
        %1650 = vmatprep.subr.bf16.mxu0 0
        %1651 = vmatpush2.bf16.msra.mxu0 0
        %1652 = vmatprep.subr.bf16.mxu0 0
        %1653 = vmatpush2.bf16.msra.mxu0 0
        %1654 = vmatprep.subr.bf16.mxu0 0
        %1655 = vmatpush2.bf16.msra.mxu0 0
        %1656 = vmatprep.mubr.bf16.mxu0 0
        %1657 = vmatmul.mubr.bf16.gmra.mxu0 %v1622
        %v1658 = vpop.f32.mrf.mxu0
        %v1659 = vadd.f32 0.0, %v1658
        %v1660 = vpop.f32.mrf.mxu0
        %v1661 = vpop.f32.mrf.mxu0
        %v1662 = vpop.f32.mrf.mxu0
        %1663 = vdwg.mxu0
        %v1664 = vpack.c.bf16 %v1659, %v1659
        %v1665 = vld [vmem:[#allocation12 + $0x10] sm:$0xf]
        %v1666 = vld [vmem:[#allocation12 + $0x14] sm:$0xf]
        %v1667 = vld [vmem:[#allocation12 + $0x18] sm:$0xf]
        %v1668 = vld [vmem:[#allocation12 + $0x1c] sm:$0xf]
        %v1673 = vunpack.c.l.b16 %v1665
        %v1674 = vunpack.c.l.b16 %v1666
        %v1675 = vunpack.c.l.b16 %v1667
        %v1676 = vunpack.c.l.b16 %v1668
        %v1677 = vpack.c.b16 %v1674, %v1673
        %v1678 = vpack.c.b16 %v1676, %v1675
        %v1682 = vsel %vm1424, %v1664, 0
        %1684 = vmatprep.subr.bf16.mxu0 0
        %1685 = vmatpush1.bf16.msra.mxu0 0
        %1686 = vmatprep.subr.bf16.mxu0 0
        %1687 = vmatpush1.bf16.msra.mxu0 0
        %1688 = vmatprep.subr.bf16.mxu0 0
        %1689 = vmatpush1.bf16.msra.mxu0 0
        %1690 = vmatprep.subr.bf16.mxu0 0
        %1691 = vmatpush1.bf16.msra.mxu0 0
        %1692 = vmatprep.subr.bf16.mxu0 0
        %1693 = vmatpush1.bf16.msra.mxu0 0
        %1694 = vmatprep.subr.bf16.mxu0 0
        %1695 = vmatpush1.bf16.msra.mxu0 0
        %1696 = vmatprep.subr.bf16.mxu0 0
        %1697 = vmatpush1.bf16.msra.mxu0 %v1678
        %1698 = vmatprep.subr.bf16.mxu0 0
        %1699 = vmatpush1.bf16.msra.mxu0 %v1677
        %1700 = vmatprep.subr.bf16.mxu0 0
        %1701 = vmatpush2.bf16.msra.mxu0 0
        %1702 = vmatprep.subr.bf16.mxu0 0
        %1703 = vmatpush2.bf16.msra.mxu0 0
        %1704 = vmatprep.subr.bf16.mxu0 0
        %1705 = vmatpush2.bf16.msra.mxu0 0
        %1706 = vmatprep.subr.bf16.mxu0 0
        %1707 = vmatpush2.bf16.msra.mxu0 0
        %1708 = vmatprep.subr.bf16.mxu0 0
        %1709 = vmatpush2.bf16.msra.mxu0 0
        %1710 = vmatprep.subr.bf16.mxu0 0
        %1711 = vmatpush2.bf16.msra.mxu0 0
        %1712 = vmatprep.subr.bf16.mxu0 0
        %1713 = vmatpush2.bf16.msra.mxu0 0
        %1714 = vmatprep.subr.bf16.mxu0 0
        %1715 = vmatpush2.bf16.msra.mxu0 0
        %1716 = vmatprep.mubr.bf16.mxu0 0
        %1717 = vmatmul.mubr.bf16.gmra.mxu0 %v1682
        %v1718 = vpop.f32.mrf.mxu0
        %v1719 = vadd.f32 0.0, %v1718
        %v1720 = vpop.f32.mrf.mxu0
        %v1721 = vpop.f32.mrf.mxu0
        %v1722 = vpop.f32.mrf.mxu0
        %1723 = vdwg.mxu0
        %v1728 = vunpack.c.l.b16 %v1533
        %v1729 = vunpack.c.l.b16 %v1534
        %v1730 = vunpack.c.l.b16 %v1535
        %v1731 = vunpack.c.l.b16 %v1536
        %v1732 = vpack.c.b16 %v1729, %v1728
        %v1733 = vpack.c.b16 %v1731, %v1730
        %v1737 = vsel %vm1424, %v1532, 0
        %1739 = vmatprep.subr.bf16.mxu0 0
        %1740 = vmatpush1.bf16.msra.mxu0 0
        %1741 = vmatprep.subr.bf16.mxu0 0
        %1742 = vmatpush1.bf16.msra.mxu0 0
        %1743 = vmatprep.subr.bf16.mxu0 0
        %1744 = vmatpush1.bf16.msra.mxu0 0
        %1745 = vmatprep.subr.bf16.mxu0 0
        %1746 = vmatpush1.bf16.msra.mxu0 0
        %1747 = vmatprep.subr.bf16.mxu0 0
        %1748 = vmatpush1.bf16.msra.mxu0 0
        %1749 = vmatprep.subr.bf16.mxu0 0
        %1750 = vmatpush1.bf16.msra.mxu0 0
        %1751 = vmatprep.subr.bf16.mxu0 0
        %1752 = vmatpush1.bf16.msra.mxu0 %v1733
        %1753 = vmatprep.subr.bf16.mxu0 0
        %1754 = vmatpush1.bf16.msra.mxu0 %v1732
        %1755 = vmatprep.subr.bf16.mxu0 0
        %1756 = vmatpush2.bf16.msra.mxu0 0
        %1757 = vmatprep.subr.bf16.mxu0 0
        %1758 = vmatpush2.bf16.msra.mxu0 0
        %1759 = vmatprep.subr.bf16.mxu0 0
        %1760 = vmatpush2.bf16.msra.mxu0 0
        %1761 = vmatprep.subr.bf16.mxu0 0
        %1762 = vmatpush2.bf16.msra.mxu0 0
        %1763 = vmatprep.subr.bf16.mxu0 0
        %1764 = vmatpush2.bf16.msra.mxu0 0
        %1765 = vmatprep.subr.bf16.mxu0 0
        %1766 = vmatpush2.bf16.msra.mxu0 0
        %1767 = vmatprep.subr.bf16.mxu0 0
        %1768 = vmatpush2.bf16.msra.mxu0 0
        %1769 = vmatprep.subr.bf16.mxu0 0
        %1770 = vmatpush2.bf16.msra.mxu0 0
        %1771 = vmatprep.mubr.bf16.mxu0 0
        %1772 = vmatmul.mubr.bf16.gmra.mxu0 %v1737
        %v1773 = vpop.f32.mrf.mxu0
        %v1774 = vadd.f32 %v1719, %v1773
        %v1775 = vpop.f32.mrf.mxu0
        %v1776 = vpop.f32.mrf.mxu0
        %v1777 = vpop.f32.mrf.mxu0
        %1778 = vdwg.mxu0
        %s1779 = scalar_lea.vmem [#allocation2], 32
        %v1780 = vld [vmem:[%s1779] sm:$0xf]
        %v1781 = vld [vmem:[%s1779 + $0x4] sm:$0xf]
        %v1782 = vld [vmem:[%s1779 + $0x8] sm:$0xf]
        %v1783 = vld [vmem:[%s1779 + $0xc] sm:$0xf]
        %1784 = vrot.lane.b32.xlu0 %v1401, 64
        %v1785 = vpop.permute.xlu0 %1784
        %v1790 = vunpack.c.l.b16 %v1780
        %v1791 = vunpack.c.l.b16 %v1781
        %v1792 = vunpack.c.l.b16 %v1782
        %v1793 = vunpack.c.l.b16 %v1783
        %v1794 = vpack.c.b16 %v1791, %v1790
        %v1795 = vpack.c.b16 %v1793, %v1792
        %v1799 = vsel %vm1424, %v1785, 0
        %1801 = vmatprep.subr.bf16.mxu0 0
        %1802 = vmatpush1.bf16.msra.mxu0 0
        %1803 = vmatprep.subr.bf16.mxu0 0
        %1804 = vmatpush1.bf16.msra.mxu0 0
        %1805 = vmatprep.subr.bf16.mxu0 0
        %1806 = vmatpush1.bf16.msra.mxu0 0
        %1807 = vmatprep.subr.bf16.mxu0 0
        %1808 = vmatpush1.bf16.msra.mxu0 0
        %1809 = vmatprep.subr.bf16.mxu0 0
        %1810 = vmatpush1.bf16.msra.mxu0 0
        %1811 = vmatprep.subr.bf16.mxu0 0
        %1812 = vmatpush1.bf16.msra.mxu0 0
        %1813 = vmatprep.subr.bf16.mxu0 0
        %1814 = vmatpush1.bf16.msra.mxu0 %v1795
        %1815 = vmatprep.subr.bf16.mxu0 0
        %1816 = vmatpush1.bf16.msra.mxu0 %v1794
        %1817 = vmatprep.subr.bf16.mxu0 0
        %1818 = vmatpush2.bf16.msra.mxu0 0
        %1819 = vmatprep.subr.bf16.mxu0 0
        %1820 = vmatpush2.bf16.msra.mxu0 0
        %1821 = vmatprep.subr.bf16.mxu0 0
        %1822 = vmatpush2.bf16.msra.mxu0 0
        %1823 = vmatprep.subr.bf16.mxu0 0
        %1824 = vmatpush2.bf16.msra.mxu0 0
        %1825 = vmatprep.subr.bf16.mxu0 0
        %1826 = vmatpush2.bf16.msra.mxu0 0
        %1827 = vmatprep.subr.bf16.mxu0 0
        %1828 = vmatpush2.bf16.msra.mxu0 0
        %1829 = vmatprep.subr.bf16.mxu0 0
        %1830 = vmatpush2.bf16.msra.mxu0 0
        %1831 = vmatprep.subr.bf16.mxu0 0
        %1832 = vmatpush2.bf16.msra.mxu0 0
        %1833 = vmatprep.mubr.bf16.mxu0 0
        %1834 = vmatmul.mubr.bf16.gmra.mxu0 %v1799
        %v1835 = vpop.f32.mrf.mxu0
        %v1836 = vadd.f32 %v1410, %v1835
        %v1837 = vpop.f32.mrf.mxu0
        %v1838 = vpop.f32.mrf.mxu0
        %v1839 = vpop.f32.mrf.mxu0
        %1840 = vdwg.mxu0
        %v1841 = vsel %vm1468, %v1836, -inf
        %1842 = vmax.xlane.f32.xlu0 %v1841
        %v1843 = vpop.xlane.xlu0 %1842
        %v1844 = vsub.f32 %v1836, %v1843
        %v1845 = vmul.f32 %v1844, 1.442695
        %v1846 = vpow.pop %v1845
        %v1847 = vsel %vm1468, %v1846, 0.0
        %1848 = vadd.xlane.f32.xlu0 %v1847
        %v1849 = vpop.xlane.xlu0 %1848
        %v1850 = vrcp.pop %v1849
        %v1851 = vmul.f32 %v1846, %v1850
        %v1852 = vpack.c.bf16 %v1851, %v1851
        %s1853 = scalar_lea.vmem [#allocation3], 16
        %v1854 = vld [vmem:[%s1853] sm:$0xf]
        %v1855 = vld [vmem:[%s1853 + $0x4] sm:$0xf]
        %v1858 = vunpack.c.l.b16 %v1854
        %v1859 = vunpack.c.l.b16 %v1855
        %v1860 = vpack.c.b16 %v1859, %v1858
        %v1863 = vsel %vm1468, %v1852, 0
        %1865 = vmatprep.subr.bf16.mxu0 0
        %1866 = vmatpush1.bf16.msra.mxu0 0
        %1867 = vmatprep.subr.bf16.mxu0 0
        %1868 = vmatpush1.bf16.msra.mxu0 0
        %1869 = vmatprep.subr.bf16.mxu0 0
        %1870 = vmatpush1.bf16.msra.mxu0 0
        %1871 = vmatprep.subr.bf16.mxu0 0
        %1872 = vmatpush1.bf16.msra.mxu0 0
        %1873 = vmatprep.subr.bf16.mxu0 0
        %1874 = vmatpush1.bf16.msra.mxu0 0
        %1875 = vmatprep.subr.bf16.mxu0 0
        %1876 = vmatpush1.bf16.msra.mxu0 0
        %1877 = vmatprep.subr.bf16.mxu0 0
        %1878 = vmatpush1.bf16.msra.mxu0 0
        %1879 = vmatprep.subr.bf16.mxu0 0
        %1880 = vmatpush1.bf16.msra.mxu0 %v1860
        %1881 = vmatprep.subr.bf16.mxu0 0
        %1882 = vmatpush2.bf16.msra.mxu0 0
        %1883 = vmatprep.subr.bf16.mxu0 0
        %1884 = vmatpush2.bf16.msra.mxu0 0
        %1885 = vmatprep.subr.bf16.mxu0 0
        %1886 = vmatpush2.bf16.msra.mxu0 0
        %1887 = vmatprep.subr.bf16.mxu0 0
        %1888 = vmatpush2.bf16.msra.mxu0 0
        %1889 = vmatprep.subr.bf16.mxu0 0
        %1890 = vmatpush2.bf16.msra.mxu0 0
        %1891 = vmatprep.subr.bf16.mxu0 0
        %1892 = vmatpush2.bf16.msra.mxu0 0
        %1893 = vmatprep.subr.bf16.mxu0 0
        %1894 = vmatpush2.bf16.msra.mxu0 0
        %1895 = vmatprep.subr.bf16.mxu0 0
        %1896 = vmatpush2.bf16.msra.mxu0 0
        %1897 = vmatprep.mubr.bf16.mxu0 0
        %1898 = vmatmul.mubr.bf16.gmra.mxu0 %v1863
        %v1899 = vpop.f32.mrf.mxu0
        %v1900 = vadd.f32 0.0, %v1899
        %v1901 = vpop.f32.mrf.mxu0
        %v1902 = vpop.f32.mrf.mxu0
        %v1903 = vpop.f32.mrf.mxu0
        %1904 = vdwg.mxu0
        %v1905 = vpack.c.bf16 %v1900, %v1900
        %v1906 = vld [vmem:[#allocation12 + $0x20] sm:$0xf]
        %v1907 = vld [vmem:[#allocation12 + $0x24] sm:$0xf]
        %v1908 = vld [vmem:[#allocation12 + $0x28] sm:$0xf]
        %v1909 = vld [vmem:[#allocation12 + $0x2c] sm:$0xf]
        %v1914 = vunpack.c.l.b16 %v1906
        %v1915 = vunpack.c.l.b16 %v1907
        %v1916 = vunpack.c.l.b16 %v1908
        %v1917 = vunpack.c.l.b16 %v1909
        %v1918 = vpack.c.b16 %v1915, %v1914
        %v1919 = vpack.c.b16 %v1917, %v1916
        %v1923 = vsel %vm1424, %v1905, 0
        %1925 = vmatprep.subr.bf16.mxu0 0
        %1926 = vmatpush1.bf16.msra.mxu0 0
        %1927 = vmatprep.subr.bf16.mxu0 0
        %1928 = vmatpush1.bf16.msra.mxu0 0
        %1929 = vmatprep.subr.bf16.mxu0 0
        %1930 = vmatpush1.bf16.msra.mxu0 0
        %1931 = vmatprep.subr.bf16.mxu0 0
        %1932 = vmatpush1.bf16.msra.mxu0 0
        %1933 = vmatprep.subr.bf16.mxu0 0
        %1934 = vmatpush1.bf16.msra.mxu0 0
        %1935 = vmatprep.subr.bf16.mxu0 0
        %1936 = vmatpush1.bf16.msra.mxu0 0
        %1937 = vmatprep.subr.bf16.mxu0 0
        %1938 = vmatpush1.bf16.msra.mxu0 %v1919
        %1939 = vmatprep.subr.bf16.mxu0 0
        %1940 = vmatpush1.bf16.msra.mxu0 %v1918
        %1941 = vmatprep.subr.bf16.mxu0 0
        %1942 = vmatpush2.bf16.msra.mxu0 0
        %1943 = vmatprep.subr.bf16.mxu0 0
        %1944 = vmatpush2.bf16.msra.mxu0 0
        %1945 = vmatprep.subr.bf16.mxu0 0
        %1946 = vmatpush2.bf16.msra.mxu0 0
        %1947 = vmatprep.subr.bf16.mxu0 0
        %1948 = vmatpush2.bf16.msra.mxu0 0
        %1949 = vmatprep.subr.bf16.mxu0 0
        %1950 = vmatpush2.bf16.msra.mxu0 0
        %1951 = vmatprep.subr.bf16.mxu0 0
        %1952 = vmatpush2.bf16.msra.mxu0 0
        %1953 = vmatprep.subr.bf16.mxu0 0
        %1954 = vmatpush2.bf16.msra.mxu0 0
        %1955 = vmatprep.subr.bf16.mxu0 0
        %1956 = vmatpush2.bf16.msra.mxu0 0
        %1957 = vmatprep.mubr.bf16.mxu0 0
        %1958 = vmatmul.mubr.bf16.gmra.mxu0 %v1923
        %v1959 = vpop.f32.mrf.mxu0
        %v1960 = vadd.f32 0.0, %v1959
        %v1961 = vpop.f32.mrf.mxu0
        %v1962 = vpop.f32.mrf.mxu0
        %v1963 = vpop.f32.mrf.mxu0
        %1964 = vdwg.mxu0
        %v1965 = vadd.f32 %v1774, %v1960
        %s1966 = scalar_lea.vmem [#allocation2], 48
        %v1967 = vld [vmem:[%s1966] sm:$0xf]
        %v1968 = vld [vmem:[%s1966 + $0x4] sm:$0xf]
        %v1969 = vld [vmem:[%s1966 + $0x8] sm:$0xf]
        %v1970 = vld [vmem:[%s1966 + $0xc] sm:$0xf]
        %1971 = vrot.lane.b32.xlu0 %v1401, 32
        %v1972 = vpop.permute.xlu0 %1971
        %v1977 = vunpack.c.l.b16 %v1967
        %v1978 = vunpack.c.l.b16 %v1968
        %v1979 = vunpack.c.l.b16 %v1969
        %v1980 = vunpack.c.l.b16 %v1970
        %v1981 = vpack.c.b16 %v1978, %v1977
        %v1982 = vpack.c.b16 %v1980, %v1979
        %v1986 = vsel %vm1424, %v1972, 0
        %1988 = vmatprep.subr.bf16.mxu0 0
        %1989 = vmatpush1.bf16.msra.mxu0 0
        %1990 = vmatprep.subr.bf16.mxu0 0
        %1991 = vmatpush1.bf16.msra.mxu0 0
        %1992 = vmatprep.subr.bf16.mxu0 0
        %1993 = vmatpush1.bf16.msra.mxu0 0
        %1994 = vmatprep.subr.bf16.mxu0 0
        %1995 = vmatpush1.bf16.msra.mxu0 0
        %1996 = vmatprep.subr.bf16.mxu0 0
        %1997 = vmatpush1.bf16.msra.mxu0 0
        %1998 = vmatprep.subr.bf16.mxu0 0
        %1999 = vmatpush1.bf16.msra.mxu0 0
        %2000 = vmatprep.subr.bf16.mxu0 0
        %2001 = vmatpush1.bf16.msra.mxu0 %v1982
        %2002 = vmatprep.subr.bf16.mxu0 0
        %2003 = vmatpush1.bf16.msra.mxu0 %v1981
        %2004 = vmatprep.subr.bf16.mxu0 0
        %2005 = vmatpush2.bf16.msra.mxu0 0
        %2006 = vmatprep.subr.bf16.mxu0 0
        %2007 = vmatpush2.bf16.msra.mxu0 0
        %2008 = vmatprep.subr.bf16.mxu0 0
        %2009 = vmatpush2.bf16.msra.mxu0 0
        %2010 = vmatprep.subr.bf16.mxu0 0
        %2011 = vmatpush2.bf16.msra.mxu0 0
        %2012 = vmatprep.subr.bf16.mxu0 0
        %2013 = vmatpush2.bf16.msra.mxu0 0
        %2014 = vmatprep.subr.bf16.mxu0 0
        %2015 = vmatpush2.bf16.msra.mxu0 0
        %2016 = vmatprep.subr.bf16.mxu0 0
        %2017 = vmatpush2.bf16.msra.mxu0 0
        %2018 = vmatprep.subr.bf16.mxu0 0
        %2019 = vmatpush2.bf16.msra.mxu0 0
        %2020 = vmatprep.mubr.bf16.mxu0 0
        %2021 = vmatmul.mubr.bf16.gmra.mxu0 %v1986
        %v2022 = vpop.f32.mrf.mxu0
        %v2023 = vadd.f32 %v1410, %v2022
        %v2024 = vpop.f32.mrf.mxu0
        %v2025 = vpop.f32.mrf.mxu0
        %v2026 = vpop.f32.mrf.mxu0
        %2027 = vdwg.mxu0
        %v2028 = vsel %vm1468, %v2023, -inf
        %2029 = vmax.xlane.f32.xlu0 %v2028
        %v2030 = vpop.xlane.xlu0 %2029
        %v2031 = vsub.f32 %v2023, %v2030
        %v2032 = vmul.f32 %v2031, 1.442695
        %v2033 = vpow.pop %v2032
        %v2034 = vsel %vm1468, %v2033, 0.0
        %2035 = vadd.xlane.f32.xlu0 %v2034
        %v2036 = vpop.xlane.xlu0 %2035
        %v2037 = vrcp.pop %v2036
        %v2038 = vmul.f32 %v2033, %v2037
        %v2039 = vpack.c.bf16 %v2038, %v2038
        %s2040 = scalar_lea.vmem [#allocation3], 24
        %v2041 = vld [vmem:[%s2040] sm:$0xf]
        %v2042 = vld [vmem:[%s2040 + $0x4] sm:$0xf]
        %v2045 = vunpack.c.l.b16 %v2041
        %v2046 = vunpack.c.l.b16 %v2042
        %v2047 = vpack.c.b16 %v2046, %v2045
        %v2050 = vsel %vm1468, %v2039, 0
        %2052 = vmatprep.subr.bf16.mxu0 0
        %2053 = vmatpush1.bf16.msra.mxu0 0
        %2054 = vmatprep.subr.bf16.mxu0 0
        %2055 = vmatpush1.bf16.msra.mxu0 0
        %2056 = vmatprep.subr.bf16.mxu0 0
        %2057 = vmatpush1.bf16.msra.mxu0 0
        %2058 = vmatprep.subr.bf16.mxu0 0
        %2059 = vmatpush1.bf16.msra.mxu0 0
        %2060 = vmatprep.subr.bf16.mxu0 0
        %2061 = vmatpush1.bf16.msra.mxu0 0
        %2062 = vmatprep.subr.bf16.mxu0 0
        %2063 = vmatpush1.bf16.msra.mxu0 0
        %2064 = vmatprep.subr.bf16.mxu0 0
        %2065 = vmatpush1.bf16.msra.mxu0 0
        %2066 = vmatprep.subr.bf16.mxu0 0
        %2067 = vmatpush1.bf16.msra.mxu0 %v2047
        %2068 = vmatprep.subr.bf16.mxu0 0
        %2069 = vmatpush2.bf16.msra.mxu0 0
        %2070 = vmatprep.subr.bf16.mxu0 0
        %2071 = vmatpush2.bf16.msra.mxu0 0
        %2072 = vmatprep.subr.bf16.mxu0 0
        %2073 = vmatpush2.bf16.msra.mxu0 0
        %2074 = vmatprep.subr.bf16.mxu0 0
        %2075 = vmatpush2.bf16.msra.mxu0 0
        %2076 = vmatprep.subr.bf16.mxu0 0
        %2077 = vmatpush2.bf16.msra.mxu0 0
        %2078 = vmatprep.subr.bf16.mxu0 0
        %2079 = vmatpush2.bf16.msra.mxu0 0
        %2080 = vmatprep.subr.bf16.mxu0 0
        %2081 = vmatpush2.bf16.msra.mxu0 0
        %2082 = vmatprep.subr.bf16.mxu0 0
        %2083 = vmatpush2.bf16.msra.mxu0 0
        %2084 = vmatprep.mubr.bf16.mxu0 0
        %2085 = vmatmul.mubr.bf16.gmra.mxu0 %v2050
        %v2086 = vpop.f32.mrf.mxu0
        %v2087 = vadd.f32 0.0, %v2086
        %v2088 = vpop.f32.mrf.mxu0
        %v2089 = vpop.f32.mrf.mxu0
        %v2090 = vpop.f32.mrf.mxu0
        %2091 = vdwg.mxu0
        %v2092 = vpack.c.bf16 %v2087, %v2087
        %v2093 = vld [vmem:[#allocation12 + $0x30] sm:$0xf]
        %v2094 = vld [vmem:[#allocation12 + $0x34] sm:$0xf]
        %v2095 = vld [vmem:[#allocation12 + $0x38] sm:$0xf]
        %v2096 = vld [vmem:[#allocation12 + $0x3c] sm:$0xf]
        %v2101 = vunpack.c.l.b16 %v2093
        %v2102 = vunpack.c.l.b16 %v2094
        %v2103 = vunpack.c.l.b16 %v2095
        %v2104 = vunpack.c.l.b16 %v2096
        %v2105 = vpack.c.b16 %v2102, %v2101
        %v2106 = vpack.c.b16 %v2104, %v2103
        %v2110 = vsel %vm1424, %v2092, 0
        %2112 = vmatprep.subr.bf16.mxu0 0
        %2113 = vmatpush1.bf16.msra.mxu0 0
        %2114 = vmatprep.subr.bf16.mxu0 0
        %2115 = vmatpush1.bf16.msra.mxu0 0
        %2116 = vmatprep.subr.bf16.mxu0 0
        %2117 = vmatpush1.bf16.msra.mxu0 0
        %2118 = vmatprep.subr.bf16.mxu0 0
        %2119 = vmatpush1.bf16.msra.mxu0 0
        %2120 = vmatprep.subr.bf16.mxu0 0
        %2121 = vmatpush1.bf16.msra.mxu0 0
        %2122 = vmatprep.subr.bf16.mxu0 0
        %2123 = vmatpush1.bf16.msra.mxu0 0
        %2124 = vmatprep.subr.bf16.mxu0 0
        %2125 = vmatpush1.bf16.msra.mxu0 %v2106
        %2126 = vmatprep.subr.bf16.mxu0 0
        %2127 = vmatpush1.bf16.msra.mxu0 %v2105
        %2128 = vmatprep.subr.bf16.mxu0 0
        %2129 = vmatpush2.bf16.msra.mxu0 0
        %2130 = vmatprep.subr.bf16.mxu0 0
        %2131 = vmatpush2.bf16.msra.mxu0 0
        %2132 = vmatprep.subr.bf16.mxu0 0
        %2133 = vmatpush2.bf16.msra.mxu0 0
        %2134 = vmatprep.subr.bf16.mxu0 0
        %2135 = vmatpush2.bf16.msra.mxu0 0
        %2136 = vmatprep.subr.bf16.mxu0 0
        %2137 = vmatpush2.bf16.msra.mxu0 0
        %2138 = vmatprep.subr.bf16.mxu0 0
        %2139 = vmatpush2.bf16.msra.mxu0 0
        %2140 = vmatprep.subr.bf16.mxu0 0
        %2141 = vmatpush2.bf16.msra.mxu0 0
        %2142 = vmatprep.subr.bf16.mxu0 0
        %2143 = vmatpush2.bf16.msra.mxu0 0
        %2144 = vmatprep.mubr.bf16.mxu0 0
        %2145 = vmatmul.mubr.bf16.gmra.mxu0 %v2110
        %v2146 = vpop.f32.mrf.mxu0
        %v2147 = vadd.f32 0.0, %v2146
        %v2148 = vpop.f32.mrf.mxu0
        %v2149 = vpop.f32.mrf.mxu0
        %v2150 = vpop.f32.mrf.mxu0
        %2151 = vdwg.mxu0
        %v2152 = vadd.f32 %v1965, %v2147
        %v2153 = vld [vmem:[%s10] sm:$0x1]
        %v2155 = vlaneseq
        %v2156 = vshrl.u32 %v2155, 7
        %v2157 = vsub.s32 0, %v2156
        %v2158 = vrot.slane %v2153, %v2157
        %v2160 = vadd.f32 %v2152, %v2158
        %v2161 = vadd.f32 %v2160, %v1287
        %v2162 = vld [vmem:[%s11] sm:$0x1]
        %v2163 = vld [vmem:[%s12] sm:$0x1]
        %2164 = vadd.xlane.f32.xlu0 %v2161
        %v2165 = vpop.xlane.xlu0 %2164
        %v2166 = vrcp.pop 128.0
        %v2167 = vmul.f32 %v2165, %v2166
        %v2168 = vsub.f32 %v2161, %v2167
        %v2169 = vmul.f32 %v2168, %v2168
        %2170 = vadd.xlane.f32.xlu0 %v2169
        %v2171 = vpop.xlane.xlu0 %2170
        %v2172 = vmul.f32 %v2171, %v2166
        %v2173 = vadd.f32 %v2172, 1e-12
        %v2174 = vrsqrt.pop %v2173
        %v2175 = vmul.f32 %v2168, %v2174
        %v2177 = vlaneseq
        %v2178 = vshrl.u32 %v2177, 7
        %v2179 = vsub.s32 0, %v2178
        %v2180 = vrot.slane %v2162, %v2179
        %v2182 = vmul.f32 %v2175, %v2180
        %v2184 = vlaneseq
        %v2185 = vshrl.u32 %v2184, 7
        %v2186 = vsub.s32 0, %v2185
        %v2187 = vrot.slane %v2163, %v2186
        %v2189 = vadd.f32 %v2182, %v2187
        %v2190 = vpack.c.bf16 %v2189, %v2189
        %v2191 = vld [vmem:[#allocation13] sm:$0xff]
        %v2192 = vld [vmem:[#allocation13 + $0x8] sm:$0xff]
        %v2193 = vld [vmem:[#allocation13 + $0x10] sm:$0xff]
        %v2194 = vld [vmem:[#allocation13 + $0x18] sm:$0xff]
        %v2195 = vld [vmem:[#allocation13 + $0x20] sm:$0xff]
        %v2196 = vld [vmem:[#allocation13 + $0x28] sm:$0xff]
        %v2197 = vld [vmem:[#allocation13 + $0x30] sm:$0xff]
        %v2198 = vld [vmem:[#allocation13 + $0x38] sm:$0xff]
        %v2199 = vld [vmem:[#allocation13 + $0x40] sm:$0xff]
        %v2200 = vld [vmem:[#allocation13 + $0x48] sm:$0xff]
        %v2201 = vld [vmem:[#allocation13 + $0x50] sm:$0xff]
        %v2202 = vld [vmem:[#allocation13 + $0x58] sm:$0xff]
        %v2203 = vld [vmem:[#allocation13 + $0x60] sm:$0xff]
        %v2204 = vld [vmem:[#allocation13 + $0x68] sm:$0xff]
        %v2205 = vld [vmem:[#allocation13 + $0x70] sm:$0xff]
        %v2206 = vld [vmem:[#allocation13 + $0x78] sm:$0xff]
        %v2207 = vld [vmem:[#allocation13 + $0x80] sm:$0xff]
        %v2208 = vld [vmem:[#allocation13 + $0x88] sm:$0xff]
        %v2209 = vld [vmem:[#allocation13 + $0x90] sm:$0xff]
        %v2210 = vld [vmem:[#allocation13 + $0x98] sm:$0xff]
        %v2211 = vld [vmem:[#allocation13 + $0xa0] sm:$0xff]
        %v2212 = vld [vmem:[#allocation13 + $0xa8] sm:$0xff]
        %v2213 = vld [vmem:[#allocation13 + $0xb0] sm:$0xff]
        %v2214 = vld [vmem:[#allocation13 + $0xb8] sm:$0xff]
        %v2215 = vld [vmem:[#allocation13 + $0xc0] sm:$0xff]
        %v2216 = vld [vmem:[#allocation13 + $0xc8] sm:$0xff]
        %v2217 = vld [vmem:[#allocation13 + $0xd0] sm:$0xff]
        %v2218 = vld [vmem:[#allocation13 + $0xd8] sm:$0xff]
        %v2219 = vld [vmem:[#allocation13 + $0xe0] sm:$0xff]
        %v2220 = vld [vmem:[#allocation13 + $0xe8] sm:$0xff]
        %v2221 = vld [vmem:[#allocation13 + $0xf0] sm:$0xff]
        %v2222 = vld [vmem:[#allocation13 + $0xf8] sm:$0xff]
        %v2223 = vld [vmem:[%s14] sm:$0xf]
        %v2225 = vlaneseq
        %v2226 = vshrl.u32 %v2225, 7
        %v2227 = vsub.s32 0, %v2226
        %v2228 = vrot.slane %v2223, %v2227
        %v2229 = vlaneseq
        %v2230 = vshrl.u32 %v2229, 7
        %v2231 = vsub.s32 1, %v2230
        %v2232 = vrot.slane %v2223, %v2231
        %v2233 = vlaneseq
        %v2234 = vshrl.u32 %v2233, 7
        %v2235 = vsub.s32 2, %v2234
        %v2236 = vrot.slane %v2223, %v2235
        %v2237 = vlaneseq
        %v2238 = vshrl.u32 %v2237, 7
        %v2239 = vsub.s32 3, %v2238
        %v2240 = vrot.slane %v2223, %v2239
        %v2277 = vunpack.c.l.b16 %v2191
        %v2278 = vunpack.c.h.b16 %v2191
        %v2279 = vunpack.c.l.b16 %v2192
        %v2280 = vunpack.c.h.b16 %v2192
        %v2281 = vunpack.c.l.b16 %v2193
        %v2282 = vunpack.c.h.b16 %v2193
        %v2283 = vunpack.c.l.b16 %v2194
        %v2284 = vunpack.c.h.b16 %v2194
        %v2285 = vunpack.c.l.b16 %v2195
        %v2286 = vunpack.c.h.b16 %v2195
        %v2287 = vunpack.c.l.b16 %v2196
        %v2288 = vunpack.c.h.b16 %v2196
        %v2289 = vunpack.c.l.b16 %v2197
        %v2290 = vunpack.c.h.b16 %v2197
        %v2291 = vunpack.c.l.b16 %v2198
        %v2292 = vunpack.c.h.b16 %v2198
        %v2293 = vunpack.c.l.b16 %v2199
        %v2294 = vunpack.c.h.b16 %v2199
        %v2295 = vunpack.c.l.b16 %v2200
        %v2296 = vunpack.c.h.b16 %v2200
        %v2297 = vunpack.c.l.b16 %v2201
        %v2298 = vunpack.c.h.b16 %v2201
        %v2299 = vunpack.c.l.b16 %v2202
        %v2300 = vunpack.c.h.b16 %v2202
        %v2301 = vunpack.c.l.b16 %v2203
        %v2302 = vunpack.c.h.b16 %v2203
        %v2303 = vunpack.c.l.b16 %v2204
        %v2304 = vunpack.c.h.b16 %v2204
        %v2305 = vunpack.c.l.b16 %v2205
        %v2306 = vunpack.c.h.b16 %v2205
        %v2307 = vunpack.c.l.b16 %v2206
        %v2308 = vunpack.c.h.b16 %v2206
        %v2309 = vunpack.c.l.b16 %v2207
        %v2310 = vunpack.c.h.b16 %v2207
        %v2311 = vunpack.c.l.b16 %v2208
        %v2312 = vunpack.c.h.b16 %v2208
        %v2313 = vunpack.c.l.b16 %v2209
        %v2314 = vunpack.c.h.b16 %v2209
        %v2315 = vunpack.c.l.b16 %v2210
        %v2316 = vunpack.c.h.b16 %v2210
        %v2317 = vunpack.c.l.b16 %v2211
        %v2318 = vunpack.c.h.b16 %v2211
        %v2319 = vunpack.c.l.b16 %v2212
        %v2320 = vunpack.c.h.b16 %v2212
        %v2321 = vunpack.c.l.b16 %v2213
        %v2322 = vunpack.c.h.b16 %v2213
        %v2323 = vunpack.c.l.b16 %v2214
        %v2324 = vunpack.c.h.b16 %v2214
        %v2325 = vunpack.c.l.b16 %v2215
        %v2326 = vunpack.c.h.b16 %v2215
        %v2327 = vunpack.c.l.b16 %v2216
        %v2328 = vunpack.c.h.b16 %v2216
        %v2329 = vunpack.c.l.b16 %v2217
        %v2330 = vunpack.c.h.b16 %v2217
        %v2331 = vunpack.c.l.b16 %v2218
        %v2332 = vunpack.c.h.b16 %v2218
        %v2333 = vunpack.c.l.b16 %v2219
        %v2334 = vunpack.c.h.b16 %v2219
        %v2335 = vunpack.c.l.b16 %v2220
        %v2336 = vunpack.c.h.b16 %v2220
        %v2337 = vunpack.c.l.b16 %v2221
        %v2338 = vunpack.c.h.b16 %v2221
        %v2339 = vunpack.c.l.b16 %v2222
        %v2340 = vunpack.c.h.b16 %v2222
        %v2341 = vpack.c.b16 %v2281, %v2277
        %v2342 = vpack.c.b16 %v2282, %v2278
        %v2343 = vpack.c.b16 %v2283, %v2279
        %v2344 = vpack.c.b16 %v2284, %v2280
        %v2345 = vpack.c.b16 %v2289, %v2285
        %v2346 = vpack.c.b16 %v2290, %v2286
        %v2347 = vpack.c.b16 %v2291, %v2287
        %v2348 = vpack.c.b16 %v2292, %v2288
        %v2349 = vpack.c.b16 %v2297, %v2293
        %v2350 = vpack.c.b16 %v2298, %v2294
        %v2351 = vpack.c.b16 %v2299, %v2295
        %v2352 = vpack.c.b16 %v2300, %v2296
        %v2353 = vpack.c.b16 %v2305, %v2301
        %v2354 = vpack.c.b16 %v2306, %v2302
        %v2355 = vpack.c.b16 %v2307, %v2303
        %v2356 = vpack.c.b16 %v2308, %v2304
        %v2357 = vpack.c.b16 %v2313, %v2309
        %v2358 = vpack.c.b16 %v2314, %v2310
        %v2359 = vpack.c.b16 %v2315, %v2311
        %v2360 = vpack.c.b16 %v2316, %v2312
        %v2361 = vpack.c.b16 %v2321, %v2317
        %v2362 = vpack.c.b16 %v2322, %v2318
        %v2363 = vpack.c.b16 %v2323, %v2319
        %v2364 = vpack.c.b16 %v2324, %v2320
        %v2365 = vpack.c.b16 %v2329, %v2325
        %v2366 = vpack.c.b16 %v2330, %v2326
        %v2367 = vpack.c.b16 %v2331, %v2327
        %v2368 = vpack.c.b16 %v2332, %v2328
        %v2369 = vpack.c.b16 %v2337, %v2333
        %v2370 = vpack.c.b16 %v2338, %v2334
        %v2371 = vpack.c.b16 %v2339, %v2335
        %v2372 = vpack.c.b16 %v2340, %v2336
        %2405 = vmatprep.subr.bf16.mxu0 %v2370
        %2406 = vmatpush1.bf16.msra.mxu0 %v2369
        %2407 = vmatprep.subr.bf16.mxu0 %v2366
        %2408 = vmatpush1.bf16.msra.mxu0 %v2365
        %2409 = vmatprep.subr.bf16.mxu0 %v2362
        %2410 = vmatpush1.bf16.msra.mxu0 %v2361
        %2411 = vmatprep.subr.bf16.mxu0 %v2358
        %2412 = vmatpush1.bf16.msra.mxu0 %v2357
        %2413 = vmatprep.subr.bf16.mxu0 %v2354
        %2414 = vmatpush1.bf16.msra.mxu0 %v2353
        %2415 = vmatprep.subr.bf16.mxu0 %v2350
        %2416 = vmatpush1.bf16.msra.mxu0 %v2349
        %2417 = vmatprep.subr.bf16.mxu0 %v2346
        %2418 = vmatpush1.bf16.msra.mxu0 %v2345
        %2419 = vmatprep.subr.bf16.mxu0 %v2342
        %2420 = vmatpush1.bf16.msra.mxu0 %v2341
        %2421 = vmatprep.subr.bf16.mxu0 0
        %2422 = vmatpush2.bf16.msra.mxu0 0
        %2423 = vmatprep.subr.bf16.mxu0 0
        %2424 = vmatpush2.bf16.msra.mxu0 0
        %2425 = vmatprep.subr.bf16.mxu0 0
        %2426 = vmatpush2.bf16.msra.mxu0 0
        %2427 = vmatprep.subr.bf16.mxu0 0
        %2428 = vmatpush2.bf16.msra.mxu0 0
        %2429 = vmatprep.subr.bf16.mxu0 0
        %2430 = vmatpush2.bf16.msra.mxu0 0
        %2431 = vmatprep.subr.bf16.mxu0 0
        %2432 = vmatpush2.bf16.msra.mxu0 0
        %2433 = vmatprep.subr.bf16.mxu0 0
        %2434 = vmatpush2.bf16.msra.mxu0 0
        %2435 = vmatprep.subr.bf16.mxu0 0
        %2436 = vmatpush2.bf16.msra.mxu0 0
        %2437 = vmatprep.mubr.bf16.mxu0 0
        %2438 = vmatmul.mubr.bf16.gmra.mxu0 %v2190
        %v2439 = vpop.f32.mrf.mxu0
        %v2440 = vadd.f32 %v2228, %v2439
        %v2441 = vpop.f32.mrf.mxu0
        %v2442 = vadd.f32 %v2232, %v2441
        %v2443 = vpop.f32.mrf.mxu0
        %v2444 = vpop.f32.mrf.mxu0
        %2445 = vdwg.mxu0
        %2446 = vmatprep.subr.bf16.mxu0 %v2372
        %2447 = vmatpush1.bf16.msra.mxu0 %v2371
        %2448 = vmatprep.subr.bf16.mxu0 %v2368
        %2449 = vmatpush1.bf16.msra.mxu0 %v2367
        %2450 = vmatprep.subr.bf16.mxu0 %v2364
        %2451 = vmatpush1.bf16.msra.mxu0 %v2363
        %2452 = vmatprep.subr.bf16.mxu0 %v2360
        %2453 = vmatpush1.bf16.msra.mxu0 %v2359
        %2454 = vmatprep.subr.bf16.mxu0 %v2356
        %2455 = vmatpush1.bf16.msra.mxu0 %v2355
        %2456 = vmatprep.subr.bf16.mxu0 %v2352
        %2457 = vmatpush1.bf16.msra.mxu0 %v2351
        %2458 = vmatprep.subr.bf16.mxu0 %v2348
        %2459 = vmatpush1.bf16.msra.mxu0 %v2347
        %2460 = vmatprep.subr.bf16.mxu0 %v2344
        %2461 = vmatpush1.bf16.msra.mxu0 %v2343
        %2462 = vmatprep.subr.bf16.mxu0 0
        %2463 = vmatpush2.bf16.msra.mxu0 0
        %2464 = vmatprep.subr.bf16.mxu0 0
        %2465 = vmatpush2.bf16.msra.mxu0 0
        %2466 = vmatprep.subr.bf16.mxu0 0
        %2467 = vmatpush2.bf16.msra.mxu0 0
        %2468 = vmatprep.subr.bf16.mxu0 0
        %2469 = vmatpush2.bf16.msra.mxu0 0
        %2470 = vmatprep.subr.bf16.mxu0 0
        %2471 = vmatpush2.bf16.msra.mxu0 0
        %2472 = vmatprep.subr.bf16.mxu0 0
        %2473 = vmatpush2.bf16.msra.mxu0 0
        %2474 = vmatprep.subr.bf16.mxu0 0
        %2475 = vmatpush2.bf16.msra.mxu0 0
        %2476 = vmatprep.subr.bf16.mxu0 0
        %2477 = vmatpush2.bf16.msra.mxu0 0
        %2478 = vmatprep.mubr.bf16.mxu0 0
        %2479 = vmatmul.mubr.bf16.gmra.mxu0 %v2190
        %v2480 = vpop.f32.mrf.mxu0
        %v2481 = vadd.f32 %v2236, %v2480
        %v2482 = vpop.f32.mrf.mxu0
        %v2483 = vadd.f32 %v2240, %v2482
        %v2484 = vpop.f32.mrf.mxu0
        %v2485 = vpop.f32.mrf.mxu0
        %2486 = vdwg.mxu0
        %v2487 = vmul.f32 %v2440, 0.5
        %v2488 = vmul.f32 %v2442, 0.5
        %v2489 = vmul.f32 %v2481, 0.5
        %v2490 = vmul.f32 %v2483, 0.5
        %v2491 = vmul.f32 %v2440, 0.70710677
        %v2492 = vmul.f32 %v2442, 0.70710677
        %v2493 = vmul.f32 %v2481, 0.70710677
        %v2494 = vmul.f32 %v2483, 0.70710677
        %v2495 = verf.f32.pop %v2491
        %v2496 = verf.f32.pop %v2492
        %v2497 = verf.f32.pop %v2493
        %v2498 = verf.f32.pop %v2494
        %v2499 = vadd.f32 %v2495, 1.0
        %v2500 = vadd.f32 %v2496, 1.0
        %v2501 = vadd.f32 %v2497, 1.0
        %v2502 = vadd.f32 %v2498, 1.0
        %v2503 = vmul.f32 %v2487, %v2499
        %v2504 = vmul.f32 %v2488, %v2500
        %v2505 = vmul.f32 %v2489, %v2501
        %v2506 = vmul.f32 %v2490, %v2502
        %v2507 = vpack.c.bf16 %v2503, %v2503
        %v2508 = vpack.c.bf16 %v2504, %v2504
        %v2509 = vpack.c.bf16 %v2505, %v2505
        %v2510 = vpack.c.bf16 %v2506, %v2506
        %v2511 = vld [vmem:[#allocation15] sm:$0xf]
        %v2512 = vld [vmem:[#allocation15 + $0x4] sm:$0xf]
        %v2513 = vld [vmem:[#allocation15 + $0x8] sm:$0xf]
        %v2514 = vld [vmem:[#allocation15 + $0xc] sm:$0xf]
        %v2515 = vld [vmem:[#allocation15 + $0x10] sm:$0xf]
        %v2516 = vld [vmem:[#allocation15 + $0x14] sm:$0xf]
        %v2517 = vld [vmem:[#allocation15 + $0x18] sm:$0xf]
        %v2518 = vld [vmem:[#allocation15 + $0x1c] sm:$0xf]
        %v2519 = vld [vmem:[#allocation15 + $0x20] sm:$0xf]
        %v2520 = vld [vmem:[#allocation15 + $0x24] sm:$0xf]
        %v2521 = vld [vmem:[#allocation15 + $0x28] sm:$0xf]
        %v2522 = vld [vmem:[#allocation15 + $0x2c] sm:$0xf]
        %v2523 = vld [vmem:[#allocation15 + $0x30] sm:$0xf]
        %v2524 = vld [vmem:[#allocation15 + $0x34] sm:$0xf]
        %v2525 = vld [vmem:[#allocation15 + $0x38] sm:$0xf]
        %v2526 = vld [vmem:[#allocation15 + $0x3c] sm:$0xf]
        %v2527 = vld [vmem:[#allocation15 + $0x40] sm:$0xf]
        %v2528 = vld [vmem:[#allocation15 + $0x44] sm:$0xf]
        %v2529 = vld [vmem:[#allocation15 + $0x48] sm:$0xf]
        %v2530 = vld [vmem:[#allocation15 + $0x4c] sm:$0xf]
        %v2531 = vld [vmem:[#allocation15 + $0x50] sm:$0xf]
        %v2532 = vld [vmem:[#allocation15 + $0x54] sm:$0xf]
        %v2533 = vld [vmem:[#allocation15 + $0x58] sm:$0xf]
        %v2534 = vld [vmem:[#allocation15 + $0x5c] sm:$0xf]
        %v2535 = vld [vmem:[#allocation15 + $0x60] sm:$0xf]
        %v2536 = vld [vmem:[#allocation15 + $0x64] sm:$0xf]
        %v2537 = vld [vmem:[#allocation15 + $0x68] sm:$0xf]
        %v2538 = vld [vmem:[#allocation15 + $0x6c] sm:$0xf]
        %v2539 = vld [vmem:[#allocation15 + $0x70] sm:$0xf]
        %v2540 = vld [vmem:[#allocation15 + $0x74] sm:$0xf]
        %v2541 = vld [vmem:[#allocation15 + $0x78] sm:$0xf]
        %v2542 = vld [vmem:[#allocation15 + $0x7c] sm:$0xf]
        %v2543 = vld [vmem:[#allocation15 + $0x80] sm:$0xf]
        %v2544 = vld [vmem:[#allocation15 + $0x84] sm:$0xf]
        %v2545 = vld [vmem:[#allocation15 + $0x88] sm:$0xf]
        %v2546 = vld [vmem:[#allocation15 + $0x8c] sm:$0xf]
        %v2547 = vld [vmem:[#allocation15 + $0x90] sm:$0xf]
        %v2548 = vld [vmem:[#allocation15 + $0x94] sm:$0xf]
        %v2549 = vld [vmem:[#allocation15 + $0x98] sm:$0xf]
        %v2550 = vld [vmem:[#allocation15 + $0x9c] sm:$0xf]
        %v2551 = vld [vmem:[#allocation15 + $0xa0] sm:$0xf]
        %v2552 = vld [vmem:[#allocation15 + $0xa4] sm:$0xf]
        %v2553 = vld [vmem:[#allocation15 + $0xa8] sm:$0xf]
        %v2554 = vld [vmem:[#allocation15 + $0xac] sm:$0xf]
        %v2555 = vld [vmem:[#allocation15 + $0xb0] sm:$0xf]
        %v2556 = vld [vmem:[#allocation15 + $0xb4] sm:$0xf]
        %v2557 = vld [vmem:[#allocation15 + $0xb8] sm:$0xf]
        %v2558 = vld [vmem:[#allocation15 + $0xbc] sm:$0xf]
        %v2559 = vld [vmem:[#allocation15 + $0xc0] sm:$0xf]
        %v2560 = vld [vmem:[#allocation15 + $0xc4] sm:$0xf]
        %v2561 = vld [vmem:[#allocation15 + $0xc8] sm:$0xf]
        %v2562 = vld [vmem:[#allocation15 + $0xcc] sm:$0xf]
        %v2563 = vld [vmem:[#allocation15 + $0xd0] sm:$0xf]
        %v2564 = vld [vmem:[#allocation15 + $0xd4] sm:$0xf]
        %v2565 = vld [vmem:[#allocation15 + $0xd8] sm:$0xf]
        %v2566 = vld [vmem:[#allocation15 + $0xdc] sm:$0xf]
        %v2567 = vld [vmem:[#allocation15 + $0xe0] sm:$0xf]
        %v2568 = vld [vmem:[#allocation15 + $0xe4] sm:$0xf]
        %v2569 = vld [vmem:[#allocation15 + $0xe8] sm:$0xf]
        %v2570 = vld [vmem:[#allocation15 + $0xec] sm:$0xf]
        %v2571 = vld [vmem:[#allocation15 + $0xf0] sm:$0xf]
        %v2572 = vld [vmem:[#allocation15 + $0xf4] sm:$0xf]
        %v2573 = vld [vmem:[#allocation15 + $0xf8] sm:$0xf]
        %v2574 = vld [vmem:[#allocation15 + $0xfc] sm:$0xf]
        %v2575 = vld [vmem:[%s16] sm:$0x1]
        %v2577 = vlaneseq
        %v2578 = vshrl.u32 %v2577, 7
        %v2579 = vsub.s32 0, %v2578
        %v2580 = vrot.slane %v2575, %v2579
        %v2646 = vunpack.c.l.b16 %v2511
        %v2647 = vunpack.c.l.b16 %v2512
        %v2648 = vunpack.c.l.b16 %v2513
        %v2649 = vunpack.c.l.b16 %v2514
        %v2650 = vunpack.c.l.b16 %v2515
        %v2651 = vunpack.c.l.b16 %v2516
        %v2652 = vunpack.c.l.b16 %v2517
        %v2653 = vunpack.c.l.b16 %v2518
        %v2654 = vunpack.c.l.b16 %v2519
        %v2655 = vunpack.c.l.b16 %v2520
        %v2656 = vunpack.c.l.b16 %v2521
        %v2657 = vunpack.c.l.b16 %v2522
        %v2658 = vunpack.c.l.b16 %v2523
        %v2659 = vunpack.c.l.b16 %v2524
        %v2660 = vunpack.c.l.b16 %v2525
        %v2661 = vunpack.c.l.b16 %v2526
        %v2662 = vunpack.c.l.b16 %v2527
        %v2663 = vunpack.c.l.b16 %v2528
        %v2664 = vunpack.c.l.b16 %v2529
        %v2665 = vunpack.c.l.b16 %v2530
        %v2666 = vunpack.c.l.b16 %v2531
        %v2667 = vunpack.c.l.b16 %v2532
        %v2668 = vunpack.c.l.b16 %v2533
        %v2669 = vunpack.c.l.b16 %v2534
        %v2670 = vunpack.c.l.b16 %v2535
        %v2671 = vunpack.c.l.b16 %v2536
        %v2672 = vunpack.c.l.b16 %v2537
        %v2673 = vunpack.c.l.b16 %v2538
        %v2674 = vunpack.c.l.b16 %v2539
        %v2675 = vunpack.c.l.b16 %v2540
        %v2676 = vunpack.c.l.b16 %v2541
        %v2677 = vunpack.c.l.b16 %v2542
        %v2678 = vunpack.c.l.b16 %v2543
        %v2679 = vunpack.c.l.b16 %v2544
        %v2680 = vunpack.c.l.b16 %v2545
        %v2681 = vunpack.c.l.b16 %v2546
        %v2682 = vunpack.c.l.b16 %v2547
        %v2683 = vunpack.c.l.b16 %v2548
        %v2684 = vunpack.c.l.b16 %v2549
        %v2685 = vunpack.c.l.b16 %v2550
        %v2686 = vunpack.c.l.b16 %v2551
        %v2687 = vunpack.c.l.b16 %v2552
        %v2688 = vunpack.c.l.b16 %v2553
        %v2689 = vunpack.c.l.b16 %v2554
        %v2690 = vunpack.c.l.b16 %v2555
        %v2691 = vunpack.c.l.b16 %v2556
        %v2692 = vunpack.c.l.b16 %v2557
        %v2693 = vunpack.c.l.b16 %v2558
        %v2694 = vunpack.c.l.b16 %v2559
        %v2695 = vunpack.c.l.b16 %v2560
        %v2696 = vunpack.c.l.b16 %v2561
        %v2697 = vunpack.c.l.b16 %v2562
        %v2698 = vunpack.c.l.b16 %v2563
        %v2699 = vunpack.c.l.b16 %v2564
        %v2700 = vunpack.c.l.b16 %v2565
        %v2701 = vunpack.c.l.b16 %v2566
        %v2702 = vunpack.c.l.b16 %v2567
        %v2703 = vunpack.c.l.b16 %v2568
        %v2704 = vunpack.c.l.b16 %v2569
        %v2705 = vunpack.c.l.b16 %v2570
        %v2706 = vunpack.c.l.b16 %v2571
        %v2707 = vunpack.c.l.b16 %v2572
        %v2708 = vunpack.c.l.b16 %v2573
        %v2709 = vunpack.c.l.b16 %v2574
        %v2710 = vpack.c.b16 %v2647, %v2646
        %v2711 = vpack.c.b16 %v2649, %v2648
        %v2712 = vpack.c.b16 %v2651, %v2650
        %v2713 = vpack.c.b16 %v2653, %v2652
        %v2714 = vpack.c.b16 %v2655, %v2654
        %v2715 = vpack.c.b16 %v2657, %v2656
        %v2716 = vpack.c.b16 %v2659, %v2658
        %v2717 = vpack.c.b16 %v2661, %v2660
        %v2718 = vpack.c.b16 %v2663, %v2662
        %v2719 = vpack.c.b16 %v2665, %v2664
        %v2720 = vpack.c.b16 %v2667, %v2666
        %v2721 = vpack.c.b16 %v2669, %v2668
        %v2722 = vpack.c.b16 %v2671, %v2670
        %v2723 = vpack.c.b16 %v2673, %v2672
        %v2724 = vpack.c.b16 %v2675, %v2674
        %v2725 = vpack.c.b16 %v2677, %v2676
        %v2726 = vpack.c.b16 %v2679, %v2678
        %v2727 = vpack.c.b16 %v2681, %v2680
        %v2728 = vpack.c.b16 %v2683, %v2682
        %v2729 = vpack.c.b16 %v2685, %v2684
        %v2730 = vpack.c.b16 %v2687, %v2686
        %v2731 = vpack.c.b16 %v2689, %v2688
        %v2732 = vpack.c.b16 %v2691, %v2690
        %v2733 = vpack.c.b16 %v2693, %v2692
        %v2734 = vpack.c.b16 %v2695, %v2694
        %v2735 = vpack.c.b16 %v2697, %v2696
        %v2736 = vpack.c.b16 %v2699, %v2698
        %v2737 = vpack.c.b16 %v2701, %v2700
        %v2738 = vpack.c.b16 %v2703, %v2702
        %v2739 = vpack.c.b16 %v2705, %v2704
        %v2740 = vpack.c.b16 %v2707, %v2706
        %v2741 = vpack.c.b16 %v2709, %v2708
        %2774 = vmatprep.subr.bf16.mxu0 0
        %2775 = vmatpush1.bf16.msra.mxu0 %v2717
        %2776 = vmatprep.subr.bf16.mxu0 0
        %2777 = vmatpush1.bf16.msra.mxu0 %v2716
        %2778 = vmatprep.subr.bf16.mxu0 0
        %2779 = vmatpush1.bf16.msra.mxu0 %v2715
        %2780 = vmatprep.subr.bf16.mxu0 0
        %2781 = vmatpush1.bf16.msra.mxu0 %v2714
        %2782 = vmatprep.subr.bf16.mxu0 0
        %2783 = vmatpush1.bf16.msra.mxu0 %v2713
        %2784 = vmatprep.subr.bf16.mxu0 0
        %2785 = vmatpush1.bf16.msra.mxu0 %v2712
        %2786 = vmatprep.subr.bf16.mxu0 0
        %2787 = vmatpush1.bf16.msra.mxu0 %v2711
        %2788 = vmatprep.subr.bf16.mxu0 0
        %2789 = vmatpush1.bf16.msra.mxu0 %v2710
        %2790 = vmatprep.subr.bf16.mxu0 0
        %2791 = vmatpush2.bf16.msra.mxu0 %v2725
        %2792 = vmatprep.subr.bf16.mxu0 0
        %2793 = vmatpush2.bf16.msra.mxu0 %v2724
        %2794 = vmatprep.subr.bf16.mxu0 0
        %2795 = vmatpush2.bf16.msra.mxu0 %v2723
        %2796 = vmatprep.subr.bf16.mxu0 0
        %2797 = vmatpush2.bf16.msra.mxu0 %v2722
        %2798 = vmatprep.subr.bf16.mxu0 0
        %2799 = vmatpush2.bf16.msra.mxu0 %v2721
        %2800 = vmatprep.subr.bf16.mxu0 0
        %2801 = vmatpush2.bf16.msra.mxu0 %v2720
        %2802 = vmatprep.subr.bf16.mxu0 0
        %2803 = vmatpush2.bf16.msra.mxu0 %v2719
        %2804 = vmatprep.subr.bf16.mxu0 0
        %2805 = vmatpush2.bf16.msra.mxu0 %v2718
        %2806 = vmatprep.mubr.bf16.mxu0 %v2508
        %2807 = vmatmul.mubr.bf16.gmra.mxu0 %v2507
        %v2808 = vpop.f32.mrf.mxu0
        %v2809 = vadd.f32 %v2580, %v2808
        %v2810 = vpop.f32.mrf.mxu0
        %v2811 = vpop.f32.mrf.mxu0
        %v2812 = vpop.f32.mrf.mxu0
        %2813 = vdwg.mxu0
        %2814 = vmatprep.subr.bf16.mxu0 0
        %2815 = vmatpush1.bf16.msra.mxu0 %v2733
        %2816 = vmatprep.subr.bf16.mxu0 0
        %2817 = vmatpush1.bf16.msra.mxu0 %v2732
        %2818 = vmatprep.subr.bf16.mxu0 0
        %2819 = vmatpush1.bf16.msra.mxu0 %v2731
        %2820 = vmatprep.subr.bf16.mxu0 0
        %2821 = vmatpush1.bf16.msra.mxu0 %v2730
        %2822 = vmatprep.subr.bf16.mxu0 0
        %2823 = vmatpush1.bf16.msra.mxu0 %v2729
        %2824 = vmatprep.subr.bf16.mxu0 0
        %2825 = vmatpush1.bf16.msra.mxu0 %v2728
        %2826 = vmatprep.subr.bf16.mxu0 0
        %2827 = vmatpush1.bf16.msra.mxu0 %v2727
        %2828 = vmatprep.subr.bf16.mxu0 0
        %2829 = vmatpush1.bf16.msra.mxu0 %v2726
        %2830 = vmatprep.subr.bf16.mxu0 0
        %2831 = vmatpush2.bf16.msra.mxu0 %v2741
        %2832 = vmatprep.subr.bf16.mxu0 0
        %2833 = vmatpush2.bf16.msra.mxu0 %v2740
        %2834 = vmatprep.subr.bf16.mxu0 0
        %2835 = vmatpush2.bf16.msra.mxu0 %v2739
        %2836 = vmatprep.subr.bf16.mxu0 0
        %2837 = vmatpush2.bf16.msra.mxu0 %v2738
        %2838 = vmatprep.subr.bf16.mxu0 0
        %2839 = vmatpush2.bf16.msra.mxu0 %v2737
        %2840 = vmatprep.subr.bf16.mxu0 0
        %2841 = vmatpush2.bf16.msra.mxu0 %v2736
        %2842 = vmatprep.subr.bf16.mxu0 0
        %2843 = vmatpush2.bf16.msra.mxu0 %v2735
        %2844 = vmatprep.subr.bf16.mxu0 0
        %2845 = vmatpush2.bf16.msra.mxu0 %v2734
        %2846 = vmatprep.mubr.bf16.mxu0 %v2510
        %2847 = vmatmul.mubr.bf16.gmra.mxu0 %v2509
        %v2848 = vpop.f32.mrf.mxu0
        %v2849 = vadd.f32 %v2809, %v2848
        %v2850 = vpop.f32.mrf.mxu0
        %v2851 = vpop.f32.mrf.mxu0
        %v2852 = vpop.f32.mrf.mxu0
        %2853 = vdwg.mxu0
        %v2854 = vadd.f32 %v2849, %v2189
        %v2855 = vld [vmem:[%s17] sm:$0x1]
        %v2856 = vld [vmem:[%s18] sm:$0x1]
        %2857 = vadd.xlane.f32.xlu0 %v2854
        %v2858 = vpop.xlane.xlu0 %2857
        %v2859 = vmul.f32 %v2858, %v2166
        %v2860 = vsub.f32 %v2854, %v2859
        %v2861 = vmul.f32 %v2860, %v2860
        %2862 = vadd.xlane.f32.xlu0 %v2861
        %v2863 = vpop.xlane.xlu0 %2862
        %v2864 = vmul.f32 %v2863, %v2166
        %v2865 = vadd.f32 %v2864, 1e-12
        %v2866 = vrsqrt.pop %v2865
        %v2867 = vmul.f32 %v2860, %v2866
        %v2869 = vlaneseq
        %v2870 = vshrl.u32 %v2869, 7
        %v2871 = vsub.s32 0, %v2870
        %v2872 = vrot.slane %v2855, %v2871
        %v2874 = vmul.f32 %v2867, %v2872
        %v2876 = vlaneseq
        %v2877 = vshrl.u32 %v2876, 7
        %v2878 = vsub.s32 0, %v2877
        %v2879 = vrot.slane %v2856, %v2878
        %v2881 = vadd.f32 %v2874, %v2879
        %2882 = vst [vmem:[%s747] sm:$0xff] %v2881
        %s2883 = sand.u32 %s477, 1
        %s2884 = scalar_lea.sflag [#allocation6], %s2883
        %s2885 = sand.u32 %s477, 1
        %s2886 = smul.addr %s2885, 8
        %s2887 = scalar_lea.vmem [#allocation16], %s2886
        // Predicated region
        $region129: #{tpu_custom_call.1} parent=95 // pred_check
          %p2888 = pneg %p487
        $region130: #{tpu_custom_call.1} parent=95 // pred_check_branch
          %2890 = sbr.rel (%p2888) target = $region132
        $region131: #{tpu_custom_call.1} parent=95 // pred_region
          %s2892 = ssub.s32 128, 128
          %2893 = vsyncadd %s2884, %s2892
          %s2894 = smul.addr %s43, 2
          %s2895 = sadd.s32 %s44, %s2894
          %s2896 = smul.addr %s2895, 128
          %s2897 = scalar_lea.hbm %s19, %s2896
          %s2899 = sshll.u32 %s2887, 4
          %s2900 = int_to_ptr.vmem [resolvable:$true] %s2899
          %2902 = dma.vmem_to_hbm [thread:$0]  %s2900, 128, %s2897, %s2884
        $region132: #{tpu_custom_call.1} parent=95 // pred_fallthru
          _
      $region96: #{tpu_custom_call.1} parent=5 // pred_fallthru
        _
      %p2903 = scmp.le.s32.totalorder 2, %s34
      // Predicated region
      $region133: #{tpu_custom_call.1} parent=5 // pred_check
        %p2904 = pneg %p2903
      $region134: #{tpu_custom_call.1} parent=5 // pred_check_branch
        %2906 = sbr.rel (%p2904) target = $region136
      $region135: #{tpu_custom_call.1} parent=5 // pred_region
        %s2907 = ssub.s32 %s34, 2
        // Predicated region
        $region137: #{tpu_custom_call.1} parent=135 // pred_check
          %p2908 = pneg %p493
        $region138: #{tpu_custom_call.1} parent=135 // pred_check_branch
          %2910 = sbr.rel (%p2908) target = $region140
        $region139: #{tpu_custom_call.1} parent=135 // pred_region
          %s2911 = sand.u32 %s478, 1
          %s2912 = scalar_lea.sflag [#allocation6], %s2911
          %s2913 = sand.u32 %s478, 1
          %s2914 = smul.addr %s2913, 8
          %s2915 = scalar_lea.vmem [#allocation16], %s2914
          %2916 = dma.done %s2912, 128
        $region140: #{tpu_custom_call.1} parent=135 // pred_fallthru
          _
      $region136: #{tpu_custom_call.1} parent=5 // pred_fallthru
        _
    $region6: #{tpu_custom_call.1} parent=1 // loop_footer
      %s38 = sadd.s32 1, %s34
    $region7: #{tpu_custom_call.1} parent=1 // loop_footer_branch
      %33 = sbr.rel target = $region3
    $region8: #{tpu_custom_call.1} parent=1 // loop_exit
      _
    %2917 = vsyncpa [#allocation5], 1
    %s2918 = scalar_lea.sflag [#allocation5], 1
    %2919 = vsyncpa %s2918, 1
    %2920 = vsyncpa [#allocation8], 1
    %s2921 = scalar_lea.sflag [#allocation8], 1
    %2922 = vsyncpa %s2921, 1
    %2923 = vsyncpa [#allocation11], 1
    %2924 = vsyncpa [#allocation14], 1
    %2925 = vsyncpa [#allocation6], 1
    %s2926 = scalar_lea.sflag [#allocation6], 1
    %2927 = vsyncpa %s2926, 1

</llo_original>
